<compile_context>
chip_gen: v7x
topology: tpu7x:2x2x1
jax: 0.10.0
libtpu: 0.0.40
codegen_flags: <defaults>
</compile_context>

<pallas_src>
import functools

import jax
import jax.numpy as jnp
from jax.experimental import pallas as pl
from jax.experimental.pallas import tpu as pltpu

# ---- small synthetic BERT config (bert-base scaled down) --------------------
VOCAB = 100
HIDDEN = 32
NUM_HEADS = 4
HEAD_DIM = HIDDEN // NUM_HEADS
INTERMEDIATE = 64
NUM_LAYERS = 2
MAX_POS = 16
NUM_LABELS = 2
LN_EPS = 1e-12
ATTN_SCALE = 1.0 / (HEAD_DIM ** 0.5)


# ----------------------------- in-kernel helpers -----------------------------
def _layernorm(x, g, b):
    mean = jnp.mean(x, axis=-1, keepdims=True)
    var = jnp.mean(jnp.square(x - mean), axis=-1, keepdims=True)
    return (x - mean) * jax.lax.rsqrt(var + LN_EPS) * g + b


def _gelu(x):
    # TODO(synk): tanh-approximate GELU; switch to erf-GELU for exact HF parity.
    return 0.5 * x * (1.0 + jnp.tanh(0.7978845608028654 * (x + 0.044715 * x * x * x)))


# ----------------------------- fused forward kernel --------------------------
def _bert_fused_kernel(
    word_ref, pos_typ_ref, emb_g_ref, emb_b_ref,
    q_w_ref, q_b_ref, k_w_ref, k_b_ref, v_w_ref, v_b_ref,
    ao_w_ref, ao_b_ref, ln1_g_ref, ln1_b_ref,
    i_w_ref, i_b_ref, o_w_ref, o_b_ref, ln2_g_ref, ln2_b_ref,
    pool_w_ref, pool_b_ref, cls_w_ref, cls_b_ref, onehot_ref,
    loss_ref, logits_ref,
    *, batch, seq,
):
    B, S, H = batch, seq, HIDDEN
    BS = B * S
    bf16 = jnp.bfloat16

    # ---- embeddings: word + (position + token-type) bias broadcast in-kernel,
    #      fused with the embedding layernorm -----------------------------------
    emb = word_ref[...] + pos_typ_ref[...]                       # (B, S, H) f32
    h = _layernorm(emb, emb_g_ref[...], emb_b_ref[...]).reshape(BS, H)

    # ---- transformer layers: weights + activations stay VMEM-resident ---------
    # TODO(synk): replace the static layer unroll with a grid axis (weight
    # streaming) once NUM_LAYERS / HIDDEN grow beyond toy size.
    for l in range(NUM_LAYERS):
        hb = h.astype(bf16)                                      # bf16 MXU operand

        # Multi-head attention with per-head weight blocks: no lane slices of a
        # fused QKV result, no lane-axis concatenate of context heads.
        # TODO(synk): fold into a single head-batched einsum ('bqhd,bkhd->bhqk')
        # once Mosaic supports multi-batch-dim dot_general / (0,2,1,3) transpose.
        attn = jnp.zeros((BS, H), jnp.float32)
        for hd in range(NUM_HEADS):
            qh = (jnp.dot(hb, q_w_ref[l, hd], preferred_element_type=jnp.float32)
                  + q_b_ref[l, hd]).reshape(B, S, HEAD_DIM)
            kh = (jnp.dot(hb, k_w_ref[l, hd], preferred_element_type=jnp.float32)
                  + k_b_ref[l, hd]).reshape(B, S, HEAD_DIM)
            vh = (jnp.dot(hb, v_w_ref[l, hd], preferred_element_type=jnp.float32)
                  + v_b_ref[l, hd]).reshape(B, S, HEAD_DIM)

            # TODO(synk): no attention mask (full-length, unpadded sequences).
            s = jnp.einsum("bqd,bkd->bqk", qh.astype(bf16), kh.astype(bf16),
                           preferred_element_type=jnp.float32) * ATTN_SCALE
            s = s - jnp.max(s, axis=-1, keepdims=True)
            p = jnp.exp(s)
            # EUP approximate reciprocal for the softmax denominator
            p = p * pl.reciprocal(jnp.sum(p, axis=-1, keepdims=True), approx=True)
            ctx = jnp.einsum("bqk,bkd->bqd", p.astype(bf16), vh.astype(bf16),
                             preferred_element_type=jnp.float32)  # (B, S, HD)

            # concat-free head merge: sum_h ctx_h @ Wo_h  ==  concat(ctx_h) @ Wo
            attn = attn + jnp.dot(ctx.reshape(BS, HEAD_DIM).astype(bf16),
                                  ao_w_ref[l, hd],
                                  preferred_element_type=jnp.float32)

        attn = attn + ao_b_ref[l]
        h = _layernorm(attn + h, ln1_g_ref[l], ln1_b_ref[l])      # residual in LN

        # Feed-forward (bf16 MXU operands, f32 accumulate, f32 GELU on VPU/EUP)
        hb = h.astype(bf16)
        inter = _gelu(jnp.dot(hb, i_w_ref[l],
                              preferred_element_type=jnp.float32) + i_b_ref[l])
        ffn = jnp.dot(inter.astype(bf16), o_w_ref[l],
                      preferred_element_type=jnp.float32) + o_b_ref[l]
        h = _layernorm(ffn + h, ln2_g_ref[l], ln2_b_ref[l])

    # ---- pooler: [CLS] rows via reshaped read (no iota-mask selection matmul) --
    cls = h.reshape(B, S, H)[:, 0, :]                             # (B, H)
    pooled = jnp.tanh(jnp.dot(cls, pool_w_ref[...],
                              preferred_element_type=jnp.float32) + pool_b_ref[...])
    # classifier head kept f32 (tiny; preserves logits/loss precision)
    logits = jnp.dot(pooled, cls_w_ref[...],
                     preferred_element_type=jnp.float32) + cls_b_ref[...]
    logits_ref[...] = logits

    # ---- cross-entropy (mean over batch), fused into the same kernel ----------
    # TODO(synk): lane-dense (128-padded) logits/loss slab once batch grows.
    m = jnp.max(logits, axis=-1, keepdims=True)
    lse = m + jnp.log(jnp.sum(jnp.exp(logits - m), axis=-1, keepdims=True))
    nll = lse - jnp.sum(logits * onehot_ref[...], axis=-1, keepdims=True)
    loss_ref[...] = jnp.broadcast_to(jnp.mean(nll), (1, 1))


# ----------------------------- model (params + glue) -------------------------
def init_params(key):
    def nrm(k, shape):
        return jax.random.normal(k, shape, dtype=jnp.float32) * 0.02

    keys = iter(jax.random.split(key, 12))
    L, H, I, NH, HD = NUM_LAYERS, HIDDEN, INTERMEDIATE, NUM_HEADS, HEAD_DIM
    return {
        "word_emb": nrm(next(keys), (VOCAB, H)),
        "pos_emb": nrm(next(keys), (MAX_POS, H)),
        "type_emb": nrm(next(keys), (2, H)),
        "emb_ln_g": jnp.ones((1, H), jnp.float32),
        "emb_ln_b": jnp.zeros((1, H), jnp.float32),
        # per-layer, per-head weight blocks (head split done once, outside kernel)
        "q_w": nrm(next(keys), (L, NH, H, HD)),
        "q_b": jnp.zeros((L, NH, 1, HD), jnp.float32),
        "k_w": nrm(next(keys), (L, NH, H, HD)),
        "k_b": jnp.zeros((L, NH, 1, HD), jnp.float32),
        "v_w": nrm(next(keys), (L, NH, H, HD)),
        "v_b": jnp.zeros((L, NH, 1, HD), jnp.float32),
        "ao_w": nrm(next(keys), (L, NH, HD, H)),
        "ao_b": jnp.zeros((L, 1, H), jnp.float32),
        "ln1_g": jnp.ones((L, 1, H), jnp.float32),
        "ln1_b": jnp.zeros((L, 1, H), jnp.float32),
        "i_w": nrm(next(keys), (L, H, I)),
        "i_b": jnp.zeros((L, 1, I), jnp.float32),
        "o_w": nrm(next(keys), (L, I, H)),
        "o_b": jnp.zeros((L, 1, H), jnp.float32),
        "ln2_g": jnp.ones((L, 1, H), jnp.float32),
        "ln2_b": jnp.zeros((L, 1, H), jnp.float32),
        "pool_w": nrm(next(keys), (H, H)),
        "pool_b": jnp.zeros((1, H), jnp.float32),
        "cls_w": nrm(next(keys), (H, NUM_LABELS)),
        "cls_b": jnp.zeros((1, NUM_LABELS), jnp.float32),
    }


def bert_forward(params, text, label):
    # TODO(synk): dropout omitted (deterministic / eval-mode forward);
    # token_type_ids hard-coded to 0.
    B, S = text.shape
    # XLA glue: embedding gather, tiny (S, H) position/type bias, label one-hot.
    # TODO(synk): at real sizes, gather in-kernel via scalar-prefetched token ids.
    word = jnp.take(params["word_emb"], text, axis=0)                    # (B, S, H)
    pos_typ = params["pos_emb"][:S] + params["type_emb"][0:1]            # (S, H)
    onehot = jax.nn.one_hot(label, NUM_LABELS, dtype=jnp.float32)        # (B, NL)

    bf = lambda w: w.astype(jnp.bfloat16)   # bf16 MXU operands (f32 accumulate)

    loss, logits = pl.pallas_call(
        functools.partial(_bert_fused_kernel, batch=B, seq=S),
        out_shape=(
            jax.ShapeDtypeStruct((1, 1), jnp.float32),
            jax.ShapeDtypeStruct((B, NUM_LABELS), jnp.float32),
        ),
        # no grid / no BlockSpecs: every operand is a full-array VMEM ref;
        # whole model (weights + activations) is well under 1 MiB.
        compiler_params=pltpu.CompilerParams(vmem_limit_bytes=32 * 1024 * 1024),
    )(
        word, pos_typ,
        params["emb_ln_g"], params["emb_ln_b"],
        bf(params["q_w"]), params["q_b"],
        bf(params["k_w"]), params["k_b"],
        bf(params["v_w"]), params["v_b"],
        bf(params["ao_w"]), params["ao_b"],
        params["ln1_g"], params["ln1_b"],
        bf(params["i_w"]), params["i_b"],
        bf(params["o_w"]), params["o_b"],
        params["ln2_g"], params["ln2_b"],
        params["pool_w"], params["pool_b"],
        params["cls_w"], params["cls_b"],
        onehot,
    )
    return loss[0, 0], logits


if __name__ == "__main__":
    key = jax.random.PRNGKey(0)
    pkey, tkey, lkey = jax.random.split(key, 3)
    params = init_params(pkey)

    B, S = 2, 8
    text = jax.random.randint(tkey, (B, S), 0, VOCAB, dtype=jnp.int32)
    label = jax.random.randint(lkey, (B,), 0, NUM_LABELS, dtype=jnp.int32)

    fwd = jax.jit(bert_forward)
    loss, text_fea = fwd(params, text, label)
    jax.block_until_ready((loss, text_fea))
    assert loss.shape == () and text_fea.shape == (B, NUM_LABELS)
    assert bool(jnp.isfinite(loss)) and bool(jnp.all(jnp.isfinite(text_fea)))
    print("KERNEL_OK")
</pallas_src>

<mosaic_0001>
module attributes {stable_mosaic.version = 11 : i64} {
  func.func @_bert_fused_kernel(%arg0: memref<2x8x32xf32, #tpu.memory_space<vmem>>, %arg1: memref<8x32xf32, #tpu.memory_space<vmem>>, %arg2: memref<1x32xf32, #tpu.memory_space<vmem>>, %arg3: memref<1x32xf32, #tpu.memory_space<vmem>>, %arg4: memref<2x4x32x8xbf16, #tpu.memory_space<vmem>>, %arg5: memref<2x4x1x8xf32, #tpu.memory_space<vmem>>, %arg6: memref<2x4x32x8xbf16, #tpu.memory_space<vmem>>, %arg7: memref<2x4x1x8xf32, #tpu.memory_space<vmem>>, %arg8: memref<2x4x32x8xbf16, #tpu.memory_space<vmem>>, %arg9: memref<2x4x1x8xf32, #tpu.memory_space<vmem>>, %arg10: memref<2x4x8x32xbf16, #tpu.memory_space<vmem>>, %arg11: memref<2x1x32xf32, #tpu.memory_space<vmem>>, %arg12: memref<2x1x32xf32, #tpu.memory_space<vmem>>, %arg13: memref<2x1x32xf32, #tpu.memory_space<vmem>>, %arg14: memref<2x32x64xbf16, #tpu.memory_space<vmem>>, %arg15: memref<2x1x64xf32, #tpu.memory_space<vmem>>, %arg16: memref<2x64x32xbf16, #tpu.memory_space<vmem>>, %arg17: memref<2x1x32xf32, #tpu.memory_space<vmem>>, %arg18: memref<2x1x32xf32, #tpu.memory_space<vmem>>, %arg19: memref<2x1x32xf32, #tpu.memory_space<vmem>>, %arg20: memref<32x32xf32, #tpu.memory_space<vmem>>, %arg21: memref<1x32xf32, #tpu.memory_space<vmem>>, %arg22: memref<32x2xf32, #tpu.memory_space<vmem>>, %arg23: memref<1x2xf32, #tpu.memory_space<vmem>>, %arg24: memref<2x2xf32, #tpu.memory_space<vmem>>, %arg25: memref<1x1xf32, #tpu.memory_space<vmem>>, %arg26: memref<2x2xf32, #tpu.memory_space<vmem>>) attributes {dimension_semantics = [], scalar_prefetch = 0 : i64, scratch_operands = 0 : i64, tpu.core_type = #tpu.core_type<tc>} {
    %c0 = arith.constant 0 : index
    %c0_0 = arith.constant 0 : index
    %c0_1 = arith.constant 0 : index
    %0 = vector.load %arg0[%c0, %c0_0, %c0_1] : memref<2x8x32xf32, #tpu.memory_space<vmem>>, vector<2x8x32xf32>
    %c0_2 = arith.constant 0 : index
    %c0_3 = arith.constant 0 : index
    %1 = vector.load %arg1[%c0_2, %c0_3] : memref<8x32xf32, #tpu.memory_space<vmem>>, vector<8x32xf32>
    %2 = vector.shape_cast %1 : vector<8x32xf32> to vector<1x8x32xf32>
    %3 = vector.broadcast %2 : vector<1x8x32xf32> to vector<2x8x32xf32>
    %4 = arith.addf %0, %3 : vector<2x8x32xf32>
    %c0_4 = arith.constant 0 : index
    %c0_5 = arith.constant 0 : index
    %5 = vector.load %arg2[%c0_4, %c0_5] : memref<1x32xf32, #tpu.memory_space<vmem>>, vector<1x32xf32>
    %c0_6 = arith.constant 0 : index
    %c0_7 = arith.constant 0 : index
    %6 = vector.load %arg3[%c0_6, %c0_7] : memref<1x32xf32, #tpu.memory_space<vmem>>, vector<1x32xf32>
    %cst = arith.constant dense<0.000000e+00> : vector<2x8xf32>
    %7 = vector.multi_reduction <add>, %4, %cst [2] : vector<2x8x32xf32> to vector<2x8xf32>
    %8 = vector.shape_cast %7 : vector<2x8xf32> to vector<2x8x1xf32>
    %cst_8 = arith.constant 3.200000e+01 : f32
    %9 = vector.broadcast %cst_8 : f32 to vector<2x8x1xf32>
    %10 = arith.divf %8, %9 : vector<2x8x1xf32>
    %11 = vector.broadcast %10 : vector<2x8x1xf32> to vector<2x8x32xf32>
    %12 = arith.subf %4, %11 : vector<2x8x32xf32>
    %13 = arith.mulf %12, %12 : vector<2x8x32xf32>
    %cst_9 = arith.constant dense<0.000000e+00> : vector<2x8xf32>
    %14 = vector.multi_reduction <add>, %13, %cst_9 [2] : vector<2x8x32xf32> to vector<2x8xf32>
    %15 = vector.shape_cast %14 : vector<2x8xf32> to vector<2x8x1xf32>
    %cst_10 = arith.constant 3.200000e+01 : f32
    %16 = vector.broadcast %cst_10 : f32 to vector<2x8x1xf32>
    %17 = arith.divf %15, %16 : vector<2x8x1xf32>
    %18 = vector.broadcast %10 : vector<2x8x1xf32> to vector<2x8x32xf32>
    %19 = arith.subf %4, %18 : vector<2x8x32xf32>
    %cst_11 = arith.constant 9.99999996E-13 : f32
    %20 = vector.broadcast %cst_11 : f32 to vector<2x8x1xf32>
    %21 = arith.addf %17, %20 : vector<2x8x1xf32>
    %22 = math.rsqrt %21 : vector<2x8x1xf32>
    %23 = vector.broadcast %22 : vector<2x8x1xf32> to vector<2x8x32xf32>
    %24 = arith.mulf %19, %23 : vector<2x8x32xf32>
    %25 = vector.shape_cast %5 : vector<1x32xf32> to vector<1x1x32xf32>
    %26 = vector.broadcast %25 : vector<1x1x32xf32> to vector<2x8x32xf32>
    %27 = arith.mulf %24, %26 : vector<2x8x32xf32>
    %28 = vector.shape_cast %6 : vector<1x32xf32> to vector<1x1x32xf32>
    %29 = vector.broadcast %28 : vector<1x1x32xf32> to vector<2x8x32xf32>
    %30 = arith.addf %27, %29 : vector<2x8x32xf32>
    %31 = vector.shape_cast %30 : vector<2x8x32xf32> to vector<16x32xf32>
    %32 = arith.truncf %31 : vector<16x32xf32> to vector<16x32xbf16>
    %cst_12 = arith.constant 0.000000e+00 : f32
    %33 = vector.broadcast %cst_12 : f32 to vector<16x32xf32>
    %c0_13 = arith.constant 0 : index
    %c0_14 = arith.constant 0 : index
    %c0_15 = arith.constant 0 : index
    %c0_16 = arith.constant 0 : index
    %34 = vector.load %arg4[%c0_13, %c0_14, %c0_15, %c0_16] : memref<2x4x32x8xbf16, #tpu.memory_space<vmem>>, vector<1x1x32x8xbf16>
    %35 = vector.shape_cast %34 : vector<1x1x32x8xbf16> to vector<32x8xbf16>
    %cst_17 = arith.constant dense<0.000000e+00> : vector<16x8xf32>
    %36 = tpu.matmul %32, %35, %cst_17 {dimension_numbers = #tpu.dot_dimension_numbers<[1], [0], [0], [1], [0, 0, 1, 1], [], []>} : vector<16x32xbf16>, vector<32x8xbf16>, vector<16x8xf32> -> vector<16x8xf32>
    %c0_18 = arith.constant 0 : index
    %c0_19 = arith.constant 0 : index
    %c0_20 = arith.constant 0 : index
    %c0_21 = arith.constant 0 : index
    %37 = vector.load %arg5[%c0_18, %c0_19, %c0_20, %c0_21] : memref<2x4x1x8xf32, #tpu.memory_space<vmem>>, vector<1x1x1x8xf32>
    %38 = vector.shape_cast %37 : vector<1x1x1x8xf32> to vector<1x8xf32>
    %39 = vector.broadcast %38 : vector<1x8xf32> to vector<16x8xf32>
    %40 = arith.addf %36, %39 : vector<16x8xf32>
    %41 = vector.shape_cast %40 : vector<16x8xf32> to vector<2x8x8xf32>
    %c0_22 = arith.constant 0 : index
    %c0_23 = arith.constant 0 : index
    %c0_24 = arith.constant 0 : index
    %c0_25 = arith.constant 0 : index
    %42 = vector.load %arg6[%c0_22, %c0_23, %c0_24, %c0_25] : memref<2x4x32x8xbf16, #tpu.memory_space<vmem>>, vector<1x1x32x8xbf16>
    %43 = vector.shape_cast %42 : vector<1x1x32x8xbf16> to vector<32x8xbf16>
    %cst_26 = arith.constant dense<0.000000e+00> : vector<16x8xf32>
    %44 = tpu.matmul %32, %43, %cst_26 {dimension_numbers = #tpu.dot_dimension_numbers<[1], [0], [0], [1], [0, 0, 1, 1], [], []>} : vector<16x32xbf16>, vector<32x8xbf16>, vector<16x8xf32> -> vector<16x8xf32>
    %c0_27 = arith.constant 0 : index
    %c0_28 = arith.constant 0 : index
    %c0_29 = arith.constant 0 : index
    %c0_30 = arith.constant 0 : index
    %45 = vector.load %arg7[%c0_27, %c0_28, %c0_29, %c0_30] : memref<2x4x1x8xf32, #tpu.memory_space<vmem>>, vector<1x1x1x8xf32>
    %46 = vector.shape_cast %45 : vector<1x1x1x8xf32> to vector<1x8xf32>
    %47 = vector.broadcast %46 : vector<1x8xf32> to vector<16x8xf32>
    %48 = arith.addf %44, %47 : vector<16x8xf32>
    %49 = vector.shape_cast %48 : vector<16x8xf32> to vector<2x8x8xf32>
    %c0_31 = arith.constant 0 : index
    %c0_32 = arith.constant 0 : index
    %c0_33 = arith.constant 0 : index
    %c0_34 = arith.constant 0 : index
    %50 = vector.load %arg8[%c0_31, %c0_32, %c0_33, %c0_34] : memref<2x4x32x8xbf16, #tpu.memory_space<vmem>>, vector<1x1x32x8xbf16>
    %51 = vector.shape_cast %50 : vector<1x1x32x8xbf16> to vector<32x8xbf16>
    %cst_35 = arith.constant dense<0.000000e+00> : vector<16x8xf32>
    %52 = tpu.matmul %32, %51, %cst_35 {dimension_numbers = #tpu.dot_dimension_numbers<[1], [0], [0], [1], [0, 0, 1, 1], [], []>} : vector<16x32xbf16>, vector<32x8xbf16>, vector<16x8xf32> -> vector<16x8xf32>
    %c0_36 = arith.constant 0 : index
    %c0_37 = arith.constant 0 : index
    %c0_38 = arith.constant 0 : index
    %c0_39 = arith.constant 0 : index
    %53 = vector.load %arg9[%c0_36, %c0_37, %c0_38, %c0_39] : memref<2x4x1x8xf32, #tpu.memory_space<vmem>>, vector<1x1x1x8xf32>
    %54 = vector.shape_cast %53 : vector<1x1x1x8xf32> to vector<1x8xf32>
    %55 = vector.broadcast %54 : vector<1x8xf32> to vector<16x8xf32>
    %56 = arith.addf %52, %55 : vector<16x8xf32>
    %57 = vector.shape_cast %56 : vector<16x8xf32> to vector<2x8x8xf32>
    %58 = arith.truncf %41 : vector<2x8x8xf32> to vector<2x8x8xbf16>
    %59 = arith.truncf %49 : vector<2x8x8xf32> to vector<2x8x8xbf16>
    "tpu.trace_start"() <{level = 10 : i32, message = "bqd,bkd->bqk"}> : () -> ()
    %cst_40 = arith.constant dense<0.000000e+00> : vector<2x8x8xf32>
    %60 = tpu.matmul %58, %59, %cst_40 {dimension_numbers = #tpu.dot_dimension_numbers<[2], [2], [1], [1], [0, 0, 0, 1, 1, 1], [0], [0]>} : vector<2x8x8xbf16>, vector<2x8x8xbf16>, vector<2x8x8xf32> -> vector<2x8x8xf32>
    "tpu.trace_stop"() : () -> ()
    %cst_41 = arith.constant 0.353553385 : f32
    %61 = vector.broadcast %cst_41 : f32 to vector<2x8x8xf32>
    %62 = arith.mulf %60, %61 : vector<2x8x8xf32>
    %cst_42 = arith.constant dense<0xFF800000> : vector<2x8xf32>
    %63 = vector.multi_reduction <maximumf>, %62, %cst_42 [2] : vector<2x8x8xf32> to vector<2x8xf32>
    %64 = vector.shape_cast %63 : vector<2x8xf32> to vector<2x8x1xf32>
    %65 = vector.broadcast %64 : vector<2x8x1xf32> to vector<2x8x8xf32>
    %66 = arith.subf %62, %65 : vector<2x8x8xf32>
    %67 = math.exp %66 : vector<2x8x8xf32>
    %cst_43 = arith.constant dense<0.000000e+00> : vector<2x8xf32>
    %68 = vector.multi_reduction <add>, %67, %cst_43 [2] : vector<2x8x8xf32> to vector<2x8xf32>
    %69 = vector.shape_cast %68 : vector<2x8xf32> to vector<2x8x1xf32>
    %70 = tpu.reciprocal %69 {approx = true} : vector<2x8x1xf32> -> vector<2x8x1xf32>
    %71 = vector.broadcast %70 : vector<2x8x1xf32> to vector<2x8x8xf32>
    %72 = arith.mulf %67, %71 : vector<2x8x8xf32>
    %73 = arith.truncf %72 : vector<2x8x8xf32> to vector<2x8x8xbf16>
    %74 = arith.truncf %57 : vector<2x8x8xf32> to vector<2x8x8xbf16>
    "tpu.trace_start"() <{level = 10 : i32, message = "bqk,bkd->bqd"}> : () -> ()
    %cst_44 = arith.constant dense<0.000000e+00> : vector<2x8x8xf32>
    %75 = tpu.matmul %73, %74, %cst_44 {dimension_numbers = #tpu.dot_dimension_numbers<[2], [1], [1], [2], [0, 0, 0, 1, 1, 2], [0], [0]>} : vector<2x8x8xbf16>, vector<2x8x8xbf16>, vector<2x8x8xf32> -> vector<2x8x8xf32>
    "tpu.trace_stop"() : () -> ()
    %76 = vector.shape_cast %75 : vector<2x8x8xf32> to vector<16x8xf32>
    %77 = arith.truncf %76 : vector<16x8xf32> to vector<16x8xbf16>
    %c0_45 = arith.constant 0 : index
    %c0_46 = arith.constant 0 : index
    %c0_47 = arith.constant 0 : index
    %c0_48 = arith.constant 0 : index
    %78 = vector.load %arg10[%c0_45, %c0_46, %c0_47, %c0_48] : memref<2x4x8x32xbf16, #tpu.memory_space<vmem>>, vector<1x1x8x32xbf16>
    %79 = vector.shape_cast %78 : vector<1x1x8x32xbf16> to vector<8x32xbf16>
    %cst_49 = arith.constant dense<0.000000e+00> : vector<16x32xf32>
    %80 = tpu.matmul %77, %79, %cst_49 {dimension_numbers = #tpu.dot_dimension_numbers<[1], [0], [0], [1], [0, 0, 1, 1], [], []>} : vector<16x8xbf16>, vector<8x32xbf16>, vector<16x32xf32> -> vector<16x32xf32>
    %81 = arith.addf %33, %80 : vector<16x32xf32>
    %c0_50 = arith.constant 0 : index
    %c1 = arith.constant 1 : index
    %c0_51 = arith.constant 0 : index
    %c0_52 = arith.constant 0 : index
    %82 = vector.load %arg4[%c0_50, %c1, %c0_51, %c0_52] : memref<2x4x32x8xbf16, #tpu.memory_space<vmem>>, vector<1x1x32x8xbf16>
    %83 = vector.shape_cast %82 : vector<1x1x32x8xbf16> to vector<32x8xbf16>
    %cst_53 = arith.constant dense<0.000000e+00> : vector<16x8xf32>
    %84 = tpu.matmul %32, %83, %cst_53 {dimension_numbers = #tpu.dot_dimension_numbers<[1], [0], [0], [1], [0, 0, 1, 1], [], []>} : vector<16x32xbf16>, vector<32x8xbf16>, vector<16x8xf32> -> vector<16x8xf32>
    %c0_54 = arith.constant 0 : index
    %c1_55 = arith.constant 1 : index
    %c0_56 = arith.constant 0 : index
    %c0_57 = arith.constant 0 : index
    %85 = vector.load %arg5[%c0_54, %c1_55, %c0_56, %c0_57] : memref<2x4x1x8xf32, #tpu.memory_space<vmem>>, vector<1x1x1x8xf32>
    %86 = vector.shape_cast %85 : vector<1x1x1x8xf32> to vector<1x8xf32>
    %87 = vector.broadcast %86 : vector<1x8xf32> to vector<16x8xf32>
    %88 = arith.addf %84, %87 : vector<16x8xf32>
    %89 = vector.shape_cast %88 : vector<16x8xf32> to vector<2x8x8xf32>
    %c0_58 = arith.constant 0 : index
    %c1_59 = arith.constant 1 : index
    %c0_60 = arith.constant 0 : index
    %c0_61 = arith.constant 0 : index
    %90 = vector.load %arg6[%c0_58, %c1_59, %c0_60, %c0_61] : memref<2x4x32x8xbf16, #tpu.memory_space<vmem>>, vector<1x1x32x8xbf16>
    %91 = vector.shape_cast %90 : vector<1x1x32x8xbf16> to vector<32x8xbf16>
    %cst_62 = arith.constant dense<0.000000e+00> : vector<16x8xf32>
    %92 = tpu.matmul %32, %91, %cst_62 {dimension_numbers = #tpu.dot_dimension_numbers<[1], [0], [0], [1], [0, 0, 1, 1], [], []>} : vector<16x32xbf16>, vector<32x8xbf16>, vector<16x8xf32> -> vector<16x8xf32>
    %c0_63 = arith.constant 0 : index
    %c1_64 = arith.constant 1 : index
    %c0_65 = arith.constant 0 : index
    %c0_66 = arith.constant 0 : index
    %93 = vector.load %arg7[%c0_63, %c1_64, %c0_65, %c0_66] : memref<2x4x1x8xf32, #tpu.memory_space<vmem>>, vector<1x1x1x8xf32>
    %94 = vector.shape_cast %93 : vector<1x1x1x8xf32> to vector<1x8xf32>
    %95 = vector.broadcast %94 : vector<1x8xf32> to vector<16x8xf32>
    %96 = arith.addf %92, %95 : vector<16x8xf32>
    %97 = vector.shape_cast %96 : vector<16x8xf32> to vector<2x8x8xf32>
    %c0_67 = arith.constant 0 : index
    %c1_68 = arith.constant 1 : index
    %c0_69 = arith.constant 0 : index
    %c0_70 = arith.constant 0 : index
    %98 = vector.load %arg8[%c0_67, %c1_68, %c0_69, %c0_70] : memref<2x4x32x8xbf16, #tpu.memory_space<vmem>>, vector<1x1x32x8xbf16>
    %99 = vector.shape_cast %98 : vector<1x1x32x8xbf16> to vector<32x8xbf16>
    %cst_71 = arith.constant dense<0.000000e+00> : vector<16x8xf32>
    %100 = tpu.matmul %32, %99, %cst_71 {dimension_numbers = #tpu.dot_dimension_numbers<[1], [0], [0], [1], [0, 0, 1, 1], [], []>} : vector<16x32xbf16>, vector<32x8xbf16>, vector<16x8xf32> -> vector<16x8xf32>
    %c0_72 = arith.constant 0 : index
    %c1_73 = arith.constant 1 : index
    %c0_74 = arith.constant 0 : index
    %c0_75 = arith.constant 0 : index
    %101 = vector.load %arg9[%c0_72, %c1_73, %c0_74, %c0_75] : memref<2x4x1x8xf32, #tpu.memory_space<vmem>>, vector<1x1x1x8xf32>
    %102 = vector.shape_cast %101 : vector<1x1x1x8xf32> to vector<1x8xf32>
    %103 = vector.broadcast %102 : vector<1x8xf32> to vector<16x8xf32>
    %104 = arith.addf %100, %103 : vector<16x8xf32>
    %105 = vector.shape_cast %104 : vector<16x8xf32> to vector<2x8x8xf32>
    %106 = arith.truncf %89 : vector<2x8x8xf32> to vector<2x8x8xbf16>
    %107 = arith.truncf %97 : vector<2x8x8xf32> to vector<2x8x8xbf16>
    "tpu.trace_start"() <{level = 10 : i32, message = "bqd,bkd->bqk"}> : () -> ()
    %cst_76 = arith.constant dense<0.000000e+00> : vector<2x8x8xf32>
    %108 = tpu.matmul %106, %107, %cst_76 {dimension_numbers = #tpu.dot_dimension_numbers<[2], [2], [1], [1], [0, 0, 0, 1, 1, 1], [0], [0]>} : vector<2x8x8xbf16>, vector<2x8x8xbf16>, vector<2x8x8xf32> -> vector<2x8x8xf32>
    "tpu.trace_stop"() : () -> ()
    %cst_77 = arith.constant 0.353553385 : f32
    %109 = vector.broadcast %cst_77 : f32 to vector<2x8x8xf32>
    %110 = arith.mulf %108, %109 : vector<2x8x8xf32>
    %cst_78 = arith.constant dense<0xFF800000> : vector<2x8xf32>
    %111 = vector.multi_reduction <maximumf>, %110, %cst_78 [2] : vector<2x8x8xf32> to vector<2x8xf32>
    %112 = vector.shape_cast %111 : vector<2x8xf32> to vector<2x8x1xf32>
    %113 = vector.broadcast %112 : vector<2x8x1xf32> to vector<2x8x8xf32>
    %114 = arith.subf %110, %113 : vector<2x8x8xf32>
    %115 = math.exp %114 : vector<2x8x8xf32>
    %cst_79 = arith.constant dense<0.000000e+00> : vector<2x8xf32>
    %116 = vector.multi_reduction <add>, %115, %cst_79 [2] : vector<2x8x8xf32> to vector<2x8xf32>
    %117 = vector.shape_cast %116 : vector<2x8xf32> to vector<2x8x1xf32>
    %118 = tpu.reciprocal %117 {approx = true} : vector<2x8x1xf32> -> vector<2x8x1xf32>
    %119 = vector.broadcast %118 : vector<2x8x1xf32> to vector<2x8x8xf32>
    %120 = arith.mulf %115, %119 : vector<2x8x8xf32>
    %121 = arith.truncf %120 : vector<2x8x8xf32> to vector<2x8x8xbf16>
    %122 = arith.truncf %105 : vector<2x8x8xf32> to vector<2x8x8xbf16>
    "tpu.trace_start"() <{level = 10 : i32, message = "bqk,bkd->bqd"}> : () -> ()
    %cst_80 = arith.constant dense<0.000000e+00> : vector<2x8x8xf32>
    %123 = tpu.matmul %121, %122, %cst_80 {dimension_numbers = #tpu.dot_dimension_numbers<[2], [1], [1], [2], [0, 0, 0, 1, 1, 2], [0], [0]>} : vector<2x8x8xbf16>, vector<2x8x8xbf16>, vector<2x8x8xf32> -> vector<2x8x8xf32>
    "tpu.trace_stop"() : () -> ()
    %124 = vector.shape_cast %123 : vector<2x8x8xf32> to vector<16x8xf32>
    %125 = arith.truncf %124 : vector<16x8xf32> to vector<16x8xbf16>
    %c0_81 = arith.constant 0 : index
    %c1_82 = arith.constant 1 : index
    %c0_83 = arith.constant 0 : index
    %c0_84 = arith.constant 0 : index
    %126 = vector.load %arg10[%c0_81, %c1_82, %c0_83, %c0_84] : memref<2x4x8x32xbf16, #tpu.memory_space<vmem>>, vector<1x1x8x32xbf16>
    %127 = vector.shape_cast %126 : vector<1x1x8x32xbf16> to vector<8x32xbf16>
    %cst_85 = arith.constant dense<0.000000e+00> : vector<16x32xf32>
    %128 = tpu.matmul %125, %127, %cst_85 {dimension_numbers = #tpu.dot_dimension_numbers<[1], [0], [0], [1], [0, 0, 1, 1], [], []>} : vector<16x8xbf16>, vector<8x32xbf16>, vector<16x32xf32> -> vector<16x32xf32>
    %129 = arith.addf %81, %128 : vector<16x32xf32>
    %c0_86 = arith.constant 0 : index
    %c2 = arith.constant 2 : index
    %c0_87 = arith.constant 0 : index
    %c0_88 = arith.constant 0 : index
    %130 = vector.load %arg4[%c0_86, %c2, %c0_87, %c0_88] : memref<2x4x32x8xbf16, #tpu.memory_space<vmem>>, vector<1x1x32x8xbf16>
    %131 = vector.shape_cast %130 : vector<1x1x32x8xbf16> to vector<32x8xbf16>
    %cst_89 = arith.constant dense<0.000000e+00> : vector<16x8xf32>
    %132 = tpu.matmul %32, %131, %cst_89 {dimension_numbers = #tpu.dot_dimension_numbers<[1], [0], [0], [1], [0, 0, 1, 1], [], []>} : vector<16x32xbf16>, vector<32x8xbf16>, vector<16x8xf32> -> vector<16x8xf32>
    %c0_90 = arith.constant 0 : index
    %c2_91 = arith.constant 2 : index
    %c0_92 = arith.constant 0 : index
    %c0_93 = arith.constant 0 : index
    %133 = vector.load %arg5[%c0_90, %c2_91, %c0_92, %c0_93] : memref<2x4x1x8xf32, #tpu.memory_space<vmem>>, vector<1x1x1x8xf32>
    %134 = vector.shape_cast %133 : vector<1x1x1x8xf32> to vector<1x8xf32>
    %135 = vector.broadcast %134 : vector<1x8xf32> to vector<16x8xf32>
    %136 = arith.addf %132, %135 : vector<16x8xf32>
    %137 = vector.shape_cast %136 : vector<16x8xf32> to vector<2x8x8xf32>
    %c0_94 = arith.constant 0 : index
    %c2_95 = arith.constant 2 : index
    %c0_96 = arith.constant 0 : index
    %c0_97 = arith.constant 0 : index
    %138 = vector.load %arg6[%c0_94, %c2_95, %c0_96, %c0_97] : memref<2x4x32x8xbf16, #tpu.memory_space<vmem>>, vector<1x1x32x8xbf16>
    %139 = vector.shape_cast %138 : vector<1x1x32x8xbf16> to vector<32x8xbf16>
    %cst_98 = arith.constant dense<0.000000e+00> : vector<16x8xf32>
    %140 = tpu.matmul %32, %139, %cst_98 {dimension_numbers = #tpu.dot_dimension_numbers<[1], [0], [0], [1], [0, 0, 1, 1], [], []>} : vector<16x32xbf16>, vector<32x8xbf16>, vector<16x8xf32> -> vector<16x8xf32>
    %c0_99 = arith.constant 0 : index
    %c2_100 = arith.constant 2 : index
    %c0_101 = arith.constant 0 : index
    %c0_102 = arith.constant 0 : index
    %141 = vector.load %arg7[%c0_99, %c2_100, %c0_101, %c0_102] : memref<2x4x1x8xf32, #tpu.memory_space<vmem>>, vector<1x1x1x8xf32>
    %142 = vector.shape_cast %141 : vector<1x1x1x8xf32> to vector<1x8xf32>
    %143 = vector.broadcast %142 : vector<1x8xf32> to vector<16x8xf32>
    %144 = arith.addf %140, %143 : vector<16x8xf32>
    %145 = vector.shape_cast %144 : vector<16x8xf32> to vector<2x8x8xf32>
    %c0_103 = arith.constant 0 : index
    %c2_104 = arith.constant 2 : index
    %c0_105 = arith.constant 0 : index
    %c0_106 = arith.constant 0 : index
    %146 = vector.load %arg8[%c0_103, %c2_104, %c0_105, %c0_106] : memref<2x4x32x8xbf16, #tpu.memory_space<vmem>>, vector<1x1x32x8xbf16>
    %147 = vector.shape_cast %146 : vector<1x1x32x8xbf16> to vector<32x8xbf16>
    %cst_107 = arith.constant dense<0.000000e+00> : vector<16x8xf32>
    %148 = tpu.matmul %32, %147, %cst_107 {dimension_numbers = #tpu.dot_dimension_numbers<[1], [0], [0], [1], [0, 0, 1, 1], [], []>} : vector<16x32xbf16>, vector<32x8xbf16>, vector<16x8xf32> -> vector<16x8xf32>
    %c0_108 = arith.constant 0 : index
    %c2_109 = arith.constant 2 : index
    %c0_110 = arith.constant 0 : index
    %c0_111 = arith.constant 0 : index
    %149 = vector.load %arg9[%c0_108, %c2_109, %c0_110, %c0_111] : memref<2x4x1x8xf32, #tpu.memory_space<vmem>>, vector<1x1x1x8xf32>
    %150 = vector.shape_cast %149 : vector<1x1x1x8xf32> to vector<1x8xf32>
    %151 = vector.broadcast %150 : vector<1x8xf32> to vector<16x8xf32>
    %152 = arith.addf %148, %151 : vector<16x8xf32>
    %153 = vector.shape_cast %152 : vector<16x8xf32> to vector<2x8x8xf32>
    %154 = arith.truncf %137 : vector<2x8x8xf32> to vector<2x8x8xbf16>
    %155 = arith.truncf %145 : vector<2x8x8xf32> to vector<2x8x8xbf16>
    "tpu.trace_start"() <{level = 10 : i32, message = "bqd,bkd->bqk"}> : () -> ()
    %cst_112 = arith.constant dense<0.000000e+00> : vector<2x8x8xf32>
    %156 = tpu.matmul %154, %155, %cst_112 {dimension_numbers = #tpu.dot_dimension_numbers<[2], [2], [1], [1], [0, 0, 0, 1, 1, 1], [0], [0]>} : vector<2x8x8xbf16>, vector<2x8x8xbf16>, vector<2x8x8xf32> -> vector<2x8x8xf32>
    "tpu.trace_stop"() : () -> ()
    %cst_113 = arith.constant 0.353553385 : f32
    %157 = vector.broadcast %cst_113 : f32 to vector<2x8x8xf32>
    %158 = arith.mulf %156, %157 : vector<2x8x8xf32>
    %cst_114 = arith.constant dense<0xFF800000> : vector<2x8xf32>
    %159 = vector.multi_reduction <maximumf>, %158, %cst_114 [2] : vector<2x8x8xf32> to vector<2x8xf32>
    %160 = vector.shape_cast %159 : vector<2x8xf32> to vector<2x8x1xf32>
    %161 = vector.broadcast %160 : vector<2x8x1xf32> to vector<2x8x8xf32>
    %162 = arith.subf %158, %161 : vector<2x8x8xf32>
    %163 = math.exp %162 : vector<2x8x8xf32>
    %cst_115 = arith.constant dense<0.000000e+00> : vector<2x8xf32>
    %164 = vector.multi_reduction <add>, %163, %cst_115 [2] : vector<2x8x8xf32> to vector<2x8xf32>
    %165 = vector.shape_cast %164 : vector<2x8xf32> to vector<2x8x1xf32>
    %166 = tpu.reciprocal %165 {approx = true} : vector<2x8x1xf32> -> vector<2x8x1xf32>
    %167 = vector.broadcast %166 : vector<2x8x1xf32> to vector<2x8x8xf32>
    %168 = arith.mulf %163, %167 : vector<2x8x8xf32>
    %169 = arith.truncf %168 : vector<2x8x8xf32> to vector<2x8x8xbf16>
    %170 = arith.truncf %153 : vector<2x8x8xf32> to vector<2x8x8xbf16>
    "tpu.trace_start"() <{level = 10 : i32, message = "bqk,bkd->bqd"}> : () -> ()
    %cst_116 = arith.constant dense<0.000000e+00> : vector<2x8x8xf32>
    %171 = tpu.matmul %169, %170, %cst_116 {dimension_numbers = #tpu.dot_dimension_numbers<[2], [1], [1], [2], [0, 0, 0, 1, 1, 2], [0], [0]>} : vector<2x8x8xbf16>, vector<2x8x8xbf16>, vector<2x8x8xf32> -> vector<2x8x8xf32>
    "tpu.trace_stop"() : () -> ()
    %172 = vector.shape_cast %171 : vector<2x8x8xf32> to vector<16x8xf32>
    %173 = arith.truncf %172 : vector<16x8xf32> to vector<16x8xbf16>
    %c0_117 = arith.constant 0 : index
    %c2_118 = arith.constant 2 : index
    %c0_119 = arith.constant 0 : index
    %c0_120 = arith.constant 0 : index
    %174 = vector.load %arg10[%c0_117, %c2_118, %c0_119, %c0_120] : memref<2x4x8x32xbf16, #tpu.memory_space<vmem>>, vector<1x1x8x32xbf16>
    %175 = vector.shape_cast %174 : vector<1x1x8x32xbf16> to vector<8x32xbf16>
    %cst_121 = arith.constant dense<0.000000e+00> : vector<16x32xf32>
    %176 = tpu.matmul %173, %175, %cst_121 {dimension_numbers = #tpu.dot_dimension_numbers<[1], [0], [0], [1], [0, 0, 1, 1], [], []>} : vector<16x8xbf16>, vector<8x32xbf16>, vector<16x32xf32> -> vector<16x32xf32>
    %177 = arith.addf %129, %176 : vector<16x32xf32>
    %c0_122 = arith.constant 0 : index
    %c3 = arith.constant 3 : index
    %c0_123 = arith.constant 0 : index
    %c0_124 = arith.constant 0 : index
    %178 = vector.load %arg4[%c0_122, %c3, %c0_123, %c0_124] : memref<2x4x32x8xbf16, #tpu.memory_space<vmem>>, vector<1x1x32x8xbf16>
    %179 = vector.shape_cast %178 : vector<1x1x32x8xbf16> to vector<32x8xbf16>
    %cst_125 = arith.constant dense<0.000000e+00> : vector<16x8xf32>
    %180 = tpu.matmul %32, %179, %cst_125 {dimension_numbers = #tpu.dot_dimension_numbers<[1], [0], [0], [1], [0, 0, 1, 1], [], []>} : vector<16x32xbf16>, vector<32x8xbf16>, vector<16x8xf32> -> vector<16x8xf32>
    %c0_126 = arith.constant 0 : index
    %c3_127 = arith.constant 3 : index
    %c0_128 = arith.constant 0 : index
    %c0_129 = arith.constant 0 : index
    %181 = vector.load %arg5[%c0_126, %c3_127, %c0_128, %c0_129] : memref<2x4x1x8xf32, #tpu.memory_space<vmem>>, vector<1x1x1x8xf32>
    %182 = vector.shape_cast %181 : vector<1x1x1x8xf32> to vector<1x8xf32>
    %183 = vector.broadcast %182 : vector<1x8xf32> to vector<16x8xf32>
    %184 = arith.addf %180, %183 : vector<16x8xf32>
    %185 = vector.shape_cast %184 : vector<16x8xf32> to vector<2x8x8xf32>
    %c0_130 = arith.constant 0 : index
    %c3_131 = arith.constant 3 : index
    %c0_132 = arith.constant 0 : index
    %c0_133 = arith.constant 0 : index
    %186 = vector.load %arg6[%c0_130, %c3_131, %c0_132, %c0_133] : memref<2x4x32x8xbf16, #tpu.memory_space<vmem>>, vector<1x1x32x8xbf16>
    %187 = vector.shape_cast %186 : vector<1x1x32x8xbf16> to vector<32x8xbf16>
    %cst_134 = arith.constant dense<0.000000e+00> : vector<16x8xf32>
    %188 = tpu.matmul %32, %187, %cst_134 {dimension_numbers = #tpu.dot_dimension_numbers<[1], [0], [0], [1], [0, 0, 1, 1], [], []>} : vector<16x32xbf16>, vector<32x8xbf16>, vector<16x8xf32> -> vector<16x8xf32>
    %c0_135 = arith.constant 0 : index
    %c3_136 = arith.constant 3 : index
    %c0_137 = arith.constant 0 : index
    %c0_138 = arith.constant 0 : index
    %189 = vector.load %arg7[%c0_135, %c3_136, %c0_137, %c0_138] : memref<2x4x1x8xf32, #tpu.memory_space<vmem>>, vector<1x1x1x8xf32>
    %190 = vector.shape_cast %189 : vector<1x1x1x8xf32> to vector<1x8xf32>
    %191 = vector.broadcast %190 : vector<1x8xf32> to vector<16x8xf32>
    %192 = arith.addf %188, %191 : vector<16x8xf32>
    %193 = vector.shape_cast %192 : vector<16x8xf32> to vector<2x8x8xf32>
    %c0_139 = arith.constant 0 : index
    %c3_140 = arith.constant 3 : index
    %c0_141 = arith.constant 0 : index
    %c0_142 = arith.constant 0 : index
    %194 = vector.load %arg8[%c0_139, %c3_140, %c0_141, %c0_142] : memref<2x4x32x8xbf16, #tpu.memory_space<vmem>>, vector<1x1x32x8xbf16>
    %195 = vector.shape_cast %194 : vector<1x1x32x8xbf16> to vector<32x8xbf16>
    %cst_143 = arith.constant dense<0.000000e+00> : vector<16x8xf32>
    %196 = tpu.matmul %32, %195, %cst_143 {dimension_numbers = #tpu.dot_dimension_numbers<[1], [0], [0], [1], [0, 0, 1, 1], [], []>} : vector<16x32xbf16>, vector<32x8xbf16>, vector<16x8xf32> -> vector<16x8xf32>
    %c0_144 = arith.constant 0 : index
    %c3_145 = arith.constant 3 : index
    %c0_146 = arith.constant 0 : index
    %c0_147 = arith.constant 0 : index
    %197 = vector.load %arg9[%c0_144, %c3_145, %c0_146, %c0_147] : memref<2x4x1x8xf32, #tpu.memory_space<vmem>>, vector<1x1x1x8xf32>
    %198 = vector.shape_cast %197 : vector<1x1x1x8xf32> to vector<1x8xf32>
    %199 = vector.broadcast %198 : vector<1x8xf32> to vector<16x8xf32>
    %200 = arith.addf %196, %199 : vector<16x8xf32>
    %201 = vector.shape_cast %200 : vector<16x8xf32> to vector<2x8x8xf32>
    %202 = arith.truncf %185 : vector<2x8x8xf32> to vector<2x8x8xbf16>
    %203 = arith.truncf %193 : vector<2x8x8xf32> to vector<2x8x8xbf16>
    "tpu.trace_start"() <{level = 10 : i32, message = "bqd,bkd->bqk"}> : () -> ()
    %cst_148 = arith.constant dense<0.000000e+00> : vector<2x8x8xf32>
    %204 = tpu.matmul %202, %203, %cst_148 {dimension_numbers = #tpu.dot_dimension_numbers<[2], [2], [1], [1], [0, 0, 0, 1, 1, 1], [0], [0]>} : vector<2x8x8xbf16>, vector<2x8x8xbf16>, vector<2x8x8xf32> -> vector<2x8x8xf32>
    "tpu.trace_stop"() : () -> ()
    %cst_149 = arith.constant 0.353553385 : f32
    %205 = vector.broadcast %cst_149 : f32 to vector<2x8x8xf32>
    %206 = arith.mulf %204, %205 : vector<2x8x8xf32>
    %cst_150 = arith.constant dense<0xFF800000> : vector<2x8xf32>
    %207 = vector.multi_reduction <maximumf>, %206, %cst_150 [2] : vector<2x8x8xf32> to vector<2x8xf32>
    %208 = vector.shape_cast %207 : vector<2x8xf32> to vector<2x8x1xf32>
    %209 = vector.broadcast %208 : vector<2x8x1xf32> to vector<2x8x8xf32>
    %210 = arith.subf %206, %209 : vector<2x8x8xf32>
    %211 = math.exp %210 : vector<2x8x8xf32>
    %cst_151 = arith.constant dense<0.000000e+00> : vector<2x8xf32>
    %212 = vector.multi_reduction <add>, %211, %cst_151 [2] : vector<2x8x8xf32> to vector<2x8xf32>
    %213 = vector.shape_cast %212 : vector<2x8xf32> to vector<2x8x1xf32>
    %214 = tpu.reciprocal %213 {approx = true} : vector<2x8x1xf32> -> vector<2x8x1xf32>
    %215 = vector.broadcast %214 : vector<2x8x1xf32> to vector<2x8x8xf32>
    %216 = arith.mulf %211, %215 : vector<2x8x8xf32>
    %217 = arith.truncf %216 : vector<2x8x8xf32> to vector<2x8x8xbf16>
    %218 = arith.truncf %201 : vector<2x8x8xf32> to vector<2x8x8xbf16>
    "tpu.trace_start"() <{level = 10 : i32, message = "bqk,bkd->bqd"}> : () -> ()
    %cst_152 = arith.constant dense<0.000000e+00> : vector<2x8x8xf32>
    %219 = tpu.matmul %217, %218, %cst_152 {dimension_numbers = #tpu.dot_dimension_numbers<[2], [1], [1], [2], [0, 0, 0, 1, 1, 2], [0], [0]>} : vector<2x8x8xbf16>, vector<2x8x8xbf16>, vector<2x8x8xf32> -> vector<2x8x8xf32>
    "tpu.trace_stop"() : () -> ()
    %220 = vector.shape_cast %219 : vector<2x8x8xf32> to vector<16x8xf32>
    %221 = arith.truncf %220 : vector<16x8xf32> to vector<16x8xbf16>
    %c0_153 = arith.constant 0 : index
    %c3_154 = arith.constant 3 : index
    %c0_155 = arith.constant 0 : index
    %c0_156 = arith.constant 0 : index
    %222 = vector.load %arg10[%c0_153, %c3_154, %c0_155, %c0_156] : memref<2x4x8x32xbf16, #tpu.memory_space<vmem>>, vector<1x1x8x32xbf16>
    %223 = vector.shape_cast %222 : vector<1x1x8x32xbf16> to vector<8x32xbf16>
    %cst_157 = arith.constant dense<0.000000e+00> : vector<16x32xf32>
    %224 = tpu.matmul %221, %223, %cst_157 {dimension_numbers = #tpu.dot_dimension_numbers<[1], [0], [0], [1], [0, 0, 1, 1], [], []>} : vector<16x8xbf16>, vector<8x32xbf16>, vector<16x32xf32> -> vector<16x32xf32>
    %225 = arith.addf %177, %224 : vector<16x32xf32>
    %c0_158 = arith.constant 0 : index
    %c0_159 = arith.constant 0 : index
    %c0_160 = arith.constant 0 : index
    %226 = vector.load %arg11[%c0_158, %c0_159, %c0_160] : memref<2x1x32xf32, #tpu.memory_space<vmem>>, vector<1x1x32xf32>
    %227 = vector.shape_cast %226 : vector<1x1x32xf32> to vector<1x32xf32>
    %228 = vector.broadcast %227 : vector<1x32xf32> to vector<16x32xf32>
    %229 = arith.addf %225, %228 : vector<16x32xf32>
    %230 = arith.addf %229, %31 : vector<16x32xf32>
    %c0_161 = arith.constant 0 : index
    %c0_162 = arith.constant 0 : index
    %c0_163 = arith.constant 0 : index
    %231 = vector.load %arg12[%c0_161, %c0_162, %c0_163] : memref<2x1x32xf32, #tpu.memory_space<vmem>>, vector<1x1x32xf32>
    %232 = vector.shape_cast %231 : vector<1x1x32xf32> to vector<1x32xf32>
    %c0_164 = arith.constant 0 : index
    %c0_165 = arith.constant 0 : index
    %c0_166 = arith.constant 0 : index
    %233 = vector.load %arg13[%c0_164, %c0_165, %c0_166] : memref<2x1x32xf32, #tpu.memory_space<vmem>>, vector<1x1x32xf32>
    %234 = vector.shape_cast %233 : vector<1x1x32xf32> to vector<1x32xf32>
    %cst_167 = arith.constant dense<0.000000e+00> : vector<16xf32>
    %235 = vector.multi_reduction <add>, %230, %cst_167 [1] : vector<16x32xf32> to vector<16xf32>
    %236 = vector.shape_cast %235 : vector<16xf32> to vector<16x1xf32>
    %cst_168 = arith.constant 3.200000e+01 : f32
    %237 = vector.broadcast %cst_168 : f32 to vector<16x1xf32>
    %238 = arith.divf %236, %237 : vector<16x1xf32>
    %239 = vector.broadcast %238 : vector<16x1xf32> to vector<16x32xf32>
    %240 = arith.subf %230, %239 : vector<16x32xf32>
    %241 = arith.mulf %240, %240 : vector<16x32xf32>
    %cst_169 = arith.constant dense<0.000000e+00> : vector<16xf32>
    %242 = vector.multi_reduction <add>, %241, %cst_169 [1] : vector<16x32xf32> to vector<16xf32>
    %243 = vector.shape_cast %242 : vector<16xf32> to vector<16x1xf32>
    %cst_170 = arith.constant 3.200000e+01 : f32
    %244 = vector.broadcast %cst_170 : f32 to vector<16x1xf32>
    %245 = arith.divf %243, %244 : vector<16x1xf32>
    %246 = vector.broadcast %238 : vector<16x1xf32> to vector<16x32xf32>
    %247 = arith.subf %230, %246 : vector<16x32xf32>
    %cst_171 = arith.constant 9.99999996E-13 : f32
    %248 = vector.broadcast %cst_171 : f32 to vector<16x1xf32>
    %249 = arith.addf %245, %248 : vector<16x1xf32>
    %250 = math.rsqrt %249 : vector<16x1xf32>
    %251 = vector.broadcast %250 : vector<16x1xf32> to vector<16x32xf32>
    %252 = arith.mulf %247, %251 : vector<16x32xf32>
    %253 = vector.broadcast %232 : vector<1x32xf32> to vector<16x32xf32>
    %254 = arith.mulf %252, %253 : vector<16x32xf32>
    %255 = vector.broadcast %234 : vector<1x32xf32> to vector<16x32xf32>
    %256 = arith.addf %254, %255 : vector<16x32xf32>
    %257 = arith.truncf %256 : vector<16x32xf32> to vector<16x32xbf16>
    %c0_172 = arith.constant 0 : index
    %c0_173 = arith.constant 0 : index
    %c0_174 = arith.constant 0 : index
    %258 = vector.load %arg14[%c0_172, %c0_173, %c0_174] : memref<2x32x64xbf16, #tpu.memory_space<vmem>>, vector<1x32x64xbf16>
    %259 = vector.shape_cast %258 : vector<1x32x64xbf16> to vector<32x64xbf16>
    %cst_175 = arith.constant dense<0.000000e+00> : vector<16x64xf32>
    %260 = tpu.matmul %257, %259, %cst_175 {dimension_numbers = #tpu.dot_dimension_numbers<[1], [0], [0], [1], [0, 0, 1, 1], [], []>} : vector<16x32xbf16>, vector<32x64xbf16>, vector<16x64xf32> -> vector<16x64xf32>
    %c0_176 = arith.constant 0 : index
    %c0_177 = arith.constant 0 : index
    %c0_178 = arith.constant 0 : index
    %261 = vector.load %arg15[%c0_176, %c0_177, %c0_178] : memref<2x1x64xf32, #tpu.memory_space<vmem>>, vector<1x1x64xf32>
    %262 = vector.shape_cast %261 : vector<1x1x64xf32> to vector<1x64xf32>
    %263 = vector.broadcast %262 : vector<1x64xf32> to vector<16x64xf32>
    %264 = arith.addf %260, %263 : vector<16x64xf32>
    %cst_179 = arith.constant 5.000000e-01 : f32
    %265 = vector.broadcast %cst_179 : f32 to vector<16x64xf32>
    %266 = arith.mulf %265, %264 : vector<16x64xf32>
    %cst_180 = arith.constant 4.471500e-02 : f32
    %267 = vector.broadcast %cst_180 : f32 to vector<16x64xf32>
    %268 = arith.mulf %267, %264 : vector<16x64xf32>
    %269 = arith.mulf %268, %264 : vector<16x64xf32>
    %270 = arith.mulf %269, %264 : vector<16x64xf32>
    %271 = arith.addf %264, %270 : vector<16x64xf32>
    %cst_181 = arith.constant 0.797884583 : f32
    %272 = vector.broadcast %cst_181 : f32 to vector<16x64xf32>
    %273 = arith.mulf %272, %271 : vector<16x64xf32>
    %274 = math.tanh %273 : vector<16x64xf32>
    %cst_182 = arith.constant 1.000000e+00 : f32
    %275 = vector.broadcast %cst_182 : f32 to vector<16x64xf32>
    %276 = arith.addf %275, %274 : vector<16x64xf32>
    %277 = arith.mulf %266, %276 : vector<16x64xf32>
    %278 = arith.truncf %277 : vector<16x64xf32> to vector<16x64xbf16>
    %c0_183 = arith.constant 0 : index
    %c0_184 = arith.constant 0 : index
    %c0_185 = arith.constant 0 : index
    %279 = vector.load %arg16[%c0_183, %c0_184, %c0_185] : memref<2x64x32xbf16, #tpu.memory_space<vmem>>, vector<1x64x32xbf16>
    %280 = vector.shape_cast %279 : vector<1x64x32xbf16> to vector<64x32xbf16>
    %cst_186 = arith.constant dense<0.000000e+00> : vector<16x32xf32>
    %281 = tpu.matmul %278, %280, %cst_186 {dimension_numbers = #tpu.dot_dimension_numbers<[1], [0], [0], [1], [0, 0, 1, 1], [], []>} : vector<16x64xbf16>, vector<64x32xbf16>, vector<16x32xf32> -> vector<16x32xf32>
    %c0_187 = arith.constant 0 : index
    %c0_188 = arith.constant 0 : index
    %c0_189 = arith.constant 0 : index
    %282 = vector.load %arg17[%c0_187, %c0_188, %c0_189] : memref<2x1x32xf32, #tpu.memory_space<vmem>>, vector<1x1x32xf32>
    %283 = vector.shape_cast %282 : vector<1x1x32xf32> to vector<1x32xf32>
    %284 = vector.broadcast %283 : vector<1x32xf32> to vector<16x32xf32>
    %285 = arith.addf %281, %284 : vector<16x32xf32>
    %286 = arith.addf %285, %256 : vector<16x32xf32>
    %c0_190 = arith.constant 0 : index
    %c0_191 = arith.constant 0 : index
    %c0_192 = arith.constant 0 : index
    %287 = vector.load %arg18[%c0_190, %c0_191, %c0_192] : memref<2x1x32xf32, #tpu.memory_space<vmem>>, vector<1x1x32xf32>
    %288 = vector.shape_cast %287 : vector<1x1x32xf32> to vector<1x32xf32>
    %c0_193 = arith.constant 0 : index
    %c0_194 = arith.constant 0 : index
    %c0_195 = arith.constant 0 : index
    %289 = vector.load %arg19[%c0_193, %c0_194, %c0_195] : memref<2x1x32xf32, #tpu.memory_space<vmem>>, vector<1x1x32xf32>
    %290 = vector.shape_cast %289 : vector<1x1x32xf32> to vector<1x32xf32>
    %cst_196 = arith.constant dense<0.000000e+00> : vector<16xf32>
    %291 = vector.multi_reduction <add>, %286, %cst_196 [1] : vector<16x32xf32> to vector<16xf32>
    %292 = vector.shape_cast %291 : vector<16xf32> to vector<16x1xf32>
    %cst_197 = arith.constant 3.200000e+01 : f32
    %293 = vector.broadcast %cst_197 : f32 to vector<16x1xf32>
    %294 = arith.divf %292, %293 : vector<16x1xf32>
    %295 = vector.broadcast %294 : vector<16x1xf32> to vector<16x32xf32>
    %296 = arith.subf %286, %295 : vector<16x32xf32>
    %297 = arith.mulf %296, %296 : vector<16x32xf32>
    %cst_198 = arith.constant dense<0.000000e+00> : vector<16xf32>
    %298 = vector.multi_reduction <add>, %297, %cst_198 [1] : vector<16x32xf32> to vector<16xf32>
    %299 = vector.shape_cast %298 : vector<16xf32> to vector<16x1xf32>
    %cst_199 = arith.constant 3.200000e+01 : f32
    %300 = vector.broadcast %cst_199 : f32 to vector<16x1xf32>
    %301 = arith.divf %299, %300 : vector<16x1xf32>
    %302 = vector.broadcast %294 : vector<16x1xf32> to vector<16x32xf32>
    %303 = arith.subf %286, %302 : vector<16x32xf32>
    %cst_200 = arith.constant 9.99999996E-13 : f32
    %304 = vector.broadcast %cst_200 : f32 to vector<16x1xf32>
    %305 = arith.addf %301, %304 : vector<16x1xf32>
    %306 = math.rsqrt %305 : vector<16x1xf32>
    %307 = vector.broadcast %306 : vector<16x1xf32> to vector<16x32xf32>
    %308 = arith.mulf %303, %307 : vector<16x32xf32>
    %309 = vector.broadcast %288 : vector<1x32xf32> to vector<16x32xf32>
    %310 = arith.mulf %308, %309 : vector<16x32xf32>
    %311 = vector.broadcast %290 : vector<1x32xf32> to vector<16x32xf32>
    %312 = arith.addf %310, %311 : vector<16x32xf32>
    %313 = arith.truncf %312 : vector<16x32xf32> to vector<16x32xbf16>
    %cst_201 = arith.constant 0.000000e+00 : f32
    %314 = vector.broadcast %cst_201 : f32 to vector<16x32xf32>
    %c1_202 = arith.constant 1 : index
    %c0_203 = arith.constant 0 : index
    %c0_204 = arith.constant 0 : index
    %c0_205 = arith.constant 0 : index
    %315 = vector.load %arg4[%c1_202, %c0_203, %c0_204, %c0_205] : memref<2x4x32x8xbf16, #tpu.memory_space<vmem>>, vector<1x1x32x8xbf16>
    %316 = vector.shape_cast %315 : vector<1x1x32x8xbf16> to vector<32x8xbf16>
    %cst_206 = arith.constant dense<0.000000e+00> : vector<16x8xf32>
    %317 = tpu.matmul %313, %316, %cst_206 {dimension_numbers = #tpu.dot_dimension_numbers<[1], [0], [0], [1], [0, 0, 1, 1], [], []>} : vector<16x32xbf16>, vector<32x8xbf16>, vector<16x8xf32> -> vector<16x8xf32>
    %c1_207 = arith.constant 1 : index
    %c0_208 = arith.constant 0 : index
    %c0_209 = arith.constant 0 : index
    %c0_210 = arith.constant 0 : index
    %318 = vector.load %arg5[%c1_207, %c0_208, %c0_209, %c0_210] : memref<2x4x1x8xf32, #tpu.memory_space<vmem>>, vector<1x1x1x8xf32>
    %319 = vector.shape_cast %318 : vector<1x1x1x8xf32> to vector<1x8xf32>
    %320 = vector.broadcast %319 : vector<1x8xf32> to vector<16x8xf32>
    %321 = arith.addf %317, %320 : vector<16x8xf32>
    %322 = vector.shape_cast %321 : vector<16x8xf32> to vector<2x8x8xf32>
    %c1_211 = arith.constant 1 : index
    %c0_212 = arith.constant 0 : index
    %c0_213 = arith.constant 0 : index
    %c0_214 = arith.constant 0 : index
    %323 = vector.load %arg6[%c1_211, %c0_212, %c0_213, %c0_214] : memref<2x4x32x8xbf16, #tpu.memory_space<vmem>>, vector<1x1x32x8xbf16>
    %324 = vector.shape_cast %323 : vector<1x1x32x8xbf16> to vector<32x8xbf16>
    %cst_215 = arith.constant dense<0.000000e+00> : vector<16x8xf32>
    %325 = tpu.matmul %313, %324, %cst_215 {dimension_numbers = #tpu.dot_dimension_numbers<[1], [0], [0], [1], [0, 0, 1, 1], [], []>} : vector<16x32xbf16>, vector<32x8xbf16>, vector<16x8xf32> -> vector<16x8xf32>
    %c1_216 = arith.constant 1 : index
    %c0_217 = arith.constant 0 : index
    %c0_218 = arith.constant 0 : index
    %c0_219 = arith.constant 0 : index
    %326 = vector.load %arg7[%c1_216, %c0_217, %c0_218, %c0_219] : memref<2x4x1x8xf32, #tpu.memory_space<vmem>>, vector<1x1x1x8xf32>
    %327 = vector.shape_cast %326 : vector<1x1x1x8xf32> to vector<1x8xf32>
    %328 = vector.broadcast %327 : vector<1x8xf32> to vector<16x8xf32>
    %329 = arith.addf %325, %328 : vector<16x8xf32>
    %330 = vector.shape_cast %329 : vector<16x8xf32> to vector<2x8x8xf32>
    %c1_220 = arith.constant 1 : index
    %c0_221 = arith.constant 0 : index
    %c0_222 = arith.constant 0 : index
    %c0_223 = arith.constant 0 : index
    %331 = vector.load %arg8[%c1_220, %c0_221, %c0_222, %c0_223] : memref<2x4x32x8xbf16, #tpu.memory_space<vmem>>, vector<1x1x32x8xbf16>
    %332 = vector.shape_cast %331 : vector<1x1x32x8xbf16> to vector<32x8xbf16>
    %cst_224 = arith.constant dense<0.000000e+00> : vector<16x8xf32>
    %333 = tpu.matmul %313, %332, %cst_224 {dimension_numbers = #tpu.dot_dimension_numbers<[1], [0], [0], [1], [0, 0, 1, 1], [], []>} : vector<16x32xbf16>, vector<32x8xbf16>, vector<16x8xf32> -> vector<16x8xf32>
    %c1_225 = arith.constant 1 : index
    %c0_226 = arith.constant 0 : index
    %c0_227 = arith.constant 0 : index
    %c0_228 = arith.constant 0 : index
    %334 = vector.load %arg9[%c1_225, %c0_226, %c0_227, %c0_228] : memref<2x4x1x8xf32, #tpu.memory_space<vmem>>, vector<1x1x1x8xf32>
    %335 = vector.shape_cast %334 : vector<1x1x1x8xf32> to vector<1x8xf32>
    %336 = vector.broadcast %335 : vector<1x8xf32> to vector<16x8xf32>
    %337 = arith.addf %333, %336 : vector<16x8xf32>
    %338 = vector.shape_cast %337 : vector<16x8xf32> to vector<2x8x8xf32>
    %339 = arith.truncf %322 : vector<2x8x8xf32> to vector<2x8x8xbf16>
    %340 = arith.truncf %330 : vector<2x8x8xf32> to vector<2x8x8xbf16>
    "tpu.trace_start"() <{level = 10 : i32, message = "bqd,bkd->bqk"}> : () -> ()
    %cst_229 = arith.constant dense<0.000000e+00> : vector<2x8x8xf32>
    %341 = tpu.matmul %339, %340, %cst_229 {dimension_numbers = #tpu.dot_dimension_numbers<[2], [2], [1], [1], [0, 0, 0, 1, 1, 1], [0], [0]>} : vector<2x8x8xbf16>, vector<2x8x8xbf16>, vector<2x8x8xf32> -> vector<2x8x8xf32>
    "tpu.trace_stop"() : () -> ()
    %cst_230 = arith.constant 0.353553385 : f32
    %342 = vector.broadcast %cst_230 : f32 to vector<2x8x8xf32>
    %343 = arith.mulf %341, %342 : vector<2x8x8xf32>
    %cst_231 = arith.constant dense<0xFF800000> : vector<2x8xf32>
    %344 = vector.multi_reduction <maximumf>, %343, %cst_231 [2] : vector<2x8x8xf32> to vector<2x8xf32>
    %345 = vector.shape_cast %344 : vector<2x8xf32> to vector<2x8x1xf32>
    %346 = vector.broadcast %345 : vector<2x8x1xf32> to vector<2x8x8xf32>
    %347 = arith.subf %343, %346 : vector<2x8x8xf32>
    %348 = math.exp %347 : vector<2x8x8xf32>
    %cst_232 = arith.constant dense<0.000000e+00> : vector<2x8xf32>
    %349 = vector.multi_reduction <add>, %348, %cst_232 [2] : vector<2x8x8xf32> to vector<2x8xf32>
    %350 = vector.shape_cast %349 : vector<2x8xf32> to vector<2x8x1xf32>
    %351 = tpu.reciprocal %350 {approx = true} : vector<2x8x1xf32> -> vector<2x8x1xf32>
    %352 = vector.broadcast %351 : vector<2x8x1xf32> to vector<2x8x8xf32>
    %353 = arith.mulf %348, %352 : vector<2x8x8xf32>
    %354 = arith.truncf %353 : vector<2x8x8xf32> to vector<2x8x8xbf16>
    %355 = arith.truncf %338 : vector<2x8x8xf32> to vector<2x8x8xbf16>
    "tpu.trace_start"() <{level = 10 : i32, message = "bqk,bkd->bqd"}> : () -> ()
    %cst_233 = arith.constant dense<0.000000e+00> : vector<2x8x8xf32>
    %356 = tpu.matmul %354, %355, %cst_233 {dimension_numbers = #tpu.dot_dimension_numbers<[2], [1], [1], [2], [0, 0, 0, 1, 1, 2], [0], [0]>} : vector<2x8x8xbf16>, vector<2x8x8xbf16>, vector<2x8x8xf32> -> vector<2x8x8xf32>
    "tpu.trace_stop"() : () -> ()
    %357 = vector.shape_cast %356 : vector<2x8x8xf32> to vector<16x8xf32>
    %358 = arith.truncf %357 : vector<16x8xf32> to vector<16x8xbf16>
    %c1_234 = arith.constant 1 : index
    %c0_235 = arith.constant 0 : index
    %c0_236 = arith.constant 0 : index
    %c0_237 = arith.constant 0 : index
    %359 = vector.load %arg10[%c1_234, %c0_235, %c0_236, %c0_237] : memref<2x4x8x32xbf16, #tpu.memory_space<vmem>>, vector<1x1x8x32xbf16>
    %360 = vector.shape_cast %359 : vector<1x1x8x32xbf16> to vector<8x32xbf16>
    %cst_238 = arith.constant dense<0.000000e+00> : vector<16x32xf32>
    %361 = tpu.matmul %358, %360, %cst_238 {dimension_numbers = #tpu.dot_dimension_numbers<[1], [0], [0], [1], [0, 0, 1, 1], [], []>} : vector<16x8xbf16>, vector<8x32xbf16>, vector<16x32xf32> -> vector<16x32xf32>
    %362 = arith.addf %314, %361 : vector<16x32xf32>
    %c1_239 = arith.constant 1 : index
    %c1_240 = arith.constant 1 : index
    %c0_241 = arith.constant 0 : index
    %c0_242 = arith.constant 0 : index
    %363 = vector.load %arg4[%c1_239, %c1_240, %c0_241, %c0_242] : memref<2x4x32x8xbf16, #tpu.memory_space<vmem>>, vector<1x1x32x8xbf16>
    %364 = vector.shape_cast %363 : vector<1x1x32x8xbf16> to vector<32x8xbf16>
    %cst_243 = arith.constant dense<0.000000e+00> : vector<16x8xf32>
    %365 = tpu.matmul %313, %364, %cst_243 {dimension_numbers = #tpu.dot_dimension_numbers<[1], [0], [0], [1], [0, 0, 1, 1], [], []>} : vector<16x32xbf16>, vector<32x8xbf16>, vector<16x8xf32> -> vector<16x8xf32>
    %c1_244 = arith.constant 1 : index
    %c1_245 = arith.constant 1 : index
    %c0_246 = arith.constant 0 : index
    %c0_247 = arith.constant 0 : index
    %366 = vector.load %arg5[%c1_244, %c1_245, %c0_246, %c0_247] : memref<2x4x1x8xf32, #tpu.memory_space<vmem>>, vector<1x1x1x8xf32>
    %367 = vector.shape_cast %366 : vector<1x1x1x8xf32> to vector<1x8xf32>
    %368 = vector.broadcast %367 : vector<1x8xf32> to vector<16x8xf32>
    %369 = arith.addf %365, %368 : vector<16x8xf32>
    %370 = vector.shape_cast %369 : vector<16x8xf32> to vector<2x8x8xf32>
    %c1_248 = arith.constant 1 : index
    %c1_249 = arith.constant 1 : index
    %c0_250 = arith.constant 0 : index
    %c0_251 = arith.constant 0 : index
    %371 = vector.load %arg6[%c1_248, %c1_249, %c0_250, %c0_251] : memref<2x4x32x8xbf16, #tpu.memory_space<vmem>>, vector<1x1x32x8xbf16>
    %372 = vector.shape_cast %371 : vector<1x1x32x8xbf16> to vector<32x8xbf16>
    %cst_252 = arith.constant dense<0.000000e+00> : vector<16x8xf32>
    %373 = tpu.matmul %313, %372, %cst_252 {dimension_numbers = #tpu.dot_dimension_numbers<[1], [0], [0], [1], [0, 0, 1, 1], [], []>} : vector<16x32xbf16>, vector<32x8xbf16>, vector<16x8xf32> -> vector<16x8xf32>
    %c1_253 = arith.constant 1 : index
    %c1_254 = arith.constant 1 : index
    %c0_255 = arith.constant 0 : index
    %c0_256 = arith.constant 0 : index
    %374 = vector.load %arg7[%c1_253, %c1_254, %c0_255, %c0_256] : memref<2x4x1x8xf32, #tpu.memory_space<vmem>>, vector<1x1x1x8xf32>
    %375 = vector.shape_cast %374 : vector<1x1x1x8xf32> to vector<1x8xf32>
    %376 = vector.broadcast %375 : vector<1x8xf32> to vector<16x8xf32>
    %377 = arith.addf %373, %376 : vector<16x8xf32>
    %378 = vector.shape_cast %377 : vector<16x8xf32> to vector<2x8x8xf32>
    %c1_257 = arith.constant 1 : index
    %c1_258 = arith.constant 1 : index
    %c0_259 = arith.constant 0 : index
    %c0_260 = arith.constant 0 : index
    %379 = vector.load %arg8[%c1_257, %c1_258, %c0_259, %c0_260] : memref<2x4x32x8xbf16, #tpu.memory_space<vmem>>, vector<1x1x32x8xbf16>
    %380 = vector.shape_cast %379 : vector<1x1x32x8xbf16> to vector<32x8xbf16>
    %cst_261 = arith.constant dense<0.000000e+00> : vector<16x8xf32>
    %381 = tpu.matmul %313, %380, %cst_261 {dimension_numbers = #tpu.dot_dimension_numbers<[1], [0], [0], [1], [0, 0, 1, 1], [], []>} : vector<16x32xbf16>, vector<32x8xbf16>, vector<16x8xf32> -> vector<16x8xf32>
    %c1_262 = arith.constant 1 : index
    %c1_263 = arith.constant 1 : index
    %c0_264 = arith.constant 0 : index
    %c0_265 = arith.constant 0 : index
    %382 = vector.load %arg9[%c1_262, %c1_263, %c0_264, %c0_265] : memref<2x4x1x8xf32, #tpu.memory_space<vmem>>, vector<1x1x1x8xf32>
    %383 = vector.shape_cast %382 : vector<1x1x1x8xf32> to vector<1x8xf32>
    %384 = vector.broadcast %383 : vector<1x8xf32> to vector<16x8xf32>
    %385 = arith.addf %381, %384 : vector<16x8xf32>
    %386 = vector.shape_cast %385 : vector<16x8xf32> to vector<2x8x8xf32>
    %387 = arith.truncf %370 : vector<2x8x8xf32> to vector<2x8x8xbf16>
    %388 = arith.truncf %378 : vector<2x8x8xf32> to vector<2x8x8xbf16>
    "tpu.trace_start"() <{level = 10 : i32, message = "bqd,bkd->bqk"}> : () -> ()
    %cst_266 = arith.constant dense<0.000000e+00> : vector<2x8x8xf32>
    %389 = tpu.matmul %387, %388, %cst_266 {dimension_numbers = #tpu.dot_dimension_numbers<[2], [2], [1], [1], [0, 0, 0, 1, 1, 1], [0], [0]>} : vector<2x8x8xbf16>, vector<2x8x8xbf16>, vector<2x8x8xf32> -> vector<2x8x8xf32>
    "tpu.trace_stop"() : () -> ()
    %cst_267 = arith.constant 0.353553385 : f32
    %390 = vector.broadcast %cst_267 : f32 to vector<2x8x8xf32>
    %391 = arith.mulf %389, %390 : vector<2x8x8xf32>
    %cst_268 = arith.constant dense<0xFF800000> : vector<2x8xf32>
    %392 = vector.multi_reduction <maximumf>, %391, %cst_268 [2] : vector<2x8x8xf32> to vector<2x8xf32>
    %393 = vector.shape_cast %392 : vector<2x8xf32> to vector<2x8x1xf32>
    %394 = vector.broadcast %393 : vector<2x8x1xf32> to vector<2x8x8xf32>
    %395 = arith.subf %391, %394 : vector<2x8x8xf32>
    %396 = math.exp %395 : vector<2x8x8xf32>
    %cst_269 = arith.constant dense<0.000000e+00> : vector<2x8xf32>
    %397 = vector.multi_reduction <add>, %396, %cst_269 [2] : vector<2x8x8xf32> to vector<2x8xf32>
    %398 = vector.shape_cast %397 : vector<2x8xf32> to vector<2x8x1xf32>
    %399 = tpu.reciprocal %398 {approx = true} : vector<2x8x1xf32> -> vector<2x8x1xf32>
    %400 = vector.broadcast %399 : vector<2x8x1xf32> to vector<2x8x8xf32>
    %401 = arith.mulf %396, %400 : vector<2x8x8xf32>
    %402 = arith.truncf %401 : vector<2x8x8xf32> to vector<2x8x8xbf16>
    %403 = arith.truncf %386 : vector<2x8x8xf32> to vector<2x8x8xbf16>
    "tpu.trace_start"() <{level = 10 : i32, message = "bqk,bkd->bqd"}> : () -> ()
    %cst_270 = arith.constant dense<0.000000e+00> : vector<2x8x8xf32>
    %404 = tpu.matmul %402, %403, %cst_270 {dimension_numbers = #tpu.dot_dimension_numbers<[2], [1], [1], [2], [0, 0, 0, 1, 1, 2], [0], [0]>} : vector<2x8x8xbf16>, vector<2x8x8xbf16>, vector<2x8x8xf32> -> vector<2x8x8xf32>
    "tpu.trace_stop"() : () -> ()
    %405 = vector.shape_cast %404 : vector<2x8x8xf32> to vector<16x8xf32>
    %406 = arith.truncf %405 : vector<16x8xf32> to vector<16x8xbf16>
    %c1_271 = arith.constant 1 : index
    %c1_272 = arith.constant 1 : index
    %c0_273 = arith.constant 0 : index
    %c0_274 = arith.constant 0 : index
    %407 = vector.load %arg10[%c1_271, %c1_272, %c0_273, %c0_274] : memref<2x4x8x32xbf16, #tpu.memory_space<vmem>>, vector<1x1x8x32xbf16>
    %408 = vector.shape_cast %407 : vector<1x1x8x32xbf16> to vector<8x32xbf16>
    %cst_275 = arith.constant dense<0.000000e+00> : vector<16x32xf32>
    %409 = tpu.matmul %406, %408, %cst_275 {dimension_numbers = #tpu.dot_dimension_numbers<[1], [0], [0], [1], [0, 0, 1, 1], [], []>} : vector<16x8xbf16>, vector<8x32xbf16>, vector<16x32xf32> -> vector<16x32xf32>
    %410 = arith.addf %362, %409 : vector<16x32xf32>
    %c1_276 = arith.constant 1 : index
    %c2_277 = arith.constant 2 : index
    %c0_278 = arith.constant 0 : index
    %c0_279 = arith.constant 0 : index
    %411 = vector.load %arg4[%c1_276, %c2_277, %c0_278, %c0_279] : memref<2x4x32x8xbf16, #tpu.memory_space<vmem>>, vector<1x1x32x8xbf16>
    %412 = vector.shape_cast %411 : vector<1x1x32x8xbf16> to vector<32x8xbf16>
    %cst_280 = arith.constant dense<0.000000e+00> : vector<16x8xf32>
    %413 = tpu.matmul %313, %412, %cst_280 {dimension_numbers = #tpu.dot_dimension_numbers<[1], [0], [0], [1], [0, 0, 1, 1], [], []>} : vector<16x32xbf16>, vector<32x8xbf16>, vector<16x8xf32> -> vector<16x8xf32>
    %c1_281 = arith.constant 1 : index
    %c2_282 = arith.constant 2 : index
    %c0_283 = arith.constant 0 : index
    %c0_284 = arith.constant 0 : index
    %414 = vector.load %arg5[%c1_281, %c2_282, %c0_283, %c0_284] : memref<2x4x1x8xf32, #tpu.memory_space<vmem>>, vector<1x1x1x8xf32>
    %415 = vector.shape_cast %414 : vector<1x1x1x8xf32> to vector<1x8xf32>
    %416 = vector.broadcast %415 : vector<1x8xf32> to vector<16x8xf32>
    %417 = arith.addf %413, %416 : vector<16x8xf32>
    %418 = vector.shape_cast %417 : vector<16x8xf32> to vector<2x8x8xf32>
    %c1_285 = arith.constant 1 : index
    %c2_286 = arith.constant 2 : index
    %c0_287 = arith.constant 0 : index
    %c0_288 = arith.constant 0 : index
    %419 = vector.load %arg6[%c1_285, %c2_286, %c0_287, %c0_288] : memref<2x4x32x8xbf16, #tpu.memory_space<vmem>>, vector<1x1x32x8xbf16>
    %420 = vector.shape_cast %419 : vector<1x1x32x8xbf16> to vector<32x8xbf16>
    %cst_289 = arith.constant dense<0.000000e+00> : vector<16x8xf32>
    %421 = tpu.matmul %313, %420, %cst_289 {dimension_numbers = #tpu.dot_dimension_numbers<[1], [0], [0], [1], [0, 0, 1, 1], [], []>} : vector<16x32xbf16>, vector<32x8xbf16>, vector<16x8xf32> -> vector<16x8xf32>
    %c1_290 = arith.constant 1 : index
    %c2_291 = arith.constant 2 : index
    %c0_292 = arith.constant 0 : index
    %c0_293 = arith.constant 0 : index
    %422 = vector.load %arg7[%c1_290, %c2_291, %c0_292, %c0_293] : memref<2x4x1x8xf32, #tpu.memory_space<vmem>>, vector<1x1x1x8xf32>
    %423 = vector.shape_cast %422 : vector<1x1x1x8xf32> to vector<1x8xf32>
    %424 = vector.broadcast %423 : vector<1x8xf32> to vector<16x8xf32>
    %425 = arith.addf %421, %424 : vector<16x8xf32>
    %426 = vector.shape_cast %425 : vector<16x8xf32> to vector<2x8x8xf32>
    %c1_294 = arith.constant 1 : index
    %c2_295 = arith.constant 2 : index
    %c0_296 = arith.constant 0 : index
    %c0_297 = arith.constant 0 : index
    %427 = vector.load %arg8[%c1_294, %c2_295, %c0_296, %c0_297] : memref<2x4x32x8xbf16, #tpu.memory_space<vmem>>, vector<1x1x32x8xbf16>
    %428 = vector.shape_cast %427 : vector<1x1x32x8xbf16> to vector<32x8xbf16>
    %cst_298 = arith.constant dense<0.000000e+00> : vector<16x8xf32>
    %429 = tpu.matmul %313, %428, %cst_298 {dimension_numbers = #tpu.dot_dimension_numbers<[1], [0], [0], [1], [0, 0, 1, 1], [], []>} : vector<16x32xbf16>, vector<32x8xbf16>, vector<16x8xf32> -> vector<16x8xf32>
    %c1_299 = arith.constant 1 : index
    %c2_300 = arith.constant 2 : index
    %c0_301 = arith.constant 0 : index
    %c0_302 = arith.constant 0 : index
    %430 = vector.load %arg9[%c1_299, %c2_300, %c0_301, %c0_302] : memref<2x4x1x8xf32, #tpu.memory_space<vmem>>, vector<1x1x1x8xf32>
    %431 = vector.shape_cast %430 : vector<1x1x1x8xf32> to vector<1x8xf32>
    %432 = vector.broadcast %431 : vector<1x8xf32> to vector<16x8xf32>
    %433 = arith.addf %429, %432 : vector<16x8xf32>
    %434 = vector.shape_cast %433 : vector<16x8xf32> to vector<2x8x8xf32>
    %435 = arith.truncf %418 : vector<2x8x8xf32> to vector<2x8x8xbf16>
    %436 = arith.truncf %426 : vector<2x8x8xf32> to vector<2x8x8xbf16>
    "tpu.trace_start"() <{level = 10 : i32, message = "bqd,bkd->bqk"}> : () -> ()
    %cst_303 = arith.constant dense<0.000000e+00> : vector<2x8x8xf32>
    %437 = tpu.matmul %435, %436, %cst_303 {dimension_numbers = #tpu.dot_dimension_numbers<[2], [2], [1], [1], [0, 0, 0, 1, 1, 1], [0], [0]>} : vector<2x8x8xbf16>, vector<2x8x8xbf16>, vector<2x8x8xf32> -> vector<2x8x8xf32>
    "tpu.trace_stop"() : () -> ()
    %cst_304 = arith.constant 0.353553385 : f32
    %438 = vector.broadcast %cst_304 : f32 to vector<2x8x8xf32>
    %439 = arith.mulf %437, %438 : vector<2x8x8xf32>
    %cst_305 = arith.constant dense<0xFF800000> : vector<2x8xf32>
    %440 = vector.multi_reduction <maximumf>, %439, %cst_305 [2] : vector<2x8x8xf32> to vector<2x8xf32>
    %441 = vector.shape_cast %440 : vector<2x8xf32> to vector<2x8x1xf32>
    %442 = vector.broadcast %441 : vector<2x8x1xf32> to vector<2x8x8xf32>
    %443 = arith.subf %439, %442 : vector<2x8x8xf32>
    %444 = math.exp %443 : vector<2x8x8xf32>
    %cst_306 = arith.constant dense<0.000000e+00> : vector<2x8xf32>
    %445 = vector.multi_reduction <add>, %444, %cst_306 [2] : vector<2x8x8xf32> to vector<2x8xf32>
    %446 = vector.shape_cast %445 : vector<2x8xf32> to vector<2x8x1xf32>
    %447 = tpu.reciprocal %446 {approx = true} : vector<2x8x1xf32> -> vector<2x8x1xf32>
    %448 = vector.broadcast %447 : vector<2x8x1xf32> to vector<2x8x8xf32>
    %449 = arith.mulf %444, %448 : vector<2x8x8xf32>
    %450 = arith.truncf %449 : vector<2x8x8xf32> to vector<2x8x8xbf16>
    %451 = arith.truncf %434 : vector<2x8x8xf32> to vector<2x8x8xbf16>
    "tpu.trace_start"() <{level = 10 : i32, message = "bqk,bkd->bqd"}> : () -> ()
    %cst_307 = arith.constant dense<0.000000e+00> : vector<2x8x8xf32>
    %452 = tpu.matmul %450, %451, %cst_307 {dimension_numbers = #tpu.dot_dimension_numbers<[2], [1], [1], [2], [0, 0, 0, 1, 1, 2], [0], [0]>} : vector<2x8x8xbf16>, vector<2x8x8xbf16>, vector<2x8x8xf32> -> vector<2x8x8xf32>
    "tpu.trace_stop"() : () -> ()
    %453 = vector.shape_cast %452 : vector<2x8x8xf32> to vector<16x8xf32>
    %454 = arith.truncf %453 : vector<16x8xf32> to vector<16x8xbf16>
    %c1_308 = arith.constant 1 : index
    %c2_309 = arith.constant 2 : index
    %c0_310 = arith.constant 0 : index
    %c0_311 = arith.constant 0 : index
    %455 = vector.load %arg10[%c1_308, %c2_309, %c0_310, %c0_311] : memref<2x4x8x32xbf16, #tpu.memory_space<vmem>>, vector<1x1x8x32xbf16>
    %456 = vector.shape_cast %455 : vector<1x1x8x32xbf16> to vector<8x32xbf16>
    %cst_312 = arith.constant dense<0.000000e+00> : vector<16x32xf32>
    %457 = tpu.matmul %454, %456, %cst_312 {dimension_numbers = #tpu.dot_dimension_numbers<[1], [0], [0], [1], [0, 0, 1, 1], [], []>} : vector<16x8xbf16>, vector<8x32xbf16>, vector<16x32xf32> -> vector<16x32xf32>
    %458 = arith.addf %410, %457 : vector<16x32xf32>
    %c1_313 = arith.constant 1 : index
    %c3_314 = arith.constant 3 : index
    %c0_315 = arith.constant 0 : index
    %c0_316 = arith.constant 0 : index
    %459 = vector.load %arg4[%c1_313, %c3_314, %c0_315, %c0_316] : memref<2x4x32x8xbf16, #tpu.memory_space<vmem>>, vector<1x1x32x8xbf16>
    %460 = vector.shape_cast %459 : vector<1x1x32x8xbf16> to vector<32x8xbf16>
    %cst_317 = arith.constant dense<0.000000e+00> : vector<16x8xf32>
    %461 = tpu.matmul %313, %460, %cst_317 {dimension_numbers = #tpu.dot_dimension_numbers<[1], [0], [0], [1], [0, 0, 1, 1], [], []>} : vector<16x32xbf16>, vector<32x8xbf16>, vector<16x8xf32> -> vector<16x8xf32>
    %c1_318 = arith.constant 1 : index
    %c3_319 = arith.constant 3 : index
    %c0_320 = arith.constant 0 : index
    %c0_321 = arith.constant 0 : index
    %462 = vector.load %arg5[%c1_318, %c3_319, %c0_320, %c0_321] : memref<2x4x1x8xf32, #tpu.memory_space<vmem>>, vector<1x1x1x8xf32>
    %463 = vector.shape_cast %462 : vector<1x1x1x8xf32> to vector<1x8xf32>
    %464 = vector.broadcast %463 : vector<1x8xf32> to vector<16x8xf32>
    %465 = arith.addf %461, %464 : vector<16x8xf32>
    %466 = vector.shape_cast %465 : vector<16x8xf32> to vector<2x8x8xf32>
    %c1_322 = arith.constant 1 : index
    %c3_323 = arith.constant 3 : index
    %c0_324 = arith.constant 0 : index
    %c0_325 = arith.constant 0 : index
    %467 = vector.load %arg6[%c1_322, %c3_323, %c0_324, %c0_325] : memref<2x4x32x8xbf16, #tpu.memory_space<vmem>>, vector<1x1x32x8xbf16>
    %468 = vector.shape_cast %467 : vector<1x1x32x8xbf16> to vector<32x8xbf16>
    %cst_326 = arith.constant dense<0.000000e+00> : vector<16x8xf32>
    %469 = tpu.matmul %313, %468, %cst_326 {dimension_numbers = #tpu.dot_dimension_numbers<[1], [0], [0], [1], [0, 0, 1, 1], [], []>} : vector<16x32xbf16>, vector<32x8xbf16>, vector<16x8xf32> -> vector<16x8xf32>
    %c1_327 = arith.constant 1 : index
    %c3_328 = arith.constant 3 : index
    %c0_329 = arith.constant 0 : index
    %c0_330 = arith.constant 0 : index
    %470 = vector.load %arg7[%c1_327, %c3_328, %c0_329, %c0_330] : memref<2x4x1x8xf32, #tpu.memory_space<vmem>>, vector<1x1x1x8xf32>
    %471 = vector.shape_cast %470 : vector<1x1x1x8xf32> to vector<1x8xf32>
    %472 = vector.broadcast %471 : vector<1x8xf32> to vector<16x8xf32>
    %473 = arith.addf %469, %472 : vector<16x8xf32>
    %474 = vector.shape_cast %473 : vector<16x8xf32> to vector<2x8x8xf32>
    %c1_331 = arith.constant 1 : index
    %c3_332 = arith.constant 3 : index
    %c0_333 = arith.constant 0 : index
    %c0_334 = arith.constant 0 : index
    %475 = vector.load %arg8[%c1_331, %c3_332, %c0_333, %c0_334] : memref<2x4x32x8xbf16, #tpu.memory_space<vmem>>, vector<1x1x32x8xbf16>
    %476 = vector.shape_cast %475 : vector<1x1x32x8xbf16> to vector<32x8xbf16>
    %cst_335 = arith.constant dense<0.000000e+00> : vector<16x8xf32>
    %477 = tpu.matmul %313, %476, %cst_335 {dimension_numbers = #tpu.dot_dimension_numbers<[1], [0], [0], [1], [0, 0, 1, 1], [], []>} : vector<16x32xbf16>, vector<32x8xbf16>, vector<16x8xf32> -> vector<16x8xf32>
    %c1_336 = arith.constant 1 : index
    %c3_337 = arith.constant 3 : index
    %c0_338 = arith.constant 0 : index
    %c0_339 = arith.constant 0 : index
    %478 = vector.load %arg9[%c1_336, %c3_337, %c0_338, %c0_339] : memref<2x4x1x8xf32, #tpu.memory_space<vmem>>, vector<1x1x1x8xf32>
    %479 = vector.shape_cast %478 : vector<1x1x1x8xf32> to vector<1x8xf32>
    %480 = vector.broadcast %479 : vector<1x8xf32> to vector<16x8xf32>
    %481 = arith.addf %477, %480 : vector<16x8xf32>
    %482 = vector.shape_cast %481 : vector<16x8xf32> to vector<2x8x8xf32>
    %483 = arith.truncf %466 : vector<2x8x8xf32> to vector<2x8x8xbf16>
    %484 = arith.truncf %474 : vector<2x8x8xf32> to vector<2x8x8xbf16>
    "tpu.trace_start"() <{level = 10 : i32, message = "bqd,bkd->bqk"}> : () -> ()
    %cst_340 = arith.constant dense<0.000000e+00> : vector<2x8x8xf32>
    %485 = tpu.matmul %483, %484, %cst_340 {dimension_numbers = #tpu.dot_dimension_numbers<[2], [2], [1], [1], [0, 0, 0, 1, 1, 1], [0], [0]>} : vector<2x8x8xbf16>, vector<2x8x8xbf16>, vector<2x8x8xf32> -> vector<2x8x8xf32>
    "tpu.trace_stop"() : () -> ()
    %cst_341 = arith.constant 0.353553385 : f32
    %486 = vector.broadcast %cst_341 : f32 to vector<2x8x8xf32>
    %487 = arith.mulf %485, %486 : vector<2x8x8xf32>
    %cst_342 = arith.constant dense<0xFF800000> : vector<2x8xf32>
    %488 = vector.multi_reduction <maximumf>, %487, %cst_342 [2] : vector<2x8x8xf32> to vector<2x8xf32>
    %489 = vector.shape_cast %488 : vector<2x8xf32> to vector<2x8x1xf32>
    %490 = vector.broadcast %489 : vector<2x8x1xf32> to vector<2x8x8xf32>
    %491 = arith.subf %487, %490 : vector<2x8x8xf32>
    %492 = math.exp %491 : vector<2x8x8xf32>
    %cst_343 = arith.constant dense<0.000000e+00> : vector<2x8xf32>
    %493 = vector.multi_reduction <add>, %492, %cst_343 [2] : vector<2x8x8xf32> to vector<2x8xf32>
    %494 = vector.shape_cast %493 : vector<2x8xf32> to vector<2x8x1xf32>
    %495 = tpu.reciprocal %494 {approx = true} : vector<2x8x1xf32> -> vector<2x8x1xf32>
    %496 = vector.broadcast %495 : vector<2x8x1xf32> to vector<2x8x8xf32>
    %497 = arith.mulf %492, %496 : vector<2x8x8xf32>
    %498 = arith.truncf %497 : vector<2x8x8xf32> to vector<2x8x8xbf16>
    %499 = arith.truncf %482 : vector<2x8x8xf32> to vector<2x8x8xbf16>
    "tpu.trace_start"() <{level = 10 : i32, message = "bqk,bkd->bqd"}> : () -> ()
    %cst_344 = arith.constant dense<0.000000e+00> : vector<2x8x8xf32>
    %500 = tpu.matmul %498, %499, %cst_344 {dimension_numbers = #tpu.dot_dimension_numbers<[2], [1], [1], [2], [0, 0, 0, 1, 1, 2], [0], [0]>} : vector<2x8x8xbf16>, vector<2x8x8xbf16>, vector<2x8x8xf32> -> vector<2x8x8xf32>
    "tpu.trace_stop"() : () -> ()
    %501 = vector.shape_cast %500 : vector<2x8x8xf32> to vector<16x8xf32>
    %502 = arith.truncf %501 : vector<16x8xf32> to vector<16x8xbf16>
    %c1_345 = arith.constant 1 : index
    %c3_346 = arith.constant 3 : index
    %c0_347 = arith.constant 0 : index
    %c0_348 = arith.constant 0 : index
    %503 = vector.load %arg10[%c1_345, %c3_346, %c0_347, %c0_348] : memref<2x4x8x32xbf16, #tpu.memory_space<vmem>>, vector<1x1x8x32xbf16>
    %504 = vector.shape_cast %503 : vector<1x1x8x32xbf16> to vector<8x32xbf16>
    %cst_349 = arith.constant dense<0.000000e+00> : vector<16x32xf32>
    %505 = tpu.matmul %502, %504, %cst_349 {dimension_numbers = #tpu.dot_dimension_numbers<[1], [0], [0], [1], [0, 0, 1, 1], [], []>} : vector<16x8xbf16>, vector<8x32xbf16>, vector<16x32xf32> -> vector<16x32xf32>
    %506 = arith.addf %458, %505 : vector<16x32xf32>
    %c1_350 = arith.constant 1 : index
    %c0_351 = arith.constant 0 : index
    %c0_352 = arith.constant 0 : index
    %507 = vector.load %arg11[%c1_350, %c0_351, %c0_352] : memref<2x1x32xf32, #tpu.memory_space<vmem>>, vector<1x1x32xf32>
    %508 = vector.shape_cast %507 : vector<1x1x32xf32> to vector<1x32xf32>
    %509 = vector.broadcast %508 : vector<1x32xf32> to vector<16x32xf32>
    %510 = arith.addf %506, %509 : vector<16x32xf32>
    %511 = arith.addf %510, %312 : vector<16x32xf32>
    %c1_353 = arith.constant 1 : index
    %c0_354 = arith.constant 0 : index
    %c0_355 = arith.constant 0 : index
    %512 = vector.load %arg12[%c1_353, %c0_354, %c0_355] : memref<2x1x32xf32, #tpu.memory_space<vmem>>, vector<1x1x32xf32>
    %513 = vector.shape_cast %512 : vector<1x1x32xf32> to vector<1x32xf32>
    %c1_356 = arith.constant 1 : index
    %c0_357 = arith.constant 0 : index
    %c0_358 = arith.constant 0 : index
    %514 = vector.load %arg13[%c1_356, %c0_357, %c0_358] : memref<2x1x32xf32, #tpu.memory_space<vmem>>, vector<1x1x32xf32>
    %515 = vector.shape_cast %514 : vector<1x1x32xf32> to vector<1x32xf32>
    %cst_359 = arith.constant dense<0.000000e+00> : vector<16xf32>
    %516 = vector.multi_reduction <add>, %511, %cst_359 [1] : vector<16x32xf32> to vector<16xf32>
    %517 = vector.shape_cast %516 : vector<16xf32> to vector<16x1xf32>
    %cst_360 = arith.constant 3.200000e+01 : f32
    %518 = vector.broadcast %cst_360 : f32 to vector<16x1xf32>
    %519 = arith.divf %517, %518 : vector<16x1xf32>
    %520 = vector.broadcast %519 : vector<16x1xf32> to vector<16x32xf32>
    %521 = arith.subf %511, %520 : vector<16x32xf32>
    %522 = arith.mulf %521, %521 : vector<16x32xf32>
    %cst_361 = arith.constant dense<0.000000e+00> : vector<16xf32>
    %523 = vector.multi_reduction <add>, %522, %cst_361 [1] : vector<16x32xf32> to vector<16xf32>
    %524 = vector.shape_cast %523 : vector<16xf32> to vector<16x1xf32>
    %cst_362 = arith.constant 3.200000e+01 : f32
    %525 = vector.broadcast %cst_362 : f32 to vector<16x1xf32>
    %526 = arith.divf %524, %525 : vector<16x1xf32>
    %527 = vector.broadcast %519 : vector<16x1xf32> to vector<16x32xf32>
    %528 = arith.subf %511, %527 : vector<16x32xf32>
    %cst_363 = arith.constant 9.99999996E-13 : f32
    %529 = vector.broadcast %cst_363 : f32 to vector<16x1xf32>
    %530 = arith.addf %526, %529 : vector<16x1xf32>
    %531 = math.rsqrt %530 : vector<16x1xf32>
    %532 = vector.broadcast %531 : vector<16x1xf32> to vector<16x32xf32>
    %533 = arith.mulf %528, %532 : vector<16x32xf32>
    %534 = vector.broadcast %513 : vector<1x32xf32> to vector<16x32xf32>
    %535 = arith.mulf %533, %534 : vector<16x32xf32>
    %536 = vector.broadcast %515 : vector<1x32xf32> to vector<16x32xf32>
    %537 = arith.addf %535, %536 : vector<16x32xf32>
    %538 = arith.truncf %537 : vector<16x32xf32> to vector<16x32xbf16>
    %c1_364 = arith.constant 1 : index
    %c0_365 = arith.constant 0 : index
    %c0_366 = arith.constant 0 : index
    %539 = vector.load %arg14[%c1_364, %c0_365, %c0_366] : memref<2x32x64xbf16, #tpu.memory_space<vmem>>, vector<1x32x64xbf16>
    %540 = vector.shape_cast %539 : vector<1x32x64xbf16> to vector<32x64xbf16>
    %cst_367 = arith.constant dense<0.000000e+00> : vector<16x64xf32>
    %541 = tpu.matmul %538, %540, %cst_367 {dimension_numbers = #tpu.dot_dimension_numbers<[1], [0], [0], [1], [0, 0, 1, 1], [], []>} : vector<16x32xbf16>, vector<32x64xbf16>, vector<16x64xf32> -> vector<16x64xf32>
    %c1_368 = arith.constant 1 : index
    %c0_369 = arith.constant 0 : index
    %c0_370 = arith.constant 0 : index
    %542 = vector.load %arg15[%c1_368, %c0_369, %c0_370] : memref<2x1x64xf32, #tpu.memory_space<vmem>>, vector<1x1x64xf32>
    %543 = vector.shape_cast %542 : vector<1x1x64xf32> to vector<1x64xf32>
    %544 = vector.broadcast %543 : vector<1x64xf32> to vector<16x64xf32>
    %545 = arith.addf %541, %544 : vector<16x64xf32>
    %cst_371 = arith.constant 5.000000e-01 : f32
    %546 = vector.broadcast %cst_371 : f32 to vector<16x64xf32>
    %547 = arith.mulf %546, %545 : vector<16x64xf32>
    %cst_372 = arith.constant 4.471500e-02 : f32
    %548 = vector.broadcast %cst_372 : f32 to vector<16x64xf32>
    %549 = arith.mulf %548, %545 : vector<16x64xf32>
    %550 = arith.mulf %549, %545 : vector<16x64xf32>
    %551 = arith.mulf %550, %545 : vector<16x64xf32>
    %552 = arith.addf %545, %551 : vector<16x64xf32>
    %cst_373 = arith.constant 0.797884583 : f32
    %553 = vector.broadcast %cst_373 : f32 to vector<16x64xf32>
    %554 = arith.mulf %553, %552 : vector<16x64xf32>
    %555 = math.tanh %554 : vector<16x64xf32>
    %cst_374 = arith.constant 1.000000e+00 : f32
    %556 = vector.broadcast %cst_374 : f32 to vector<16x64xf32>
    %557 = arith.addf %556, %555 : vector<16x64xf32>
    %558 = arith.mulf %547, %557 : vector<16x64xf32>
    %559 = arith.truncf %558 : vector<16x64xf32> to vector<16x64xbf16>
    %c1_375 = arith.constant 1 : index
    %c0_376 = arith.constant 0 : index
    %c0_377 = arith.constant 0 : index
    %560 = vector.load %arg16[%c1_375, %c0_376, %c0_377] : memref<2x64x32xbf16, #tpu.memory_space<vmem>>, vector<1x64x32xbf16>
    %561 = vector.shape_cast %560 : vector<1x64x32xbf16> to vector<64x32xbf16>
    %cst_378 = arith.constant dense<0.000000e+00> : vector<16x32xf32>
    %562 = tpu.matmul %559, %561, %cst_378 {dimension_numbers = #tpu.dot_dimension_numbers<[1], [0], [0], [1], [0, 0, 1, 1], [], []>} : vector<16x64xbf16>, vector<64x32xbf16>, vector<16x32xf32> -> vector<16x32xf32>
    %c1_379 = arith.constant 1 : index
    %c0_380 = arith.constant 0 : index
    %c0_381 = arith.constant 0 : index
    %563 = vector.load %arg17[%c1_379, %c0_380, %c0_381] : memref<2x1x32xf32, #tpu.memory_space<vmem>>, vector<1x1x32xf32>
    %564 = vector.shape_cast %563 : vector<1x1x32xf32> to vector<1x32xf32>
    %565 = vector.broadcast %564 : vector<1x32xf32> to vector<16x32xf32>
    %566 = arith.addf %562, %565 : vector<16x32xf32>
    %567 = arith.addf %566, %537 : vector<16x32xf32>
    %c1_382 = arith.constant 1 : index
    %c0_383 = arith.constant 0 : index
    %c0_384 = arith.constant 0 : index
    %568 = vector.load %arg18[%c1_382, %c0_383, %c0_384] : memref<2x1x32xf32, #tpu.memory_space<vmem>>, vector<1x1x32xf32>
    %569 = vector.shape_cast %568 : vector<1x1x32xf32> to vector<1x32xf32>
    %c1_385 = arith.constant 1 : index
    %c0_386 = arith.constant 0 : index
    %c0_387 = arith.constant 0 : index
    %570 = vector.load %arg19[%c1_385, %c0_386, %c0_387] : memref<2x1x32xf32, #tpu.memory_space<vmem>>, vector<1x1x32xf32>
    %571 = vector.shape_cast %570 : vector<1x1x32xf32> to vector<1x32xf32>
    %cst_388 = arith.constant dense<0.000000e+00> : vector<16xf32>
    %572 = vector.multi_reduction <add>, %567, %cst_388 [1] : vector<16x32xf32> to vector<16xf32>
    %573 = vector.shape_cast %572 : vector<16xf32> to vector<16x1xf32>
    %cst_389 = arith.constant 3.200000e+01 : f32
    %574 = vector.broadcast %cst_389 : f32 to vector<16x1xf32>
    %575 = arith.divf %573, %574 : vector<16x1xf32>
    %576 = vector.broadcast %575 : vector<16x1xf32> to vector<16x32xf32>
    %577 = arith.subf %567, %576 : vector<16x32xf32>
    %578 = arith.mulf %577, %577 : vector<16x32xf32>
    %cst_390 = arith.constant dense<0.000000e+00> : vector<16xf32>
    %579 = vector.multi_reduction <add>, %578, %cst_390 [1] : vector<16x32xf32> to vector<16xf32>
    %580 = vector.shape_cast %579 : vector<16xf32> to vector<16x1xf32>
    %cst_391 = arith.constant 3.200000e+01 : f32
    %581 = vector.broadcast %cst_391 : f32 to vector<16x1xf32>
    %582 = arith.divf %580, %581 : vector<16x1xf32>
    %583 = vector.broadcast %575 : vector<16x1xf32> to vector<16x32xf32>
    %584 = arith.subf %567, %583 : vector<16x32xf32>
    %cst_392 = arith.constant 9.99999996E-13 : f32
    %585 = vector.broadcast %cst_392 : f32 to vector<16x1xf32>
    %586 = arith.addf %582, %585 : vector<16x1xf32>
    %587 = math.rsqrt %586 : vector<16x1xf32>
    %588 = vector.broadcast %587 : vector<16x1xf32> to vector<16x32xf32>
    %589 = arith.mulf %584, %588 : vector<16x32xf32>
    %590 = vector.broadcast %569 : vector<1x32xf32> to vector<16x32xf32>
    %591 = arith.mulf %589, %590 : vector<16x32xf32>
    %592 = vector.broadcast %571 : vector<1x32xf32> to vector<16x32xf32>
    %593 = arith.addf %591, %592 : vector<16x32xf32>
    %594 = vector.shape_cast %593 : vector<16x32xf32> to vector<2x8x32xf32>
    %595 = vector.extract_strided_slice %594 {offsets = [0, 0, 0], sizes = [2, 1, 32], strides = [1, 1, 1]} : vector<2x8x32xf32> to vector<2x1x32xf32>
    %596 = vector.shape_cast %595 : vector<2x1x32xf32> to vector<2x32xf32>
    %c0_393 = arith.constant 0 : index
    %c0_394 = arith.constant 0 : index
    %597 = vector.load %arg20[%c0_393, %c0_394] : memref<32x32xf32, #tpu.memory_space<vmem>>, vector<32x32xf32>
    %cst_395 = arith.constant dense<0.000000e+00> : vector<2x32xf32>
    %598 = tpu.matmul %596, %597, %cst_395 {dimension_numbers = #tpu.dot_dimension_numbers<[1], [0], [0], [1], [0, 0, 1, 1], [], []>} : vector<2x32xf32>, vector<32x32xf32>, vector<2x32xf32> -> vector<2x32xf32>
    %c0_396 = arith.constant 0 : index
    %c0_397 = arith.constant 0 : index
    %599 = vector.load %arg21[%c0_396, %c0_397] : memref<1x32xf32, #tpu.memory_space<vmem>>, vector<1x32xf32>
    %600 = vector.broadcast %599 : vector<1x32xf32> to vector<2x32xf32>
    %601 = arith.addf %598, %600 : vector<2x32xf32>
    %602 = math.tanh %601 : vector<2x32xf32>
    %c0_398 = arith.constant 0 : index
    %c0_399 = arith.constant 0 : index
    %603 = vector.load %arg22[%c0_398, %c0_399] : memref<32x2xf32, #tpu.memory_space<vmem>>, vector<32x2xf32>
    %cst_400 = arith.constant dense<0.000000e+00> : vector<2x2xf32>
    %604 = tpu.matmul %602, %603, %cst_400 {dimension_numbers = #tpu.dot_dimension_numbers<[1], [0], [0], [1], [0, 0, 1, 1], [], []>} : vector<2x32xf32>, vector<32x2xf32>, vector<2x2xf32> -> vector<2x2xf32>
    %c0_401 = arith.constant 0 : index
    %c0_402 = arith.constant 0 : index
    %605 = vector.load %arg23[%c0_401, %c0_402] : memref<1x2xf32, #tpu.memory_space<vmem>>, vector<1x2xf32>
    %606 = vector.broadcast %605 : vector<1x2xf32> to vector<2x2xf32>
    %607 = arith.addf %604, %606 : vector<2x2xf32>
    %c0_403 = arith.constant 0 : index
    %c0_404 = arith.constant 0 : index
    %608 = vector.load %arg26[%c0_403, %c0_404] : memref<2x2xf32, #tpu.memory_space<vmem>>, vector<2x2xf32>
    tpu.vector_store %arg26[%c0_403, %c0_404], %607 {strides = array<i32>} : memref<2x2xf32, #tpu.memory_space<vmem>>, vector<2x2xf32>,
    %cst_405 = arith.constant dense<0xFF800000> : vector<2xf32>
    %609 = vector.multi_reduction <maximumf>, %607, %cst_405 [1] : vector<2x2xf32> to vector<2xf32>
    %610 = vector.shape_cast %609 : vector<2xf32> to vector<2x1xf32>
    %611 = vector.broadcast %610 : vector<2x1xf32> to vector<2x2xf32>
    %612 = arith.subf %607, %611 : vector<2x2xf32>
    %613 = math.exp %612 : vector<2x2xf32>
    %cst_406 = arith.constant dense<0.000000e+00> : vector<2xf32>
    %614 = vector.multi_reduction <add>, %613, %cst_406 [1] : vector<2x2xf32> to vector<2xf32>
    %615 = vector.shape_cast %614 : vector<2xf32> to vector<2x1xf32>
    %616 = math.log %615 : vector<2x1xf32>
    %617 = arith.addf %610, %616 : vector<2x1xf32>
    %c0_407 = arith.constant 0 : index
    %c0_408 = arith.constant 0 : index
    %618 = vector.load %arg24[%c0_407, %c0_408] : memref<2x2xf32, #tpu.memory_space<vmem>>, vector<2x2xf32>
    %619 = arith.mulf %607, %618 : vector<2x2xf32>
    %cst_409 = arith.constant dense<0.000000e+00> : vector<2xf32>
    %620 = vector.multi_reduction <add>, %619, %cst_409 [1] : vector<2x2xf32> to vector<2xf32>
    %621 = vector.shape_cast %620 : vector<2xf32> to vector<2x1xf32>
    %622 = arith.subf %617, %621 : vector<2x1xf32>
    %623 = vector.shape_cast %622 : vector<2x1xf32> to vector<1x2x1xf32>
    %cst_410 = arith.constant dense<0.000000e+00> : vector<1xf32>
    %624 = vector.multi_reduction <add>, %623, %cst_410 [1, 2] : vector<1x2x1xf32> to vector<1xf32>
    %625 = vector.shape_cast %624 : vector<1xf32> to vector<1x1x1xf32>
    %626 = vector.extract %625[0, 0, 0] : f32 from vector<1x1x1xf32>
    %cst_411 = arith.constant 2.000000e+00 : f32
    %627 = arith.divf %626, %cst_411 : f32
    %628 = vector.broadcast %627 : f32 to vector<1x1xf32>
    %c0_412 = arith.constant 0 : index
    %c0_413 = arith.constant 0 : index
    %629 = vector.load %arg25[%c0_412, %c0_413] : memref<1x1xf32, #tpu.memory_space<vmem>>, vector<1x1xf32>
    tpu.vector_store %arg25[%c0_412, %c0_413], %628 {strides = array<i32>} : memref<1x1xf32, #tpu.memory_space<vmem>>, vector<1x1xf32>,
    return
  }
}

</mosaic_0001>

<llo_original>
// kernel: bert_forward.1
$region0: #{bert_forward.1}
  #allocation0 [shape = 'u32[]', space=smem, size = 0x4, offset = 0x4, fixed_abs, tag = 'smem constant byte address 0x4 - core index']
  #allocation1 [shape = 'u32[144,128]{1,0:T(1,128)}', space=vmem, size = 0x12000, scoped, tag = 'internal scratch']
  %s0 = inlined_call_operand.vmem [shape: f32[2,8,32], index: 0, kind: input, shape index: {}]
  %s1 = inlined_call_operand.vmem [shape: f32[8,32], index: 1, kind: input, shape index: {}]
  %s2 = inlined_call_operand.vmem [shape: f32[1,32], index: 2, kind: input, shape index: {}]
  %s3 = inlined_call_operand.vmem [shape: f32[1,32], index: 3, kind: input, shape index: {}]
  %s4 = inlined_call_operand.vmem [shape: bf16[2,4,32,8], index: 4, kind: input, shape index: {}]
  %s5 = inlined_call_operand.vmem [shape: f32[2,4,1,8], index: 5, kind: input, shape index: {}]
  %s6 = inlined_call_operand.vmem [shape: bf16[2,4,32,8], index: 6, kind: input, shape index: {}]
  %s7 = inlined_call_operand.vmem [shape: f32[2,4,1,8], index: 7, kind: input, shape index: {}]
  %s8 = inlined_call_operand.vmem [shape: bf16[2,4,32,8], index: 8, kind: input, shape index: {}]
  %s9 = inlined_call_operand.vmem [shape: f32[2,4,1,8], index: 9, kind: input, shape index: {}]
  %s10 = inlined_call_operand.vmem [shape: bf16[2,4,8,32], index: 10, kind: input, shape index: {}]
  %s11 = inlined_call_operand.vmem [shape: f32[2,1,32], index: 11, kind: input, shape index: {}]
  %s12 = inlined_call_operand.vmem [shape: f32[2,1,32], index: 12, kind: input, shape index: {}]
  %s13 = inlined_call_operand.vmem [shape: f32[2,1,32], index: 13, kind: input, shape index: {}]
  %s14 = inlined_call_operand.vmem [shape: bf16[2,32,64], index: 14, kind: input, shape index: {}]
  %s15 = inlined_call_operand.vmem [shape: f32[2,1,64], index: 15, kind: input, shape index: {}]
  %s16 = inlined_call_operand.vmem [shape: bf16[2,64,32], index: 16, kind: input, shape index: {}]
  %s17 = inlined_call_operand.vmem [shape: f32[2,1,32], index: 17, kind: input, shape index: {}]
  %s18 = inlined_call_operand.vmem [shape: f32[2,1,32], index: 18, kind: input, shape index: {}]
  %s19 = inlined_call_operand.vmem [shape: f32[2,1,32], index: 19, kind: input, shape index: {}]
  %s20 = inlined_call_operand.vmem [shape: f32[32,32], index: 20, kind: input, shape index: {}]
  %s21 = inlined_call_operand.vmem [shape: f32[1,32], index: 21, kind: input, shape index: {}]
  %s22 = inlined_call_operand.vmem [shape: f32[32,2], index: 22, kind: input, shape index: {}]
  %s23 = inlined_call_operand.vmem [shape: f32[1,2], index: 23, kind: input, shape index: {}]
  %s24 = inlined_call_operand.vmem [shape: f32[2,2], index: 24, kind: input, shape index: {}]
  %s25 = inlined_call_operand.hbm [shape: f32[1,1], index: 25, kind: output, shape index: {0}]
  %s26 = inlined_call_operand.hbm [shape: f32[2,2], index: 26, kind: output, shape index: {1}]
  %27 = xla_tuple %s25, %s26
  %s28 = sld [smem:[#allocation0]]
  $region118: #{bert_forward.1} parent=0
    _
  %s30 = ssub.s32 1, %s28
  %s31 = scalar_select 0, %s30, %s28
  $region1: #{bert_forward.1} parent=0
    #allocation2 [shape = 'u8[512]{0}', space=vmem, size = 0x400, scoped, tag = 'output window, operand 0, single buffered']
    #allocation3 [shape = 's32[1]{0}', space=sflag, size = 0x4, scoped, tag = 'scoped memory for bert_forward.1']
    #allocation4 [shape = 'u8[1024]{0}', space=vmem, size = 0x400, scoped, tag = 'output window, operand 1, single buffered']
    #allocation5 [shape = 's32[1]{0}', space=sflag, size = 0x4, scoped, tag = 'scoped memory for bert_forward.1']
    %32 = vsyncpa [#allocation3], 0
    %33 = vsyncpa [#allocation5], 0
    // Predicated region
    $region2: #{bert_forward.1} parent=1 // pred_check
      _
    $region3: #{bert_forward.1} parent=1 // pred_check_branch
      %35 = sbr.rel (0) target = $region5
    $region4: #{bert_forward.1} parent=1 // pred_region
      _
    $region5: #{bert_forward.1} parent=1 // pred_fallthru
      _
    // Predicated region
    $region6: #{bert_forward.1} parent=1 // pred_check
      _
    $region7: #{bert_forward.1} parent=1 // pred_check_branch
      %37 = sbr.rel (0) target = $region9
    $region8: #{bert_forward.1} parent=1 // pred_region
      _
    $region9: #{bert_forward.1} parent=1 // pred_fallthru
      _
    // Predicated region
    $region10: #{bert_forward.1} parent=1 // pred_check
      _
    $region11: #{bert_forward.1} parent=1 // pred_check_branch
      %39 = sbr.rel (0) target = $region13
    $region12: #{bert_forward.1} parent=1 // pred_region
      _
    $region13: #{bert_forward.1} parent=1 // pred_fallthru
      _
    // Predicated region
    $region14: #{bert_forward.1} parent=1 // pred_check
      _
    $region15: #{bert_forward.1} parent=1 // pred_check_branch
      %41 = sbr.rel (0) target = $region17
    $region16: #{bert_forward.1} parent=1 // pred_region
      _
    $region17: #{bert_forward.1} parent=1 // pred_fallthru
      _
    // Predicated region
    $region18: #{bert_forward.1} parent=1 // pred_check
      _
    $region19: #{bert_forward.1} parent=1 // pred_check_branch
      %43 = sbr.rel (0) target = $region21
    $region20: #{bert_forward.1} parent=1 // pred_region
      _
    $region21: #{bert_forward.1} parent=1 // pred_fallthru
      _
    // Predicated region
    $region22: #{bert_forward.1} parent=1 // pred_check
      _
    $region23: #{bert_forward.1} parent=1 // pred_check_branch
      %45 = sbr.rel (0) target = $region25
    $region24: #{bert_forward.1} parent=1 // pred_region
      _
    $region25: #{bert_forward.1} parent=1 // pred_fallthru
      _
    // Predicated region
    $region26: #{bert_forward.1} parent=1 // pred_check
      _
    $region27: #{bert_forward.1} parent=1 // pred_check_branch
      %47 = sbr.rel (0) target = $region29
    $region28: #{bert_forward.1} parent=1 // pred_region
      _
    $region29: #{bert_forward.1} parent=1 // pred_fallthru
      _
    // Predicated region
    $region30: #{bert_forward.1} parent=1 // pred_check
      _
    $region31: #{bert_forward.1} parent=1 // pred_check_branch
      %49 = sbr.rel (0) target = $region33
    $region32: #{bert_forward.1} parent=1 // pred_region
      _
    $region33: #{bert_forward.1} parent=1 // pred_fallthru
      _
    // Predicated region
    $region34: #{bert_forward.1} parent=1 // pred_check
      _
    $region35: #{bert_forward.1} parent=1 // pred_check_branch
      %51 = sbr.rel (0) target = $region37
    $region36: #{bert_forward.1} parent=1 // pred_region
      _
    $region37: #{bert_forward.1} parent=1 // pred_fallthru
      _
    // Predicated region
    $region38: #{bert_forward.1} parent=1 // pred_check
      _
    $region39: #{bert_forward.1} parent=1 // pred_check_branch
      %53 = sbr.rel (0) target = $region41
    $region40: #{bert_forward.1} parent=1 // pred_region
      _
    $region41: #{bert_forward.1} parent=1 // pred_fallthru
      _
    // Predicated region
    $region42: #{bert_forward.1} parent=1 // pred_check
      _
    $region43: #{bert_forward.1} parent=1 // pred_check_branch
      %55 = sbr.rel (0) target = $region45
    $region44: #{bert_forward.1} parent=1 // pred_region
      _
    $region45: #{bert_forward.1} parent=1 // pred_fallthru
      _
    // Predicated region
    $region46: #{bert_forward.1} parent=1 // pred_check
      _
    $region47: #{bert_forward.1} parent=1 // pred_check_branch
      %57 = sbr.rel (0) target = $region49
    $region48: #{bert_forward.1} parent=1 // pred_region
      _
    $region49: #{bert_forward.1} parent=1 // pred_fallthru
      _
    // Predicated region
    $region50: #{bert_forward.1} parent=1 // pred_check
      _
    $region51: #{bert_forward.1} parent=1 // pred_check_branch
      %59 = sbr.rel (0) target = $region53
    $region52: #{bert_forward.1} parent=1 // pred_region
      _
    $region53: #{bert_forward.1} parent=1 // pred_fallthru
      _
    // Predicated region
    $region54: #{bert_forward.1} parent=1 // pred_check
      _
    $region55: #{bert_forward.1} parent=1 // pred_check_branch
      %61 = sbr.rel (0) target = $region57
    $region56: #{bert_forward.1} parent=1 // pred_region
      _
    $region57: #{bert_forward.1} parent=1 // pred_fallthru
      _
    // Predicated region
    $region58: #{bert_forward.1} parent=1 // pred_check
      _
    $region59: #{bert_forward.1} parent=1 // pred_check_branch
      %63 = sbr.rel (0) target = $region61
    $region60: #{bert_forward.1} parent=1 // pred_region
      _
    $region61: #{bert_forward.1} parent=1 // pred_fallthru
      _
    // Predicated region
    $region62: #{bert_forward.1} parent=1 // pred_check
      _
    $region63: #{bert_forward.1} parent=1 // pred_check_branch
      %65 = sbr.rel (0) target = $region65
    $region64: #{bert_forward.1} parent=1 // pred_region
      _
    $region65: #{bert_forward.1} parent=1 // pred_fallthru
      _
    // Predicated region
    $region66: #{bert_forward.1} parent=1 // pred_check
      _
    $region67: #{bert_forward.1} parent=1 // pred_check_branch
      %67 = sbr.rel (0) target = $region69
    $region68: #{bert_forward.1} parent=1 // pred_region
      _
    $region69: #{bert_forward.1} parent=1 // pred_fallthru
      _
    // Predicated region
    $region70: #{bert_forward.1} parent=1 // pred_check
      _
    $region71: #{bert_forward.1} parent=1 // pred_check_branch
      %69 = sbr.rel (0) target = $region73
    $region72: #{bert_forward.1} parent=1 // pred_region
      _
    $region73: #{bert_forward.1} parent=1 // pred_fallthru
      _
    // Predicated region
    $region74: #{bert_forward.1} parent=1 // pred_check
      _
    $region75: #{bert_forward.1} parent=1 // pred_check_branch
      %71 = sbr.rel (0) target = $region77
    $region76: #{bert_forward.1} parent=1 // pred_region
      _
    $region77: #{bert_forward.1} parent=1 // pred_fallthru
      _
    // Predicated region
    $region78: #{bert_forward.1} parent=1 // pred_check
      _
    $region79: #{bert_forward.1} parent=1 // pred_check_branch
      %73 = sbr.rel (0) target = $region81
    $region80: #{bert_forward.1} parent=1 // pred_region
      _
    $region81: #{bert_forward.1} parent=1 // pred_fallthru
      _
    // Predicated region
    $region82: #{bert_forward.1} parent=1 // pred_check
      _
    $region83: #{bert_forward.1} parent=1 // pred_check_branch
      %75 = sbr.rel (0) target = $region85
    $region84: #{bert_forward.1} parent=1 // pred_region
      _
    $region85: #{bert_forward.1} parent=1 // pred_fallthru
      _
    // Predicated region
    $region86: #{bert_forward.1} parent=1 // pred_check
      _
    $region87: #{bert_forward.1} parent=1 // pred_check_branch
      %77 = sbr.rel (0) target = $region89
    $region88: #{bert_forward.1} parent=1 // pred_region
      _
    $region89: #{bert_forward.1} parent=1 // pred_fallthru
      _
    // Predicated region
    $region90: #{bert_forward.1} parent=1 // pred_check
      _
    $region91: #{bert_forward.1} parent=1 // pred_check_branch
      %79 = sbr.rel (0) target = $region93
    $region92: #{bert_forward.1} parent=1 // pred_region
      _
    $region93: #{bert_forward.1} parent=1 // pred_fallthru
      _
    // Predicated region
    $region94: #{bert_forward.1} parent=1 // pred_check
      _
    $region95: #{bert_forward.1} parent=1 // pred_check_branch
      %81 = sbr.rel (0) target = $region97
    $region96: #{bert_forward.1} parent=1 // pred_region
      _
    $region97: #{bert_forward.1} parent=1 // pred_fallthru
      _
    // Predicated region
    $region98: #{bert_forward.1} parent=1 // pred_check
      _
    $region99: #{bert_forward.1} parent=1 // pred_check_branch
      %83 = sbr.rel (0) target = $region101
    $region100: #{bert_forward.1} parent=1 // pred_region
      _
    $region101: #{bert_forward.1} parent=1 // pred_fallthru
      _
    %v85 = vld [vmem:[%s0] sm:$0xff]
    %v86 = vld [vmem:[%s0 + $0x8] sm:$0xff]
    %v87 = vld [vmem:[%s1] sm:$0xff]
    %v88 = vadd.f32 %v85, %v87
    %v89 = vadd.f32 %v86, %v87
    %v90 = vld [vmem:[%s2] sm:$0x1]
    %v91 = vld [vmem:[%s3] sm:$0x1]
    %vm92 = vcmask 261120
    %v93 = vsel %vm92, %v88, 0.0
    %94 = vadd.xlane.f32.xlu0 %v93
    %v95 = vpop.xlane.xlu0 %94
    %v96 = vsel %vm92, %v89, 0.0
    %97 = vadd.xlane.f32.xlu0 %v96
    %v98 = vpop.xlane.xlu0 %97
    %v99 = vrcp.pop 32.0
    %v100 = vmul.f32 %v95, %v99
    %v101 = vmul.f32 %v98, %v99
    %v102 = vsub.f32 %v88, %v100
    %v103 = vsub.f32 %v89, %v101
    %v104 = vmul.f32 %v102, %v102
    %v105 = vmul.f32 %v103, %v103
    %v106 = vsel %vm92, %v104, 0.0
    %107 = vadd.xlane.f32.xlu0 %v106
    %v108 = vpop.xlane.xlu0 %107
    %v109 = vsel %vm92, %v105, 0.0
    %110 = vadd.xlane.f32.xlu0 %v109
    %v111 = vpop.xlane.xlu0 %110
    %v112 = vmul.f32 %v108, %v99
    %v113 = vmul.f32 %v111, %v99
    %v114 = vadd.f32 %v112, 1e-12
    %v115 = vadd.f32 %v113, 1e-12
    %v116 = vrsqrt.pop %v114
    %v117 = vrsqrt.pop %v115
    %v118 = vmul.f32 %v102, %v116
    %v119 = vmul.f32 %v103, %v117
    %v121 = vlaneseq
    %v122 = vshrl.u32 %v121, 7
    %v123 = vsub.s32 0, %v122
    %v124 = vrot.slane %v90, %v123
    %v126 = vmul.f32 %v118, %v124
    %v127 = vmul.f32 %v119, %v124
    %v129 = vlaneseq
    %v130 = vshrl.u32 %v129, 7
    %v131 = vsub.s32 0, %v130
    %v132 = vrot.slane %v91, %v131
    %v134 = vadd.f32 %v126, %v132
    %v135 = vadd.f32 %v127, %v132
    %v136 = vpack.c.bf16 %v135, %v134
    %v137 = vld [vmem:[%s4] sm:$0xf]
    %v138 = vld [vmem:[%s4 + $0x4] sm:$0xf]
    %v139 = vld [vmem:[%s4 + $0x8] sm:$0xf]
    %v140 = vld [vmem:[%s4 + $0xc] sm:$0xf]
    %v141 = vld [vmem:[%s5] sm:$0x1]
    %v143 = vlaneseq
    %v144 = vshrl.u32 %v143, 7
    %v145 = vsub.s32 0, %v144
    %v146 = vrot.slane %v141, %v145
    %v152 = vunpack.c.l.b16 %v137
    %v153 = vunpack.c.l.b16 %v138
    %v154 = vunpack.c.l.b16 %v139
    %v155 = vunpack.c.l.b16 %v140
    %v156 = vpack.c.b16 %v153, %v152
    %v157 = vpack.c.b16 %v155, %v154
    %v161 = vsel %vm92, %v136, 0
    %163 = vmatprep.subr.bf16.mxu0 0
    %164 = vmatpush1.bf16.msra.mxu0 %v156
    %165 = vmatprep.subr.bf16.mxu0 0
    %166 = vmatpush1.bf16.msra.mxu0 %v157
    %167 = vmatprep.subr.bf16.mxu0 0
    %168 = vmatpush1.bf16.msra.mxu0 0
    %169 = vmatprep.subr.bf16.mxu0 0
    %170 = vmatpush1.bf16.msra.mxu0 0
    %171 = vmatprep.subr.bf16.mxu0 0
    %172 = vmatpush1.bf16.msra.mxu0 0
    %173 = vmatprep.subr.bf16.mxu0 0
    %174 = vmatpush1.bf16.msra.mxu0 0
    %175 = vmatprep.subr.bf16.mxu0 0
    %176 = vmatpush1.bf16.msra.mxu0 0
    %177 = vmatprep.subr.bf16.mxu0 0
    %178 = vmatpush1.bf16.msra.mxu0 0
    %179 = vmatprep.subr.bf16.mxu0 0
    %180 = vmatpush1.bf16.msra.mxu0 0
    %181 = vmatprep.subr.bf16.mxu0 0
    %182 = vmatpush1.bf16.msra.mxu0 0
    %183 = vmatprep.subr.bf16.mxu0 0
    %184 = vmatpush1.bf16.msra.mxu0 0
    %185 = vmatprep.subr.bf16.mxu0 0
    %186 = vmatpush1.bf16.msra.mxu0 0
    %187 = vmatprep.subr.bf16.mxu0 0
    %188 = vmatpush1.bf16.msra.mxu0 0
    %189 = vmatprep.subr.bf16.mxu0 0
    %190 = vmatpush1.bf16.msra.mxu0 0
    %191 = vmatprep.subr.bf16.mxu0 0
    %192 = vmatpush1.bf16.msra.mxu0 0
    %193 = vmatprep.subr.bf16.mxu0 0
    %194 = vmatpush1.bf16.msra.mxu0 0
    %195 = vmatprep.mubr.bf16.mxu0 0
    %196 = vmatmul.mubr.bf16.gmra.mrb[0].mxu0 %v161
    %v197 = vpop.f32.mrb[0].mxu0
    %v198 = vadd.f32 %v146, %v197
    %v199 = vpop.f32.mrb[0].mxu0
    %v200 = vpop.f32.mrb[0].mxu0
    %v201 = vadd.f32 %v146, %v200
    %v202 = vpop.f32.mrb[0].mxu0
    %203 = vdwg.mxu0
    %v204 = vld [vmem:[%s6] sm:$0xf]
    %v205 = vld [vmem:[%s6 + $0x4] sm:$0xf]
    %v206 = vld [vmem:[%s6 + $0x8] sm:$0xf]
    %v207 = vld [vmem:[%s6 + $0xc] sm:$0xf]
    %v208 = vld [vmem:[%s7] sm:$0x1]
    %v210 = vlaneseq
    %v211 = vshrl.u32 %v210, 7
    %v212 = vsub.s32 0, %v211
    %v213 = vrot.slane %v208, %v212
    %v219 = vunpack.c.l.b16 %v204
    %v220 = vunpack.c.l.b16 %v205
    %v221 = vunpack.c.l.b16 %v206
    %v222 = vunpack.c.l.b16 %v207
    %v223 = vpack.c.b16 %v220, %v219
    %v224 = vpack.c.b16 %v222, %v221
    %227 = vmatprep.subr.bf16.mxu0 0
    %228 = vmatpush1.bf16.msra.mxu0 %v223
    %229 = vmatprep.subr.bf16.mxu0 0
    %230 = vmatpush1.bf16.msra.mxu0 %v224
    %231 = vmatprep.subr.bf16.mxu0 0
    %232 = vmatpush1.bf16.msra.mxu0 0
    %233 = vmatprep.subr.bf16.mxu0 0
    %234 = vmatpush1.bf16.msra.mxu0 0
    %235 = vmatprep.subr.bf16.mxu0 0
    %236 = vmatpush1.bf16.msra.mxu0 0
    %237 = vmatprep.subr.bf16.mxu0 0
    %238 = vmatpush1.bf16.msra.mxu0 0
    %239 = vmatprep.subr.bf16.mxu0 0
    %240 = vmatpush1.bf16.msra.mxu0 0
    %241 = vmatprep.subr.bf16.mxu0 0
    %242 = vmatpush1.bf16.msra.mxu0 0
    %243 = vmatprep.subr.bf16.mxu0 0
    %244 = vmatpush1.bf16.msra.mxu0 0
    %245 = vmatprep.subr.bf16.mxu0 0
    %246 = vmatpush1.bf16.msra.mxu0 0
    %247 = vmatprep.subr.bf16.mxu0 0
    %248 = vmatpush1.bf16.msra.mxu0 0
    %249 = vmatprep.subr.bf16.mxu0 0
    %250 = vmatpush1.bf16.msra.mxu0 0
    %251 = vmatprep.subr.bf16.mxu0 0
    %252 = vmatpush1.bf16.msra.mxu0 0
    %253 = vmatprep.subr.bf16.mxu0 0
    %254 = vmatpush1.bf16.msra.mxu0 0
    %255 = vmatprep.subr.bf16.mxu0 0
    %256 = vmatpush1.bf16.msra.mxu0 0
    %257 = vmatprep.subr.bf16.mxu0 0
    %258 = vmatpush1.bf16.msra.mxu0 0
    %259 = vmatprep.mubr.bf16.mxu0 0
    %260 = vmatmul.mubr.bf16.gmra.mrb[0].mxu0 %v161
    %v261 = vpop.f32.mrb[0].mxu0
    %v262 = vadd.f32 %v213, %v261
    %v263 = vpop.f32.mrb[0].mxu0
    %v264 = vpop.f32.mrb[0].mxu0
    %v265 = vadd.f32 %v213, %v264
    %v266 = vpop.f32.mrb[0].mxu0
    %267 = vdwg.mxu0
    %v268 = vld [vmem:[%s8] sm:$0xf]
    %v269 = vld [vmem:[%s8 + $0x4] sm:$0xf]
    %v270 = vld [vmem:[%s8 + $0x8] sm:$0xf]
    %v271 = vld [vmem:[%s8 + $0xc] sm:$0xf]
    %v272 = vld [vmem:[%s9] sm:$0x1]
    %v274 = vlaneseq
    %v275 = vshrl.u32 %v274, 7
    %v276 = vsub.s32 0, %v275
    %v277 = vrot.slane %v272, %v276
    %v283 = vunpack.c.l.b16 %v268
    %v284 = vunpack.c.l.b16 %v269
    %v285 = vunpack.c.l.b16 %v270
    %v286 = vunpack.c.l.b16 %v271
    %v287 = vpack.c.b16 %v284, %v283
    %v288 = vpack.c.b16 %v286, %v285
    %291 = vmatprep.subr.bf16.mxu0 0
    %292 = vmatpush1.bf16.msra.mxu0 %v287
    %293 = vmatprep.subr.bf16.mxu0 0
    %294 = vmatpush1.bf16.msra.mxu0 %v288
    %295 = vmatprep.subr.bf16.mxu0 0
    %296 = vmatpush1.bf16.msra.mxu0 0
    %297 = vmatprep.subr.bf16.mxu0 0
    %298 = vmatpush1.bf16.msra.mxu0 0
    %299 = vmatprep.subr.bf16.mxu0 0
    %300 = vmatpush1.bf16.msra.mxu0 0
    %301 = vmatprep.subr.bf16.mxu0 0
    %302 = vmatpush1.bf16.msra.mxu0 0
    %303 = vmatprep.subr.bf16.mxu0 0
    %304 = vmatpush1.bf16.msra.mxu0 0
    %305 = vmatprep.subr.bf16.mxu0 0
    %306 = vmatpush1.bf16.msra.mxu0 0
    %307 = vmatprep.subr.bf16.mxu0 0
    %308 = vmatpush1.bf16.msra.mxu0 0
    %309 = vmatprep.subr.bf16.mxu0 0
    %310 = vmatpush1.bf16.msra.mxu0 0
    %311 = vmatprep.subr.bf16.mxu0 0
    %312 = vmatpush1.bf16.msra.mxu0 0
    %313 = vmatprep.subr.bf16.mxu0 0
    %314 = vmatpush1.bf16.msra.mxu0 0
    %315 = vmatprep.subr.bf16.mxu0 0
    %316 = vmatpush1.bf16.msra.mxu0 0
    %317 = vmatprep.subr.bf16.mxu0 0
    %318 = vmatpush1.bf16.msra.mxu0 0
    %319 = vmatprep.subr.bf16.mxu0 0
    %320 = vmatpush1.bf16.msra.mxu0 0
    %321 = vmatprep.subr.bf16.mxu0 0
    %322 = vmatpush1.bf16.msra.mxu0 0
    %323 = vmatprep.mubr.bf16.mxu0 0
    %324 = vmatmul.mubr.bf16.gmra.mrb[0].mxu0 %v161
    %v325 = vpop.f32.mrb[0].mxu0
    %v326 = vadd.f32 %v277, %v325
    %v327 = vpop.f32.mrb[0].mxu0
    %v328 = vpop.f32.mrb[0].mxu0
    %v329 = vadd.f32 %v277, %v328
    %v330 = vpop.f32.mrb[0].mxu0
    %331 = vdwg.mxu0
    %v332 = vpack.c.bf16 %v198, %v198
    %v333 = vpack.c.bf16 %v201, %v201
    %v334 = vpack.c.bf16 %v262, %v262
    %v335 = vpack.c.bf16 %v265, %v265
    %vm336 = vcmask 64512
    %v338 = vsel %vm336, %v332, 0
    %v341 = vsel %vm336, %v334, 0
    %343 = vmatprep.subr.bf16.mxu0 0
    %344 = vmatpush1.bf16.xpose.msra.mxu0 %v341
    %345 = vmatprep.subr.bf16.mxu0 0
    %346 = vmatpush1.bf16.xpose.msra.mxu0 0
    %347 = vmatprep.subr.bf16.mxu0 0
    %348 = vmatpush1.bf16.xpose.msra.mxu0 0
    %349 = vmatprep.subr.bf16.mxu0 0
    %350 = vmatpush1.bf16.xpose.msra.mxu0 0
    %351 = vmatprep.subr.bf16.mxu0 0
    %352 = vmatpush1.bf16.xpose.msra.mxu0 0
    %353 = vmatprep.subr.bf16.mxu0 0
    %354 = vmatpush1.bf16.xpose.msra.mxu0 0
    %355 = vmatprep.subr.bf16.mxu0 0
    %356 = vmatpush1.bf16.xpose.msra.mxu0 0
    %357 = vmatprep.subr.bf16.mxu0 0
    %358 = vmatpush1.bf16.xpose.msra.mxu0 0
    %359 = vmatprep.subr.bf16.mxu0 0
    %360 = vmatpush1.bf16.xpose.msra.mxu0 0
    %361 = vmatprep.subr.bf16.mxu0 0
    %362 = vmatpush1.bf16.xpose.msra.mxu0 0
    %363 = vmatprep.subr.bf16.mxu0 0
    %364 = vmatpush1.bf16.xpose.msra.mxu0 0
    %365 = vmatprep.subr.bf16.mxu0 0
    %366 = vmatpush1.bf16.xpose.msra.mxu0 0
    %367 = vmatprep.subr.bf16.mxu0 0
    %368 = vmatpush1.bf16.xpose.msra.mxu0 0
    %369 = vmatprep.subr.bf16.mxu0 0
    %370 = vmatpush1.bf16.xpose.msra.mxu0 0
    %371 = vmatprep.subr.bf16.mxu0 0
    %372 = vmatpush1.bf16.xpose.msra.mxu0 0
    %373 = vmatprep.subr.bf16.mxu0 0
    %374 = vmatpush1.bf16.xpose.msra.mxu0 0
    %375 = vmatprep.mubr.bf16.mxu0 0
    %376 = vmatmul.mubr.bf16.gmra.mrb[0].mxu0 %v338
    %v377 = vpop.f32.mrb[0].mxu0
    %v378 = vadd.f32 0.0, %v377
    %v379 = vpop.f32.mrb[0].mxu0
    %v380 = vpop.f32.mrb[0].mxu0
    %v381 = vpop.f32.mrb[0].mxu0
    %382 = vdwg.mxu0
    %v384 = vsel %vm336, %v333, 0
    %v387 = vsel %vm336, %v335, 0
    %389 = vmatprep.subr.bf16.mxu0 0
    %390 = vmatpush1.bf16.xpose.msra.mxu0 %v387
    %391 = vmatprep.subr.bf16.mxu0 0
    %392 = vmatpush1.bf16.xpose.msra.mxu0 0
    %393 = vmatprep.subr.bf16.mxu0 0
    %394 = vmatpush1.bf16.xpose.msra.mxu0 0
    %395 = vmatprep.subr.bf16.mxu0 0
    %396 = vmatpush1.bf16.xpose.msra.mxu0 0
    %397 = vmatprep.subr.bf16.mxu0 0
    %398 = vmatpush1.bf16.xpose.msra.mxu0 0
    %399 = vmatprep.subr.bf16.mxu0 0
    %400 = vmatpush1.bf16.xpose.msra.mxu0 0
    %401 = vmatprep.subr.bf16.mxu0 0
    %402 = vmatpush1.bf16.xpose.msra.mxu0 0
    %403 = vmatprep.subr.bf16.mxu0 0
    %404 = vmatpush1.bf16.xpose.msra.mxu0 0
    %405 = vmatprep.subr.bf16.mxu0 0
    %406 = vmatpush1.bf16.xpose.msra.mxu0 0
    %407 = vmatprep.subr.bf16.mxu0 0
    %408 = vmatpush1.bf16.xpose.msra.mxu0 0
    %409 = vmatprep.subr.bf16.mxu0 0
    %410 = vmatpush1.bf16.xpose.msra.mxu0 0
    %411 = vmatprep.subr.bf16.mxu0 0
    %412 = vmatpush1.bf16.xpose.msra.mxu0 0
    %413 = vmatprep.subr.bf16.mxu0 0
    %414 = vmatpush1.bf16.xpose.msra.mxu0 0
    %415 = vmatprep.subr.bf16.mxu0 0
    %416 = vmatpush1.bf16.xpose.msra.mxu0 0
    %417 = vmatprep.subr.bf16.mxu0 0
    %418 = vmatpush1.bf16.xpose.msra.mxu0 0
    %419 = vmatprep.subr.bf16.mxu0 0
    %420 = vmatpush1.bf16.xpose.msra.mxu0 0
    %421 = vmatprep.mubr.bf16.mxu0 0
    %422 = vmatmul.mubr.bf16.gmra.mrb[0].mxu0 %v384
    %v423 = vpop.f32.mrb[0].mxu0
    %v424 = vadd.f32 0.0, %v423
    %v425 = vpop.f32.mrb[0].mxu0
    %v426 = vpop.f32.mrb[0].mxu0
    %v427 = vpop.f32.mrb[0].mxu0
    %428 = vdwg.mxu0
    %v429 = vmul.f32 %v378, 0.35355338
    %v430 = vmul.f32 %v424, 0.35355338
    %v431 = vsel %vm336, %v429, -inf
    %432 = vmax.xlane.f32.xlu0 %v431
    %v433 = vpop.xlane.xlu0 %432
    %v434 = vsel %vm336, %v430, -inf
    %435 = vmax.xlane.f32.xlu0 %v434
    %v436 = vpop.xlane.xlu0 %435
    %v437 = vsub.f32 %v429, %v433
    %v438 = vsub.f32 %v430, %v436
    %v439 = vmul.f32 %v437, 1.442695
    %v440 = vpow.pop %v439
    %v441 = vmul.f32 %v438, 1.442695
    %v442 = vpow.pop %v441
    %v443 = vsel %vm336, %v440, 0.0
    %444 = vadd.xlane.f32.xlu0 %v443
    %v445 = vpop.xlane.xlu0 %444
    %v446 = vsel %vm336, %v442, 0.0
    %447 = vadd.xlane.f32.xlu0 %v446
    %v448 = vpop.xlane.xlu0 %447
    %v449 = vrcp.pop %v445
    %v450 = vrcp.pop %v448
    %v451 = vmul.f32 %v440, %v449
    %v452 = vmul.f32 %v442, %v450
    %v453 = vpack.c.bf16 %v451, %v451
    %v454 = vpack.c.bf16 %v452, %v452
    %v455 = vpack.c.bf16 %v326, %v326
    %v456 = vpack.c.bf16 %v329, %v329
    %v458 = vsel %vm336, %v453, 0
    %vm460 = vcmask 1043456
    %v462 = vsel %vm460, %v455, 0
    %464 = vmatprep.subr.bf16.mxu0 0
    %465 = vmatpush1.bf16.msra.mxu0 %v462
    %466 = vmatprep.subr.bf16.mxu0 0
    %467 = vmatpush1.bf16.msra.mxu0 0
    %468 = vmatprep.subr.bf16.mxu0 0
    %469 = vmatpush1.bf16.msra.mxu0 0
    %470 = vmatprep.subr.bf16.mxu0 0
    %471 = vmatpush1.bf16.msra.mxu0 0
    %472 = vmatprep.subr.bf16.mxu0 0
    %473 = vmatpush1.bf16.msra.mxu0 0
    %474 = vmatprep.subr.bf16.mxu0 0
    %475 = vmatpush1.bf16.msra.mxu0 0
    %476 = vmatprep.subr.bf16.mxu0 0
    %477 = vmatpush1.bf16.msra.mxu0 0
    %478 = vmatprep.subr.bf16.mxu0 0
    %479 = vmatpush1.bf16.msra.mxu0 0
    %480 = vmatprep.subr.bf16.mxu0 0
    %481 = vmatpush1.bf16.msra.mxu0 0
    %482 = vmatprep.subr.bf16.mxu0 0
    %483 = vmatpush1.bf16.msra.mxu0 0
    %484 = vmatprep.subr.bf16.mxu0 0
    %485 = vmatpush1.bf16.msra.mxu0 0
    %486 = vmatprep.subr.bf16.mxu0 0
    %487 = vmatpush1.bf16.msra.mxu0 0
    %488 = vmatprep.subr.bf16.mxu0 0
    %489 = vmatpush1.bf16.msra.mxu0 0
    %490 = vmatprep.subr.bf16.mxu0 0
    %491 = vmatpush1.bf16.msra.mxu0 0
    %492 = vmatprep.subr.bf16.mxu0 0
    %493 = vmatpush1.bf16.msra.mxu0 0
    %494 = vmatprep.subr.bf16.mxu0 0
    %495 = vmatpush1.bf16.msra.mxu0 0
    %496 = vmatprep.mubr.bf16.mxu0 0
    %497 = vmatmul.mubr.bf16.gmra.mrb[0].mxu0 %v458
    %v498 = vpop.f32.mrb[0].mxu0
    %v499 = vadd.f32 0.0, %v498
    %v500 = vpop.f32.mrb[0].mxu0
    %v501 = vpop.f32.mrb[0].mxu0
    %v502 = vpop.f32.mrb[0].mxu0
    %503 = vdwg.mxu0
    %v505 = vsel %vm336, %v454, 0
    %v508 = vsel %vm460, %v456, 0
    %510 = vmatprep.subr.bf16.mxu0 0
    %511 = vmatpush1.bf16.msra.mxu0 %v508
    %512 = vmatprep.subr.bf16.mxu0 0
    %513 = vmatpush1.bf16.msra.mxu0 0
    %514 = vmatprep.subr.bf16.mxu0 0
    %515 = vmatpush1.bf16.msra.mxu0 0
    %516 = vmatprep.subr.bf16.mxu0 0
    %517 = vmatpush1.bf16.msra.mxu0 0
    %518 = vmatprep.subr.bf16.mxu0 0
    %519 = vmatpush1.bf16.msra.mxu0 0
    %520 = vmatprep.subr.bf16.mxu0 0
    %521 = vmatpush1.bf16.msra.mxu0 0
    %522 = vmatprep.subr.bf16.mxu0 0
    %523 = vmatpush1.bf16.msra.mxu0 0
    %524 = vmatprep.subr.bf16.mxu0 0
    %525 = vmatpush1.bf16.msra.mxu0 0
    %526 = vmatprep.subr.bf16.mxu0 0
    %527 = vmatpush1.bf16.msra.mxu0 0
    %528 = vmatprep.subr.bf16.mxu0 0
    %529 = vmatpush1.bf16.msra.mxu0 0
    %530 = vmatprep.subr.bf16.mxu0 0
    %531 = vmatpush1.bf16.msra.mxu0 0
    %532 = vmatprep.subr.bf16.mxu0 0
    %533 = vmatpush1.bf16.msra.mxu0 0
    %534 = vmatprep.subr.bf16.mxu0 0
    %535 = vmatpush1.bf16.msra.mxu0 0
    %536 = vmatprep.subr.bf16.mxu0 0
    %537 = vmatpush1.bf16.msra.mxu0 0
    %538 = vmatprep.subr.bf16.mxu0 0
    %539 = vmatpush1.bf16.msra.mxu0 0
    %540 = vmatprep.subr.bf16.mxu0 0
    %541 = vmatpush1.bf16.msra.mxu0 0
    %542 = vmatprep.mubr.bf16.mxu0 0
    %543 = vmatmul.mubr.bf16.gmra.mrb[0].mxu0 %v505
    %v544 = vpop.f32.mrb[0].mxu0
    %v545 = vadd.f32 0.0, %v544
    %v546 = vpop.f32.mrb[0].mxu0
    %v547 = vpop.f32.mrb[0].mxu0
    %v548 = vpop.f32.mrb[0].mxu0
    %549 = vdwg.mxu0
    %v550 = vpack.c.bf16 %v545, %v499
    %v551 = vld [vmem:[%s10] sm:$0xf]
    %s552 = scalar_lea.vmem %s4, 16
    %v553 = vld [vmem:[%s552] sm:$0xf]
    %v554 = vld [vmem:[%s552 + $0x4] sm:$0xf]
    %v555 = vld [vmem:[%s552 + $0x8] sm:$0xf]
    %v556 = vld [vmem:[%s552 + $0xc] sm:$0xf]
    %s557 = scalar_lea.vmem %s5, 1
    %v558 = vld [vmem:[%s557] sm:$0x1]
    %v560 = vlaneseq
    %v561 = vshrl.u32 %v560, 7
    %v562 = vsub.s32 0, %v561
    %v563 = vrot.slane %v558, %v562
    %v569 = vunpack.c.l.b16 %v553
    %v570 = vunpack.c.l.b16 %v554
    %v571 = vunpack.c.l.b16 %v555
    %v572 = vunpack.c.l.b16 %v556
    %v573 = vpack.c.b16 %v570, %v569
    %v574 = vpack.c.b16 %v572, %v571
    %577 = vmatprep.subr.bf16.mxu0 0
    %578 = vmatpush1.bf16.msra.mxu0 %v573
    %579 = vmatprep.subr.bf16.mxu0 0
    %580 = vmatpush1.bf16.msra.mxu0 %v574
    %581 = vmatprep.subr.bf16.mxu0 0
    %582 = vmatpush1.bf16.msra.mxu0 0
    %583 = vmatprep.subr.bf16.mxu0 0
    %584 = vmatpush1.bf16.msra.mxu0 0
    %585 = vmatprep.subr.bf16.mxu0 0
    %586 = vmatpush1.bf16.msra.mxu0 0
    %587 = vmatprep.subr.bf16.mxu0 0
    %588 = vmatpush1.bf16.msra.mxu0 0
    %589 = vmatprep.subr.bf16.mxu0 0
    %590 = vmatpush1.bf16.msra.mxu0 0
    %591 = vmatprep.subr.bf16.mxu0 0
    %592 = vmatpush1.bf16.msra.mxu0 0
    %593 = vmatprep.subr.bf16.mxu0 0
    %594 = vmatpush1.bf16.msra.mxu0 0
    %595 = vmatprep.subr.bf16.mxu0 0
    %596 = vmatpush1.bf16.msra.mxu0 0
    %597 = vmatprep.subr.bf16.mxu0 0
    %598 = vmatpush1.bf16.msra.mxu0 0
    %599 = vmatprep.subr.bf16.mxu0 0
    %600 = vmatpush1.bf16.msra.mxu0 0
    %601 = vmatprep.subr.bf16.mxu0 0
    %602 = vmatpush1.bf16.msra.mxu0 0
    %603 = vmatprep.subr.bf16.mxu0 0
    %604 = vmatpush1.bf16.msra.mxu0 0
    %605 = vmatprep.subr.bf16.mxu0 0
    %606 = vmatpush1.bf16.msra.mxu0 0
    %607 = vmatprep.subr.bf16.mxu0 0
    %608 = vmatpush1.bf16.msra.mxu0 0
    %609 = vmatprep.mubr.bf16.mxu0 0
    %610 = vmatmul.mubr.bf16.gmra.mrb[0].mxu0 %v161
    %v611 = vpop.f32.mrb[0].mxu0
    %v612 = vadd.f32 %v563, %v611
    %v613 = vpop.f32.mrb[0].mxu0
    %v614 = vpop.f32.mrb[0].mxu0
    %v615 = vadd.f32 %v563, %v614
    %v616 = vpop.f32.mrb[0].mxu0
    %617 = vdwg.mxu0
    %s618 = scalar_lea.vmem %s6, 16
    %v619 = vld [vmem:[%s618] sm:$0xf]
    %v620 = vld [vmem:[%s618 + $0x4] sm:$0xf]
    %v621 = vld [vmem:[%s618 + $0x8] sm:$0xf]
    %v622 = vld [vmem:[%s618 + $0xc] sm:$0xf]
    %s623 = scalar_lea.vmem %s7, 1
    %v624 = vld [vmem:[%s623] sm:$0x1]
    %v626 = vlaneseq
    %v627 = vshrl.u32 %v626, 7
    %v628 = vsub.s32 0, %v627
    %v629 = vrot.slane %v624, %v628
    %v635 = vunpack.c.l.b16 %v619
    %v636 = vunpack.c.l.b16 %v620
    %v637 = vunpack.c.l.b16 %v621
    %v638 = vunpack.c.l.b16 %v622
    %v639 = vpack.c.b16 %v636, %v635
    %v640 = vpack.c.b16 %v638, %v637
    %643 = vmatprep.subr.bf16.mxu0 0
    %644 = vmatpush1.bf16.msra.mxu0 %v639
    %645 = vmatprep.subr.bf16.mxu0 0
    %646 = vmatpush1.bf16.msra.mxu0 %v640
    %647 = vmatprep.subr.bf16.mxu0 0
    %648 = vmatpush1.bf16.msra.mxu0 0
    %649 = vmatprep.subr.bf16.mxu0 0
    %650 = vmatpush1.bf16.msra.mxu0 0
    %651 = vmatprep.subr.bf16.mxu0 0
    %652 = vmatpush1.bf16.msra.mxu0 0
    %653 = vmatprep.subr.bf16.mxu0 0
    %654 = vmatpush1.bf16.msra.mxu0 0
    %655 = vmatprep.subr.bf16.mxu0 0
    %656 = vmatpush1.bf16.msra.mxu0 0
    %657 = vmatprep.subr.bf16.mxu0 0
    %658 = vmatpush1.bf16.msra.mxu0 0
    %659 = vmatprep.subr.bf16.mxu0 0
    %660 = vmatpush1.bf16.msra.mxu0 0
    %661 = vmatprep.subr.bf16.mxu0 0
    %662 = vmatpush1.bf16.msra.mxu0 0
    %663 = vmatprep.subr.bf16.mxu0 0
    %664 = vmatpush1.bf16.msra.mxu0 0
    %665 = vmatprep.subr.bf16.mxu0 0
    %666 = vmatpush1.bf16.msra.mxu0 0
    %667 = vmatprep.subr.bf16.mxu0 0
    %668 = vmatpush1.bf16.msra.mxu0 0
    %669 = vmatprep.subr.bf16.mxu0 0
    %670 = vmatpush1.bf16.msra.mxu0 0
    %671 = vmatprep.subr.bf16.mxu0 0
    %672 = vmatpush1.bf16.msra.mxu0 0
    %673 = vmatprep.subr.bf16.mxu0 0
    %674 = vmatpush1.bf16.msra.mxu0 0
    %675 = vmatprep.mubr.bf16.mxu0 0
    %676 = vmatmul.mubr.bf16.gmra.mrb[0].mxu0 %v161
    %v677 = vpop.f32.mrb[0].mxu0
    %v678 = vadd.f32 %v629, %v677
    %v679 = vpop.f32.mrb[0].mxu0
    %v680 = vpop.f32.mrb[0].mxu0
    %v681 = vadd.f32 %v629, %v680
    %v682 = vpop.f32.mrb[0].mxu0
    %683 = vdwg.mxu0
    %s684 = scalar_lea.vmem %s8, 16
    %v685 = vld [vmem:[%s684] sm:$0xf]
    %v686 = vld [vmem:[%s684 + $0x4] sm:$0xf]
    %v687 = vld [vmem:[%s684 + $0x8] sm:$0xf]
    %v688 = vld [vmem:[%s684 + $0xc] sm:$0xf]
    %s689 = scalar_lea.vmem %s9, 1
    %v690 = vld [vmem:[%s689] sm:$0x1]
    %v692 = vlaneseq
    %v693 = vshrl.u32 %v692, 7
    %v694 = vsub.s32 0, %v693
    %v695 = vrot.slane %v690, %v694
    %v701 = vunpack.c.l.b16 %v685
    %v702 = vunpack.c.l.b16 %v686
    %v703 = vunpack.c.l.b16 %v687
    %v704 = vunpack.c.l.b16 %v688
    %v705 = vpack.c.b16 %v702, %v701
    %v706 = vpack.c.b16 %v704, %v703
    %709 = vmatprep.subr.bf16.mxu0 0
    %710 = vmatpush1.bf16.msra.mxu0 %v705
    %711 = vmatprep.subr.bf16.mxu0 0
    %712 = vmatpush1.bf16.msra.mxu0 %v706
    %713 = vmatprep.subr.bf16.mxu0 0
    %714 = vmatpush1.bf16.msra.mxu0 0
    %715 = vmatprep.subr.bf16.mxu0 0
    %716 = vmatpush1.bf16.msra.mxu0 0
    %717 = vmatprep.subr.bf16.mxu0 0
    %718 = vmatpush1.bf16.msra.mxu0 0
    %719 = vmatprep.subr.bf16.mxu0 0
    %720 = vmatpush1.bf16.msra.mxu0 0
    %721 = vmatprep.subr.bf16.mxu0 0
    %722 = vmatpush1.bf16.msra.mxu0 0
    %723 = vmatprep.subr.bf16.mxu0 0
    %724 = vmatpush1.bf16.msra.mxu0 0
    %725 = vmatprep.subr.bf16.mxu0 0
    %726 = vmatpush1.bf16.msra.mxu0 0
    %727 = vmatprep.subr.bf16.mxu0 0
    %728 = vmatpush1.bf16.msra.mxu0 0
    %729 = vmatprep.subr.bf16.mxu0 0
    %730 = vmatpush1.bf16.msra.mxu0 0
    %731 = vmatprep.subr.bf16.mxu0 0
    %732 = vmatpush1.bf16.msra.mxu0 0
    %733 = vmatprep.subr.bf16.mxu0 0
    %734 = vmatpush1.bf16.msra.mxu0 0
    %735 = vmatprep.subr.bf16.mxu0 0
    %736 = vmatpush1.bf16.msra.mxu0 0
    %737 = vmatprep.subr.bf16.mxu0 0
    %738 = vmatpush1.bf16.msra.mxu0 0
    %739 = vmatprep.subr.bf16.mxu0 0
    %740 = vmatpush1.bf16.msra.mxu0 0
    %741 = vmatprep.mubr.bf16.mxu0 0
    %742 = vmatmul.mubr.bf16.gmra.mrb[0].mxu0 %v161
    %v743 = vpop.f32.mrb[0].mxu0
    %v744 = vadd.f32 %v695, %v743
    %v745 = vpop.f32.mrb[0].mxu0
    %v746 = vpop.f32.mrb[0].mxu0
    %v747 = vadd.f32 %v695, %v746
    %v748 = vpop.f32.mrb[0].mxu0
    %749 = vdwg.mxu0
    %v750 = vpack.c.bf16 %v612, %v612
    %v751 = vpack.c.bf16 %v615, %v615
    %v752 = vpack.c.bf16 %v678, %v678
    %v753 = vpack.c.bf16 %v681, %v681
    %v755 = vsel %vm336, %v750, 0
    %v758 = vsel %vm336, %v752, 0
    %760 = vmatprep.subr.bf16.mxu0 0
    %761 = vmatpush1.bf16.xpose.msra.mxu0 %v758
    %762 = vmatprep.subr.bf16.mxu0 0
    %763 = vmatpush1.bf16.xpose.msra.mxu0 0
    %764 = vmatprep.subr.bf16.mxu0 0
    %765 = vmatpush1.bf16.xpose.msra.mxu0 0
    %766 = vmatprep.subr.bf16.mxu0 0
    %767 = vmatpush1.bf16.xpose.msra.mxu0 0
    %768 = vmatprep.subr.bf16.mxu0 0
    %769 = vmatpush1.bf16.xpose.msra.mxu0 0
    %770 = vmatprep.subr.bf16.mxu0 0
    %771 = vmatpush1.bf16.xpose.msra.mxu0 0
    %772 = vmatprep.subr.bf16.mxu0 0
    %773 = vmatpush1.bf16.xpose.msra.mxu0 0
    %774 = vmatprep.subr.bf16.mxu0 0
    %775 = vmatpush1.bf16.xpose.msra.mxu0 0
    %776 = vmatprep.subr.bf16.mxu0 0
    %777 = vmatpush1.bf16.xpose.msra.mxu0 0
    %778 = vmatprep.subr.bf16.mxu0 0
    %779 = vmatpush1.bf16.xpose.msra.mxu0 0
    %780 = vmatprep.subr.bf16.mxu0 0
    %781 = vmatpush1.bf16.xpose.msra.mxu0 0
    %782 = vmatprep.subr.bf16.mxu0 0
    %783 = vmatpush1.bf16.xpose.msra.mxu0 0
    %784 = vmatprep.subr.bf16.mxu0 0
    %785 = vmatpush1.bf16.xpose.msra.mxu0 0
    %786 = vmatprep.subr.bf16.mxu0 0
    %787 = vmatpush1.bf16.xpose.msra.mxu0 0
    %788 = vmatprep.subr.bf16.mxu0 0
    %789 = vmatpush1.bf16.xpose.msra.mxu0 0
    %790 = vmatprep.subr.bf16.mxu0 0
    %791 = vmatpush1.bf16.xpose.msra.mxu0 0
    %792 = vmatprep.mubr.bf16.mxu0 0
    %793 = vmatmul.mubr.bf16.gmra.mrb[0].mxu0 %v755
    %v794 = vpop.f32.mrb[0].mxu0
    %v795 = vadd.f32 0.0, %v794
    %v796 = vpop.f32.mrb[0].mxu0
    %v797 = vpop.f32.mrb[0].mxu0
    %v798 = vpop.f32.mrb[0].mxu0
    %799 = vdwg.mxu0
    %v801 = vsel %vm336, %v751, 0
    %v804 = vsel %vm336, %v753, 0
    %806 = vmatprep.subr.bf16.mxu0 0
    %807 = vmatpush1.bf16.xpose.msra.mxu0 %v804
    %808 = vmatprep.subr.bf16.mxu0 0
    %809 = vmatpush1.bf16.xpose.msra.mxu0 0
    %810 = vmatprep.subr.bf16.mxu0 0
    %811 = vmatpush1.bf16.xpose.msra.mxu0 0
    %812 = vmatprep.subr.bf16.mxu0 0
    %813 = vmatpush1.bf16.xpose.msra.mxu0 0
    %814 = vmatprep.subr.bf16.mxu0 0
    %815 = vmatpush1.bf16.xpose.msra.mxu0 0
    %816 = vmatprep.subr.bf16.mxu0 0
    %817 = vmatpush1.bf16.xpose.msra.mxu0 0
    %818 = vmatprep.subr.bf16.mxu0 0
    %819 = vmatpush1.bf16.xpose.msra.mxu0 0
    %820 = vmatprep.subr.bf16.mxu0 0
    %821 = vmatpush1.bf16.xpose.msra.mxu0 0
    %822 = vmatprep.subr.bf16.mxu0 0
    %823 = vmatpush1.bf16.xpose.msra.mxu0 0
    %824 = vmatprep.subr.bf16.mxu0 0
    %825 = vmatpush1.bf16.xpose.msra.mxu0 0
    %826 = vmatprep.subr.bf16.mxu0 0
    %827 = vmatpush1.bf16.xpose.msra.mxu0 0
    %828 = vmatprep.subr.bf16.mxu0 0
    %829 = vmatpush1.bf16.xpose.msra.mxu0 0
    %830 = vmatprep.subr.bf16.mxu0 0
    %831 = vmatpush1.bf16.xpose.msra.mxu0 0
    %832 = vmatprep.subr.bf16.mxu0 0
    %833 = vmatpush1.bf16.xpose.msra.mxu0 0
    %834 = vmatprep.subr.bf16.mxu0 0
    %835 = vmatpush1.bf16.xpose.msra.mxu0 0
    %836 = vmatprep.subr.bf16.mxu0 0
    %837 = vmatpush1.bf16.xpose.msra.mxu0 0
    %838 = vmatprep.mubr.bf16.mxu0 0
    %839 = vmatmul.mubr.bf16.gmra.mrb[0].mxu0 %v801
    %v840 = vpop.f32.mrb[0].mxu0
    %v841 = vadd.f32 0.0, %v840
    %v842 = vpop.f32.mrb[0].mxu0
    %v843 = vpop.f32.mrb[0].mxu0
    %v844 = vpop.f32.mrb[0].mxu0
    %845 = vdwg.mxu0
    %v846 = vmul.f32 %v795, 0.35355338
    %v847 = vmul.f32 %v841, 0.35355338
    %v848 = vsel %vm336, %v846, -inf
    %849 = vmax.xlane.f32.xlu0 %v848
    %v850 = vpop.xlane.xlu0 %849
    %v851 = vsel %vm336, %v847, -inf
    %852 = vmax.xlane.f32.xlu0 %v851
    %v853 = vpop.xlane.xlu0 %852
    %v854 = vsub.f32 %v846, %v850
    %v855 = vsub.f32 %v847, %v853
    %v856 = vmul.f32 %v854, 1.442695
    %v857 = vpow.pop %v856
    %v858 = vmul.f32 %v855, 1.442695
    %v859 = vpow.pop %v858
    %v860 = vsel %vm336, %v857, 0.0
    %861 = vadd.xlane.f32.xlu0 %v860
    %v862 = vpop.xlane.xlu0 %861
    %v863 = vsel %vm336, %v859, 0.0
    %864 = vadd.xlane.f32.xlu0 %v863
    %v865 = vpop.xlane.xlu0 %864
    %v866 = vrcp.pop %v862
    %v867 = vrcp.pop %v865
    %v868 = vmul.f32 %v857, %v866
    %v869 = vmul.f32 %v859, %v867
    %v870 = vpack.c.bf16 %v868, %v868
    %v871 = vpack.c.bf16 %v869, %v869
    %v872 = vpack.c.bf16 %v744, %v744
    %v873 = vpack.c.bf16 %v747, %v747
    %v875 = vsel %vm336, %v870, 0
    %v878 = vsel %vm460, %v872, 0
    %880 = vmatprep.subr.bf16.mxu0 0
    %881 = vmatpush1.bf16.msra.mxu0 %v878
    %882 = vmatprep.subr.bf16.mxu0 0
    %883 = vmatpush1.bf16.msra.mxu0 0
    %884 = vmatprep.subr.bf16.mxu0 0
    %885 = vmatpush1.bf16.msra.mxu0 0
    %886 = vmatprep.subr.bf16.mxu0 0
    %887 = vmatpush1.bf16.msra.mxu0 0
    %888 = vmatprep.subr.bf16.mxu0 0
    %889 = vmatpush1.bf16.msra.mxu0 0
    %890 = vmatprep.subr.bf16.mxu0 0
    %891 = vmatpush1.bf16.msra.mxu0 0
    %892 = vmatprep.subr.bf16.mxu0 0
    %893 = vmatpush1.bf16.msra.mxu0 0
    %894 = vmatprep.subr.bf16.mxu0 0
    %895 = vmatpush1.bf16.msra.mxu0 0
    %896 = vmatprep.subr.bf16.mxu0 0
    %897 = vmatpush1.bf16.msra.mxu0 0
    %898 = vmatprep.subr.bf16.mxu0 0
    %899 = vmatpush1.bf16.msra.mxu0 0
    %900 = vmatprep.subr.bf16.mxu0 0
    %901 = vmatpush1.bf16.msra.mxu0 0
    %902 = vmatprep.subr.bf16.mxu0 0
    %903 = vmatpush1.bf16.msra.mxu0 0
    %904 = vmatprep.subr.bf16.mxu0 0
    %905 = vmatpush1.bf16.msra.mxu0 0
    %906 = vmatprep.subr.bf16.mxu0 0
    %907 = vmatpush1.bf16.msra.mxu0 0
    %908 = vmatprep.subr.bf16.mxu0 0
    %909 = vmatpush1.bf16.msra.mxu0 0
    %910 = vmatprep.subr.bf16.mxu0 0
    %911 = vmatpush1.bf16.msra.mxu0 0
    %912 = vmatprep.mubr.bf16.mxu0 0
    %913 = vmatmul.mubr.bf16.gmra.mrb[0].mxu0 %v875
    %v914 = vpop.f32.mrb[0].mxu0
    %v915 = vadd.f32 0.0, %v914
    %v916 = vpop.f32.mrb[0].mxu0
    %v917 = vpop.f32.mrb[0].mxu0
    %v918 = vpop.f32.mrb[0].mxu0
    %919 = vdwg.mxu0
    %v921 = vsel %vm336, %v871, 0
    %v924 = vsel %vm460, %v873, 0
    %926 = vmatprep.subr.bf16.mxu0 0
    %927 = vmatpush1.bf16.msra.mxu0 %v924
    %928 = vmatprep.subr.bf16.mxu0 0
    %929 = vmatpush1.bf16.msra.mxu0 0
    %930 = vmatprep.subr.bf16.mxu0 0
    %931 = vmatpush1.bf16.msra.mxu0 0
    %932 = vmatprep.subr.bf16.mxu0 0
    %933 = vmatpush1.bf16.msra.mxu0 0
    %934 = vmatprep.subr.bf16.mxu0 0
    %935 = vmatpush1.bf16.msra.mxu0 0
    %936 = vmatprep.subr.bf16.mxu0 0
    %937 = vmatpush1.bf16.msra.mxu0 0
    %938 = vmatprep.subr.bf16.mxu0 0
    %939 = vmatpush1.bf16.msra.mxu0 0
    %940 = vmatprep.subr.bf16.mxu0 0
    %941 = vmatpush1.bf16.msra.mxu0 0
    %942 = vmatprep.subr.bf16.mxu0 0
    %943 = vmatpush1.bf16.msra.mxu0 0
    %944 = vmatprep.subr.bf16.mxu0 0
    %945 = vmatpush1.bf16.msra.mxu0 0
    %946 = vmatprep.subr.bf16.mxu0 0
    %947 = vmatpush1.bf16.msra.mxu0 0
    %948 = vmatprep.subr.bf16.mxu0 0
    %949 = vmatpush1.bf16.msra.mxu0 0
    %950 = vmatprep.subr.bf16.mxu0 0
    %951 = vmatpush1.bf16.msra.mxu0 0
    %952 = vmatprep.subr.bf16.mxu0 0
    %953 = vmatpush1.bf16.msra.mxu0 0
    %954 = vmatprep.subr.bf16.mxu0 0
    %955 = vmatpush1.bf16.msra.mxu0 0
    %956 = vmatprep.subr.bf16.mxu0 0
    %957 = vmatpush1.bf16.msra.mxu0 0
    %958 = vmatprep.mubr.bf16.mxu0 0
    %959 = vmatmul.mubr.bf16.gmra.mrb[0].mxu0 %v921
    %v960 = vpop.f32.mrb[0].mxu0
    %v961 = vadd.f32 0.0, %v960
    %v962 = vpop.f32.mrb[0].mxu0
    %v963 = vpop.f32.mrb[0].mxu0
    %v964 = vpop.f32.mrb[0].mxu0
    %965 = vdwg.mxu0
    %v966 = vpack.c.bf16 %v961, %v915
    %s967 = scalar_lea.vmem %s10, 4
    %v968 = vld [vmem:[%s967] sm:$0xf]
    %v970 = vsel %vm336, %v966, 0
    %v973 = vsel %vm460, %v968, 0
    %975 = vmatprep.subr.bf16.mxu0 0
    %976 = vmatpush1.bf16.msra.mxu0 %v973
    %977 = vmatprep.subr.bf16.mxu0 0
    %978 = vmatpush1.bf16.msra.mxu0 0
    %979 = vmatprep.subr.bf16.mxu0 0
    %980 = vmatpush1.bf16.msra.mxu0 0
    %981 = vmatprep.subr.bf16.mxu0 0
    %982 = vmatpush1.bf16.msra.mxu0 0
    %983 = vmatprep.subr.bf16.mxu0 0
    %984 = vmatpush1.bf16.msra.mxu0 0
    %985 = vmatprep.subr.bf16.mxu0 0
    %986 = vmatpush1.bf16.msra.mxu0 0
    %987 = vmatprep.subr.bf16.mxu0 0
    %988 = vmatpush1.bf16.msra.mxu0 0
    %989 = vmatprep.subr.bf16.mxu0 0
    %990 = vmatpush1.bf16.msra.mxu0 0
    %991 = vmatprep.subr.bf16.mxu0 0
    %992 = vmatpush1.bf16.msra.mxu0 0
    %993 = vmatprep.subr.bf16.mxu0 0
    %994 = vmatpush1.bf16.msra.mxu0 0
    %995 = vmatprep.subr.bf16.mxu0 0
    %996 = vmatpush1.bf16.msra.mxu0 0
    %997 = vmatprep.subr.bf16.mxu0 0
    %998 = vmatpush1.bf16.msra.mxu0 0
    %999 = vmatprep.subr.bf16.mxu0 0
    %1000 = vmatpush1.bf16.msra.mxu0 0
    %1001 = vmatprep.subr.bf16.mxu0 0
    %1002 = vmatpush1.bf16.msra.mxu0 0
    %1003 = vmatprep.subr.bf16.mxu0 0
    %1004 = vmatpush1.bf16.msra.mxu0 0
    %1005 = vmatprep.subr.bf16.mxu0 0
    %1006 = vmatpush1.bf16.msra.mxu0 0
    %1007 = vmatprep.mubr.bf16.mxu0 0
    %1008 = vmatmul.mubr.bf16.gmra.mrb[0].mxu0 %v970
    %v1009 = vpop.f32.mrb[0].mxu0
    %v1010 = vadd.f32 0.0, %v1009
    %v1011 = vpop.f32.mrb[0].mxu0
    %v1012 = vpop.f32.mrb[0].mxu0
    %v1013 = vadd.f32 0.0, %v1012
    %v1014 = vpop.f32.mrb[0].mxu0
    %1015 = vdwg.mxu0
    %v1017 = vsel %vm336, %v550, 0
    %v1020 = vsel %vm460, %v551, 0
    %1022 = vmatprep.subr.bf16.mxu0 0
    %1023 = vmatpush1.bf16.msra.mxu0 %v1020
    %1024 = vmatprep.subr.bf16.mxu0 0
    %1025 = vmatpush1.bf16.msra.mxu0 0
    %1026 = vmatprep.subr.bf16.mxu0 0
    %1027 = vmatpush1.bf16.msra.mxu0 0
    %1028 = vmatprep.subr.bf16.mxu0 0
    %1029 = vmatpush1.bf16.msra.mxu0 0
    %1030 = vmatprep.subr.bf16.mxu0 0
    %1031 = vmatpush1.bf16.msra.mxu0 0
    %1032 = vmatprep.subr.bf16.mxu0 0
    %1033 = vmatpush1.bf16.msra.mxu0 0
    %1034 = vmatprep.subr.bf16.mxu0 0
    %1035 = vmatpush1.bf16.msra.mxu0 0
    %1036 = vmatprep.subr.bf16.mxu0 0
    %1037 = vmatpush1.bf16.msra.mxu0 0
    %1038 = vmatprep.subr.bf16.mxu0 0
    %1039 = vmatpush1.bf16.msra.mxu0 0
    %1040 = vmatprep.subr.bf16.mxu0 0
    %1041 = vmatpush1.bf16.msra.mxu0 0
    %1042 = vmatprep.subr.bf16.mxu0 0
    %1043 = vmatpush1.bf16.msra.mxu0 0
    %1044 = vmatprep.subr.bf16.mxu0 0
    %1045 = vmatpush1.bf16.msra.mxu0 0
    %1046 = vmatprep.subr.bf16.mxu0 0
    %1047 = vmatpush1.bf16.msra.mxu0 0
    %1048 = vmatprep.subr.bf16.mxu0 0
    %1049 = vmatpush1.bf16.msra.mxu0 0
    %1050 = vmatprep.subr.bf16.mxu0 0
    %1051 = vmatpush1.bf16.msra.mxu0 0
    %1052 = vmatprep.subr.bf16.mxu0 0
    %1053 = vmatpush1.bf16.msra.mxu0 0
    %1054 = vmatprep.mubr.bf16.mxu0 0
    %1055 = vmatmul.mubr.bf16.gmra.mrb[0].mxu0 %v1017
    %v1056 = vpop.f32.mrb[0].mxu0
    %v1057 = vadd.f32 %v1010, %v1056
    %v1058 = vpop.f32.mrb[0].mxu0
    %v1059 = vpop.f32.mrb[0].mxu0
    %v1060 = vadd.f32 %v1013, %v1059
    %v1061 = vpop.f32.mrb[0].mxu0
    %1062 = vdwg.mxu0
    %s1063 = scalar_lea.vmem %s4, 32
    %v1064 = vld [vmem:[%s1063] sm:$0xf]
    %v1065 = vld [vmem:[%s1063 + $0x4] sm:$0xf]
    %v1066 = vld [vmem:[%s1063 + $0x8] sm:$0xf]
    %v1067 = vld [vmem:[%s1063 + $0xc] sm:$0xf]
    %s1068 = scalar_lea.vmem %s5, 2
    %v1069 = vld [vmem:[%s1068] sm:$0x1]
    %v1071 = vlaneseq
    %v1072 = vshrl.u32 %v1071, 7
    %v1073 = vsub.s32 0, %v1072
    %v1074 = vrot.slane %v1069, %v1073
    %v1080 = vunpack.c.l.b16 %v1064
    %v1081 = vunpack.c.l.b16 %v1065
    %v1082 = vunpack.c.l.b16 %v1066
    %v1083 = vunpack.c.l.b16 %v1067
    %v1084 = vpack.c.b16 %v1081, %v1080
    %v1085 = vpack.c.b16 %v1083, %v1082
    %1088 = vmatprep.subr.bf16.mxu0 0
    %1089 = vmatpush1.bf16.msra.mxu0 %v1084
    %1090 = vmatprep.subr.bf16.mxu0 0
    %1091 = vmatpush1.bf16.msra.mxu0 %v1085
    %1092 = vmatprep.subr.bf16.mxu0 0
    %1093 = vmatpush1.bf16.msra.mxu0 0
    %1094 = vmatprep.subr.bf16.mxu0 0
    %1095 = vmatpush1.bf16.msra.mxu0 0
    %1096 = vmatprep.subr.bf16.mxu0 0
    %1097 = vmatpush1.bf16.msra.mxu0 0
    %1098 = vmatprep.subr.bf16.mxu0 0
    %1099 = vmatpush1.bf16.msra.mxu0 0
    %1100 = vmatprep.subr.bf16.mxu0 0
    %1101 = vmatpush1.bf16.msra.mxu0 0
    %1102 = vmatprep.subr.bf16.mxu0 0
    %1103 = vmatpush1.bf16.msra.mxu0 0
    %1104 = vmatprep.subr.bf16.mxu0 0
    %1105 = vmatpush1.bf16.msra.mxu0 0
    %1106 = vmatprep.subr.bf16.mxu0 0
    %1107 = vmatpush1.bf16.msra.mxu0 0
    %1108 = vmatprep.subr.bf16.mxu0 0
    %1109 = vmatpush1.bf16.msra.mxu0 0
    %1110 = vmatprep.subr.bf16.mxu0 0
    %1111 = vmatpush1.bf16.msra.mxu0 0
    %1112 = vmatprep.subr.bf16.mxu0 0
    %1113 = vmatpush1.bf16.msra.mxu0 0
    %1114 = vmatprep.subr.bf16.mxu0 0
    %1115 = vmatpush1.bf16.msra.mxu0 0
    %1116 = vmatprep.subr.bf16.mxu0 0
    %1117 = vmatpush1.bf16.msra.mxu0 0
    %1118 = vmatprep.subr.bf16.mxu0 0
    %1119 = vmatpush1.bf16.msra.mxu0 0
    %1120 = vmatprep.mubr.bf16.mxu0 0
    %1121 = vmatmul.mubr.bf16.gmra.mrb[0].mxu0 %v161
    %v1122 = vpop.f32.mrb[0].mxu0
    %v1123 = vadd.f32 %v1074, %v1122
    %v1124 = vpop.f32.mrb[0].mxu0
    %v1125 = vpop.f32.mrb[0].mxu0
    %v1126 = vadd.f32 %v1074, %v1125
    %v1127 = vpop.f32.mrb[0].mxu0
    %1128 = vdwg.mxu0
    %s1129 = scalar_lea.vmem %s6, 32
    %v1130 = vld [vmem:[%s1129] sm:$0xf]
    %v1131 = vld [vmem:[%s1129 + $0x4] sm:$0xf]
    %v1132 = vld [vmem:[%s1129 + $0x8] sm:$0xf]
    %v1133 = vld [vmem:[%s1129 + $0xc] sm:$0xf]
    %s1134 = scalar_lea.vmem %s7, 2
    %v1135 = vld [vmem:[%s1134] sm:$0x1]
    %v1137 = vlaneseq
    %v1138 = vshrl.u32 %v1137, 7
    %v1139 = vsub.s32 0, %v1138
    %v1140 = vrot.slane %v1135, %v1139
    %v1146 = vunpack.c.l.b16 %v1130
    %v1147 = vunpack.c.l.b16 %v1131
    %v1148 = vunpack.c.l.b16 %v1132
    %v1149 = vunpack.c.l.b16 %v1133
    %v1150 = vpack.c.b16 %v1147, %v1146
    %v1151 = vpack.c.b16 %v1149, %v1148
    %1154 = vmatprep.subr.bf16.mxu0 0
    %1155 = vmatpush1.bf16.msra.mxu0 %v1150
    %1156 = vmatprep.subr.bf16.mxu0 0
    %1157 = vmatpush1.bf16.msra.mxu0 %v1151
    %1158 = vmatprep.subr.bf16.mxu0 0
    %1159 = vmatpush1.bf16.msra.mxu0 0
    %1160 = vmatprep.subr.bf16.mxu0 0
    %1161 = vmatpush1.bf16.msra.mxu0 0
    %1162 = vmatprep.subr.bf16.mxu0 0
    %1163 = vmatpush1.bf16.msra.mxu0 0
    %1164 = vmatprep.subr.bf16.mxu0 0
    %1165 = vmatpush1.bf16.msra.mxu0 0
    %1166 = vmatprep.subr.bf16.mxu0 0
    %1167 = vmatpush1.bf16.msra.mxu0 0
    %1168 = vmatprep.subr.bf16.mxu0 0
    %1169 = vmatpush1.bf16.msra.mxu0 0
    %1170 = vmatprep.subr.bf16.mxu0 0
    %1171 = vmatpush1.bf16.msra.mxu0 0
    %1172 = vmatprep.subr.bf16.mxu0 0
    %1173 = vmatpush1.bf16.msra.mxu0 0
    %1174 = vmatprep.subr.bf16.mxu0 0
    %1175 = vmatpush1.bf16.msra.mxu0 0
    %1176 = vmatprep.subr.bf16.mxu0 0
    %1177 = vmatpush1.bf16.msra.mxu0 0
    %1178 = vmatprep.subr.bf16.mxu0 0
    %1179 = vmatpush1.bf16.msra.mxu0 0
    %1180 = vmatprep.subr.bf16.mxu0 0
    %1181 = vmatpush1.bf16.msra.mxu0 0
    %1182 = vmatprep.subr.bf16.mxu0 0
    %1183 = vmatpush1.bf16.msra.mxu0 0
    %1184 = vmatprep.subr.bf16.mxu0 0
    %1185 = vmatpush1.bf16.msra.mxu0 0
    %1186 = vmatprep.mubr.bf16.mxu0 0
    %1187 = vmatmul.mubr.bf16.gmra.mrb[0].mxu0 %v161
    %v1188 = vpop.f32.mrb[0].mxu0
    %v1189 = vadd.f32 %v1140, %v1188
    %v1190 = vpop.f32.mrb[0].mxu0
    %v1191 = vpop.f32.mrb[0].mxu0
    %v1192 = vadd.f32 %v1140, %v1191
    %v1193 = vpop.f32.mrb[0].mxu0
    %1194 = vdwg.mxu0
    %s1195 = scalar_lea.vmem %s8, 32
    %v1196 = vld [vmem:[%s1195] sm:$0xf]
    %v1197 = vld [vmem:[%s1195 + $0x4] sm:$0xf]
    %v1198 = vld [vmem:[%s1195 + $0x8] sm:$0xf]
    %v1199 = vld [vmem:[%s1195 + $0xc] sm:$0xf]
    %s1200 = scalar_lea.vmem %s9, 2
    %v1201 = vld [vmem:[%s1200] sm:$0x1]
    %v1203 = vlaneseq
    %v1204 = vshrl.u32 %v1203, 7
    %v1205 = vsub.s32 0, %v1204
    %v1206 = vrot.slane %v1201, %v1205
    %v1212 = vunpack.c.l.b16 %v1196
    %v1213 = vunpack.c.l.b16 %v1197
    %v1214 = vunpack.c.l.b16 %v1198
    %v1215 = vunpack.c.l.b16 %v1199
    %v1216 = vpack.c.b16 %v1213, %v1212
    %v1217 = vpack.c.b16 %v1215, %v1214
    %1220 = vmatprep.subr.bf16.mxu0 0
    %1221 = vmatpush1.bf16.msra.mxu0 %v1216
    %1222 = vmatprep.subr.bf16.mxu0 0
    %1223 = vmatpush1.bf16.msra.mxu0 %v1217
    %1224 = vmatprep.subr.bf16.mxu0 0
    %1225 = vmatpush1.bf16.msra.mxu0 0
    %1226 = vmatprep.subr.bf16.mxu0 0
    %1227 = vmatpush1.bf16.msra.mxu0 0
    %1228 = vmatprep.subr.bf16.mxu0 0
    %1229 = vmatpush1.bf16.msra.mxu0 0
    %1230 = vmatprep.subr.bf16.mxu0 0
    %1231 = vmatpush1.bf16.msra.mxu0 0
    %1232 = vmatprep.subr.bf16.mxu0 0
    %1233 = vmatpush1.bf16.msra.mxu0 0
    %1234 = vmatprep.subr.bf16.mxu0 0
    %1235 = vmatpush1.bf16.msra.mxu0 0
    %1236 = vmatprep.subr.bf16.mxu0 0
    %1237 = vmatpush1.bf16.msra.mxu0 0
    %1238 = vmatprep.subr.bf16.mxu0 0
    %1239 = vmatpush1.bf16.msra.mxu0 0
    %1240 = vmatprep.subr.bf16.mxu0 0
    %1241 = vmatpush1.bf16.msra.mxu0 0
    %1242 = vmatprep.subr.bf16.mxu0 0
    %1243 = vmatpush1.bf16.msra.mxu0 0
    %1244 = vmatprep.subr.bf16.mxu0 0
    %1245 = vmatpush1.bf16.msra.mxu0 0
    %1246 = vmatprep.subr.bf16.mxu0 0
    %1247 = vmatpush1.bf16.msra.mxu0 0
    %1248 = vmatprep.subr.bf16.mxu0 0
    %1249 = vmatpush1.bf16.msra.mxu0 0
    %1250 = vmatprep.subr.bf16.mxu0 0
    %1251 = vmatpush1.bf16.msra.mxu0 0
    %1252 = vmatprep.mubr.bf16.mxu0 0
    %1253 = vmatmul.mubr.bf16.gmra.mrb[0].mxu0 %v161
    %v1254 = vpop.f32.mrb[0].mxu0
    %v1255 = vadd.f32 %v1206, %v1254
    %v1256 = vpop.f32.mrb[0].mxu0
    %v1257 = vpop.f32.mrb[0].mxu0
    %v1258 = vadd.f32 %v1206, %v1257
    %v1259 = vpop.f32.mrb[0].mxu0
    %1260 = vdwg.mxu0
    %v1261 = vpack.c.bf16 %v1123, %v1123
    %v1262 = vpack.c.bf16 %v1126, %v1126
    %v1263 = vpack.c.bf16 %v1189, %v1189
    %v1264 = vpack.c.bf16 %v1192, %v1192
    %v1266 = vsel %vm336, %v1261, 0
    %v1269 = vsel %vm336, %v1263, 0
    %1271 = vmatprep.subr.bf16.mxu0 0
    %1272 = vmatpush1.bf16.xpose.msra.mxu0 %v1269
    %1273 = vmatprep.subr.bf16.mxu0 0
    %1274 = vmatpush1.bf16.xpose.msra.mxu0 0
    %1275 = vmatprep.subr.bf16.mxu0 0
    %1276 = vmatpush1.bf16.xpose.msra.mxu0 0
    %1277 = vmatprep.subr.bf16.mxu0 0
    %1278 = vmatpush1.bf16.xpose.msra.mxu0 0
    %1279 = vmatprep.subr.bf16.mxu0 0
    %1280 = vmatpush1.bf16.xpose.msra.mxu0 0
    %1281 = vmatprep.subr.bf16.mxu0 0
    %1282 = vmatpush1.bf16.xpose.msra.mxu0 0
    %1283 = vmatprep.subr.bf16.mxu0 0
    %1284 = vmatpush1.bf16.xpose.msra.mxu0 0
    %1285 = vmatprep.subr.bf16.mxu0 0
    %1286 = vmatpush1.bf16.xpose.msra.mxu0 0
    %1287 = vmatprep.subr.bf16.mxu0 0
    %1288 = vmatpush1.bf16.xpose.msra.mxu0 0
    %1289 = vmatprep.subr.bf16.mxu0 0
    %1290 = vmatpush1.bf16.xpose.msra.mxu0 0
    %1291 = vmatprep.subr.bf16.mxu0 0
    %1292 = vmatpush1.bf16.xpose.msra.mxu0 0
    %1293 = vmatprep.subr.bf16.mxu0 0
    %1294 = vmatpush1.bf16.xpose.msra.mxu0 0
    %1295 = vmatprep.subr.bf16.mxu0 0
    %1296 = vmatpush1.bf16.xpose.msra.mxu0 0
    %1297 = vmatprep.subr.bf16.mxu0 0
    %1298 = vmatpush1.bf16.xpose.msra.mxu0 0
    %1299 = vmatprep.subr.bf16.mxu0 0
    %1300 = vmatpush1.bf16.xpose.msra.mxu0 0
    %1301 = vmatprep.subr.bf16.mxu0 0
    %1302 = vmatpush1.bf16.xpose.msra.mxu0 0
    %1303 = vmatprep.mubr.bf16.mxu0 0
    %1304 = vmatmul.mubr.bf16.gmra.mrb[0].mxu0 %v1266
    %v1305 = vpop.f32.mrb[0].mxu0
    %v1306 = vadd.f32 0.0, %v1305
    %v1307 = vpop.f32.mrb[0].mxu0
    %v1308 = vpop.f32.mrb[0].mxu0
    %v1309 = vpop.f32.mrb[0].mxu0
    %1310 = vdwg.mxu0
    %v1312 = vsel %vm336, %v1262, 0
    %v1315 = vsel %vm336, %v1264, 0
    %1317 = vmatprep.subr.bf16.mxu0 0
    %1318 = vmatpush1.bf16.xpose.msra.mxu0 %v1315
    %1319 = vmatprep.subr.bf16.mxu0 0
    %1320 = vmatpush1.bf16.xpose.msra.mxu0 0
    %1321 = vmatprep.subr.bf16.mxu0 0
    %1322 = vmatpush1.bf16.xpose.msra.mxu0 0
    %1323 = vmatprep.subr.bf16.mxu0 0
    %1324 = vmatpush1.bf16.xpose.msra.mxu0 0
    %1325 = vmatprep.subr.bf16.mxu0 0
    %1326 = vmatpush1.bf16.xpose.msra.mxu0 0
    %1327 = vmatprep.subr.bf16.mxu0 0
    %1328 = vmatpush1.bf16.xpose.msra.mxu0 0
    %1329 = vmatprep.subr.bf16.mxu0 0
    %1330 = vmatpush1.bf16.xpose.msra.mxu0 0
    %1331 = vmatprep.subr.bf16.mxu0 0
    %1332 = vmatpush1.bf16.xpose.msra.mxu0 0
    %1333 = vmatprep.subr.bf16.mxu0 0
    %1334 = vmatpush1.bf16.xpose.msra.mxu0 0
    %1335 = vmatprep.subr.bf16.mxu0 0
    %1336 = vmatpush1.bf16.xpose.msra.mxu0 0
    %1337 = vmatprep.subr.bf16.mxu0 0
    %1338 = vmatpush1.bf16.xpose.msra.mxu0 0
    %1339 = vmatprep.subr.bf16.mxu0 0
    %1340 = vmatpush1.bf16.xpose.msra.mxu0 0
    %1341 = vmatprep.subr.bf16.mxu0 0
    %1342 = vmatpush1.bf16.xpose.msra.mxu0 0
    %1343 = vmatprep.subr.bf16.mxu0 0
    %1344 = vmatpush1.bf16.xpose.msra.mxu0 0
    %1345 = vmatprep.subr.bf16.mxu0 0
    %1346 = vmatpush1.bf16.xpose.msra.mxu0 0
    %1347 = vmatprep.subr.bf16.mxu0 0
    %1348 = vmatpush1.bf16.xpose.msra.mxu0 0
    %1349 = vmatprep.mubr.bf16.mxu0 0
    %1350 = vmatmul.mubr.bf16.gmra.mrb[0].mxu0 %v1312
    %v1351 = vpop.f32.mrb[0].mxu0
    %v1352 = vadd.f32 0.0, %v1351
    %v1353 = vpop.f32.mrb[0].mxu0
    %v1354 = vpop.f32.mrb[0].mxu0
    %v1355 = vpop.f32.mrb[0].mxu0
    %1356 = vdwg.mxu0
    %v1357 = vmul.f32 %v1306, 0.35355338
    %v1358 = vmul.f32 %v1352, 0.35355338
    %v1359 = vsel %vm336, %v1357, -inf
    %1360 = vmax.xlane.f32.xlu0 %v1359
    %v1361 = vpop.xlane.xlu0 %1360
    %v1362 = vsel %vm336, %v1358, -inf
    %1363 = vmax.xlane.f32.xlu0 %v1362
    %v1364 = vpop.xlane.xlu0 %1363
    %v1365 = vsub.f32 %v1357, %v1361
    %v1366 = vsub.f32 %v1358, %v1364
    %v1367 = vmul.f32 %v1365, 1.442695
    %v1368 = vpow.pop %v1367
    %v1369 = vmul.f32 %v1366, 1.442695
    %v1370 = vpow.pop %v1369
    %v1371 = vsel %vm336, %v1368, 0.0
    %1372 = vadd.xlane.f32.xlu0 %v1371
    %v1373 = vpop.xlane.xlu0 %1372
    %v1374 = vsel %vm336, %v1370, 0.0
    %1375 = vadd.xlane.f32.xlu0 %v1374
    %v1376 = vpop.xlane.xlu0 %1375
    %v1377 = vrcp.pop %v1373
    %v1378 = vrcp.pop %v1376
    %v1379 = vmul.f32 %v1368, %v1377
    %v1380 = vmul.f32 %v1370, %v1378
    %v1381 = vpack.c.bf16 %v1379, %v1379
    %v1382 = vpack.c.bf16 %v1380, %v1380
    %v1383 = vpack.c.bf16 %v1255, %v1255
    %v1384 = vpack.c.bf16 %v1258, %v1258
    %v1386 = vsel %vm336, %v1381, 0
    %v1389 = vsel %vm460, %v1383, 0
    %1391 = vmatprep.subr.bf16.mxu0 0
    %1392 = vmatpush1.bf16.msra.mxu0 %v1389
    %1393 = vmatprep.subr.bf16.mxu0 0
    %1394 = vmatpush1.bf16.msra.mxu0 0
    %1395 = vmatprep.subr.bf16.mxu0 0
    %1396 = vmatpush1.bf16.msra.mxu0 0
    %1397 = vmatprep.subr.bf16.mxu0 0
    %1398 = vmatpush1.bf16.msra.mxu0 0
    %1399 = vmatprep.subr.bf16.mxu0 0
    %1400 = vmatpush1.bf16.msra.mxu0 0
    %1401 = vmatprep.subr.bf16.mxu0 0
    %1402 = vmatpush1.bf16.msra.mxu0 0
    %1403 = vmatprep.subr.bf16.mxu0 0
    %1404 = vmatpush1.bf16.msra.mxu0 0
    %1405 = vmatprep.subr.bf16.mxu0 0
    %1406 = vmatpush1.bf16.msra.mxu0 0
    %1407 = vmatprep.subr.bf16.mxu0 0
    %1408 = vmatpush1.bf16.msra.mxu0 0
    %1409 = vmatprep.subr.bf16.mxu0 0
    %1410 = vmatpush1.bf16.msra.mxu0 0
    %1411 = vmatprep.subr.bf16.mxu0 0
    %1412 = vmatpush1.bf16.msra.mxu0 0
    %1413 = vmatprep.subr.bf16.mxu0 0
    %1414 = vmatpush1.bf16.msra.mxu0 0
    %1415 = vmatprep.subr.bf16.mxu0 0
    %1416 = vmatpush1.bf16.msra.mxu0 0
    %1417 = vmatprep.subr.bf16.mxu0 0
    %1418 = vmatpush1.bf16.msra.mxu0 0
    %1419 = vmatprep.subr.bf16.mxu0 0
    %1420 = vmatpush1.bf16.msra.mxu0 0
    %1421 = vmatprep.subr.bf16.mxu0 0
    %1422 = vmatpush1.bf16.msra.mxu0 0
    %1423 = vmatprep.mubr.bf16.mxu0 0
    %1424 = vmatmul.mubr.bf16.gmra.mrb[0].mxu0 %v1386
    %v1425 = vpop.f32.mrb[0].mxu0
    %v1426 = vadd.f32 0.0, %v1425
    %v1427 = vpop.f32.mrb[0].mxu0
    %v1428 = vpop.f32.mrb[0].mxu0
    %v1429 = vpop.f32.mrb[0].mxu0
    %1430 = vdwg.mxu0
    %v1432 = vsel %vm336, %v1382, 0
    %v1435 = vsel %vm460, %v1384, 0
    %1437 = vmatprep.subr.bf16.mxu0 0
    %1438 = vmatpush1.bf16.msra.mxu0 %v1435
    %1439 = vmatprep.subr.bf16.mxu0 0
    %1440 = vmatpush1.bf16.msra.mxu0 0
    %1441 = vmatprep.subr.bf16.mxu0 0
    %1442 = vmatpush1.bf16.msra.mxu0 0
    %1443 = vmatprep.subr.bf16.mxu0 0
    %1444 = vmatpush1.bf16.msra.mxu0 0
    %1445 = vmatprep.subr.bf16.mxu0 0
    %1446 = vmatpush1.bf16.msra.mxu0 0
    %1447 = vmatprep.subr.bf16.mxu0 0
    %1448 = vmatpush1.bf16.msra.mxu0 0
    %1449 = vmatprep.subr.bf16.mxu0 0
    %1450 = vmatpush1.bf16.msra.mxu0 0
    %1451 = vmatprep.subr.bf16.mxu0 0
    %1452 = vmatpush1.bf16.msra.mxu0 0
    %1453 = vmatprep.subr.bf16.mxu0 0
    %1454 = vmatpush1.bf16.msra.mxu0 0
    %1455 = vmatprep.subr.bf16.mxu0 0
    %1456 = vmatpush1.bf16.msra.mxu0 0
    %1457 = vmatprep.subr.bf16.mxu0 0
    %1458 = vmatpush1.bf16.msra.mxu0 0
    %1459 = vmatprep.subr.bf16.mxu0 0
    %1460 = vmatpush1.bf16.msra.mxu0 0
    %1461 = vmatprep.subr.bf16.mxu0 0
    %1462 = vmatpush1.bf16.msra.mxu0 0
    %1463 = vmatprep.subr.bf16.mxu0 0
    %1464 = vmatpush1.bf16.msra.mxu0 0
    %1465 = vmatprep.subr.bf16.mxu0 0
    %1466 = vmatpush1.bf16.msra.mxu0 0
    %1467 = vmatprep.subr.bf16.mxu0 0
    %1468 = vmatpush1.bf16.msra.mxu0 0
    %1469 = vmatprep.mubr.bf16.mxu0 0
    %1470 = vmatmul.mubr.bf16.gmra.mrb[0].mxu0 %v1432
    %v1471 = vpop.f32.mrb[0].mxu0
    %v1472 = vadd.f32 0.0, %v1471
    %v1473 = vpop.f32.mrb[0].mxu0
    %v1474 = vpop.f32.mrb[0].mxu0
    %v1475 = vpop.f32.mrb[0].mxu0
    %1476 = vdwg.mxu0
    %v1477 = vpack.c.bf16 %v1472, %v1426
    %s1478 = scalar_lea.vmem %s10, 8
    %v1479 = vld [vmem:[%s1478] sm:$0xf]
    %v1481 = vsel %vm336, %v1477, 0
    %v1484 = vsel %vm460, %v1479, 0
    %1486 = vmatprep.subr.bf16.mxu0 0
    %1487 = vmatpush1.bf16.msra.mxu0 %v1484
    %1488 = vmatprep.subr.bf16.mxu0 0
    %1489 = vmatpush1.bf16.msra.mxu0 0
    %1490 = vmatprep.subr.bf16.mxu0 0
    %1491 = vmatpush1.bf16.msra.mxu0 0
    %1492 = vmatprep.subr.bf16.mxu0 0
    %1493 = vmatpush1.bf16.msra.mxu0 0
    %1494 = vmatprep.subr.bf16.mxu0 0
    %1495 = vmatpush1.bf16.msra.mxu0 0
    %1496 = vmatprep.subr.bf16.mxu0 0
    %1497 = vmatpush1.bf16.msra.mxu0 0
    %1498 = vmatprep.subr.bf16.mxu0 0
    %1499 = vmatpush1.bf16.msra.mxu0 0
    %1500 = vmatprep.subr.bf16.mxu0 0
    %1501 = vmatpush1.bf16.msra.mxu0 0
    %1502 = vmatprep.subr.bf16.mxu0 0
    %1503 = vmatpush1.bf16.msra.mxu0 0
    %1504 = vmatprep.subr.bf16.mxu0 0
    %1505 = vmatpush1.bf16.msra.mxu0 0
    %1506 = vmatprep.subr.bf16.mxu0 0
    %1507 = vmatpush1.bf16.msra.mxu0 0
    %1508 = vmatprep.subr.bf16.mxu0 0
    %1509 = vmatpush1.bf16.msra.mxu0 0
    %1510 = vmatprep.subr.bf16.mxu0 0
    %1511 = vmatpush1.bf16.msra.mxu0 0
    %1512 = vmatprep.subr.bf16.mxu0 0
    %1513 = vmatpush1.bf16.msra.mxu0 0
    %1514 = vmatprep.subr.bf16.mxu0 0
    %1515 = vmatpush1.bf16.msra.mxu0 0
    %1516 = vmatprep.subr.bf16.mxu0 0
    %1517 = vmatpush1.bf16.msra.mxu0 0
    %1518 = vmatprep.mubr.bf16.mxu0 0
    %1519 = vmatmul.mubr.bf16.gmra.mrb[0].mxu0 %v1481
    %v1520 = vpop.f32.mrb[0].mxu0
    %v1521 = vadd.f32 0.0, %v1520
    %v1522 = vpop.f32.mrb[0].mxu0
    %v1523 = vpop.f32.mrb[0].mxu0
    %v1524 = vadd.f32 0.0, %v1523
    %v1525 = vpop.f32.mrb[0].mxu0
    %1526 = vdwg.mxu0
    %v1527 = vadd.f32 %v1057, %v1521
    %v1528 = vadd.f32 %v1060, %v1524
    %s1529 = scalar_lea.vmem %s4, 48
    %v1530 = vld [vmem:[%s1529] sm:$0xf]
    %v1531 = vld [vmem:[%s1529 + $0x4] sm:$0xf]
    %v1532 = vld [vmem:[%s1529 + $0x8] sm:$0xf]
    %v1533 = vld [vmem:[%s1529 + $0xc] sm:$0xf]
    %s1534 = scalar_lea.vmem %s5, 3
    %v1535 = vld [vmem:[%s1534] sm:$0x1]
    %v1537 = vlaneseq
    %v1538 = vshrl.u32 %v1537, 7
    %v1539 = vsub.s32 0, %v1538
    %v1540 = vrot.slane %v1535, %v1539
    %v1546 = vunpack.c.l.b16 %v1530
    %v1547 = vunpack.c.l.b16 %v1531
    %v1548 = vunpack.c.l.b16 %v1532
    %v1549 = vunpack.c.l.b16 %v1533
    %v1550 = vpack.c.b16 %v1547, %v1546
    %v1551 = vpack.c.b16 %v1549, %v1548
    %1554 = vmatprep.subr.bf16.mxu0 0
    %1555 = vmatpush1.bf16.msra.mxu0 %v1550
    %1556 = vmatprep.subr.bf16.mxu0 0
    %1557 = vmatpush1.bf16.msra.mxu0 %v1551
    %1558 = vmatprep.subr.bf16.mxu0 0
    %1559 = vmatpush1.bf16.msra.mxu0 0
    %1560 = vmatprep.subr.bf16.mxu0 0
    %1561 = vmatpush1.bf16.msra.mxu0 0
    %1562 = vmatprep.subr.bf16.mxu0 0
    %1563 = vmatpush1.bf16.msra.mxu0 0
    %1564 = vmatprep.subr.bf16.mxu0 0
    %1565 = vmatpush1.bf16.msra.mxu0 0
    %1566 = vmatprep.subr.bf16.mxu0 0
    %1567 = vmatpush1.bf16.msra.mxu0 0
    %1568 = vmatprep.subr.bf16.mxu0 0
    %1569 = vmatpush1.bf16.msra.mxu0 0
    %1570 = vmatprep.subr.bf16.mxu0 0
    %1571 = vmatpush1.bf16.msra.mxu0 0
    %1572 = vmatprep.subr.bf16.mxu0 0
    %1573 = vmatpush1.bf16.msra.mxu0 0
    %1574 = vmatprep.subr.bf16.mxu0 0
    %1575 = vmatpush1.bf16.msra.mxu0 0
    %1576 = vmatprep.subr.bf16.mxu0 0
    %1577 = vmatpush1.bf16.msra.mxu0 0
    %1578 = vmatprep.subr.bf16.mxu0 0
    %1579 = vmatpush1.bf16.msra.mxu0 0
    %1580 = vmatprep.subr.bf16.mxu0 0
    %1581 = vmatpush1.bf16.msra.mxu0 0
    %1582 = vmatprep.subr.bf16.mxu0 0
    %1583 = vmatpush1.bf16.msra.mxu0 0
    %1584 = vmatprep.subr.bf16.mxu0 0
    %1585 = vmatpush1.bf16.msra.mxu0 0
    %1586 = vmatprep.mubr.bf16.mxu0 0
    %1587 = vmatmul.mubr.bf16.gmra.mrb[0].mxu0 %v161
    %v1588 = vpop.f32.mrb[0].mxu0
    %v1589 = vadd.f32 %v1540, %v1588
    %v1590 = vpop.f32.mrb[0].mxu0
    %v1591 = vpop.f32.mrb[0].mxu0
    %v1592 = vadd.f32 %v1540, %v1591
    %v1593 = vpop.f32.mrb[0].mxu0
    %1594 = vdwg.mxu0
    %s1595 = scalar_lea.vmem %s6, 48
    %v1596 = vld [vmem:[%s1595] sm:$0xf]
    %v1597 = vld [vmem:[%s1595 + $0x4] sm:$0xf]
    %v1598 = vld [vmem:[%s1595 + $0x8] sm:$0xf]
    %v1599 = vld [vmem:[%s1595 + $0xc] sm:$0xf]
    %s1600 = scalar_lea.vmem %s7, 3
    %v1601 = vld [vmem:[%s1600] sm:$0x1]
    %v1603 = vlaneseq
    %v1604 = vshrl.u32 %v1603, 7
    %v1605 = vsub.s32 0, %v1604
    %v1606 = vrot.slane %v1601, %v1605
    %v1612 = vunpack.c.l.b16 %v1596
    %v1613 = vunpack.c.l.b16 %v1597
    %v1614 = vunpack.c.l.b16 %v1598
    %v1615 = vunpack.c.l.b16 %v1599
    %v1616 = vpack.c.b16 %v1613, %v1612
    %v1617 = vpack.c.b16 %v1615, %v1614
    %1620 = vmatprep.subr.bf16.mxu0 0
    %1621 = vmatpush1.bf16.msra.mxu0 %v1616
    %1622 = vmatprep.subr.bf16.mxu0 0
    %1623 = vmatpush1.bf16.msra.mxu0 %v1617
    %1624 = vmatprep.subr.bf16.mxu0 0
    %1625 = vmatpush1.bf16.msra.mxu0 0
    %1626 = vmatprep.subr.bf16.mxu0 0
    %1627 = vmatpush1.bf16.msra.mxu0 0
    %1628 = vmatprep.subr.bf16.mxu0 0
    %1629 = vmatpush1.bf16.msra.mxu0 0
    %1630 = vmatprep.subr.bf16.mxu0 0
    %1631 = vmatpush1.bf16.msra.mxu0 0
    %1632 = vmatprep.subr.bf16.mxu0 0
    %1633 = vmatpush1.bf16.msra.mxu0 0
    %1634 = vmatprep.subr.bf16.mxu0 0
    %1635 = vmatpush1.bf16.msra.mxu0 0
    %1636 = vmatprep.subr.bf16.mxu0 0
    %1637 = vmatpush1.bf16.msra.mxu0 0
    %1638 = vmatprep.subr.bf16.mxu0 0
    %1639 = vmatpush1.bf16.msra.mxu0 0
    %1640 = vmatprep.subr.bf16.mxu0 0
    %1641 = vmatpush1.bf16.msra.mxu0 0
    %1642 = vmatprep.subr.bf16.mxu0 0
    %1643 = vmatpush1.bf16.msra.mxu0 0
    %1644 = vmatprep.subr.bf16.mxu0 0
    %1645 = vmatpush1.bf16.msra.mxu0 0
    %1646 = vmatprep.subr.bf16.mxu0 0
    %1647 = vmatpush1.bf16.msra.mxu0 0
    %1648 = vmatprep.subr.bf16.mxu0 0
    %1649 = vmatpush1.bf16.msra.mxu0 0
    %1650 = vmatprep.subr.bf16.mxu0 0
    %1651 = vmatpush1.bf16.msra.mxu0 0
    %1652 = vmatprep.mubr.bf16.mxu0 0
    %1653 = vmatmul.mubr.bf16.gmra.mrb[0].mxu0 %v161
    %v1654 = vpop.f32.mrb[0].mxu0
    %v1655 = vadd.f32 %v1606, %v1654
    %v1656 = vpop.f32.mrb[0].mxu0
    %v1657 = vpop.f32.mrb[0].mxu0
    %v1658 = vadd.f32 %v1606, %v1657
    %v1659 = vpop.f32.mrb[0].mxu0
    %1660 = vdwg.mxu0
    %s1661 = scalar_lea.vmem %s8, 48
    %v1662 = vld [vmem:[%s1661] sm:$0xf]
    %v1663 = vld [vmem:[%s1661 + $0x4] sm:$0xf]
    %v1664 = vld [vmem:[%s1661 + $0x8] sm:$0xf]
    %v1665 = vld [vmem:[%s1661 + $0xc] sm:$0xf]
    %s1666 = scalar_lea.vmem %s9, 3
    %v1667 = vld [vmem:[%s1666] sm:$0x1]
    %v1669 = vlaneseq
    %v1670 = vshrl.u32 %v1669, 7
    %v1671 = vsub.s32 0, %v1670
    %v1672 = vrot.slane %v1667, %v1671
    %v1678 = vunpack.c.l.b16 %v1662
    %v1679 = vunpack.c.l.b16 %v1663
    %v1680 = vunpack.c.l.b16 %v1664
    %v1681 = vunpack.c.l.b16 %v1665
    %v1682 = vpack.c.b16 %v1679, %v1678
    %v1683 = vpack.c.b16 %v1681, %v1680
    %1686 = vmatprep.subr.bf16.mxu0 0
    %1687 = vmatpush1.bf16.msra.mxu0 %v1682
    %1688 = vmatprep.subr.bf16.mxu0 0
    %1689 = vmatpush1.bf16.msra.mxu0 %v1683
    %1690 = vmatprep.subr.bf16.mxu0 0
    %1691 = vmatpush1.bf16.msra.mxu0 0
    %1692 = vmatprep.subr.bf16.mxu0 0
    %1693 = vmatpush1.bf16.msra.mxu0 0
    %1694 = vmatprep.subr.bf16.mxu0 0
    %1695 = vmatpush1.bf16.msra.mxu0 0
    %1696 = vmatprep.subr.bf16.mxu0 0
    %1697 = vmatpush1.bf16.msra.mxu0 0
    %1698 = vmatprep.subr.bf16.mxu0 0
    %1699 = vmatpush1.bf16.msra.mxu0 0
    %1700 = vmatprep.subr.bf16.mxu0 0
    %1701 = vmatpush1.bf16.msra.mxu0 0
    %1702 = vmatprep.subr.bf16.mxu0 0
    %1703 = vmatpush1.bf16.msra.mxu0 0
    %1704 = vmatprep.subr.bf16.mxu0 0
    %1705 = vmatpush1.bf16.msra.mxu0 0
    %1706 = vmatprep.subr.bf16.mxu0 0
    %1707 = vmatpush1.bf16.msra.mxu0 0
    %1708 = vmatprep.subr.bf16.mxu0 0
    %1709 = vmatpush1.bf16.msra.mxu0 0
    %1710 = vmatprep.subr.bf16.mxu0 0
    %1711 = vmatpush1.bf16.msra.mxu0 0
    %1712 = vmatprep.subr.bf16.mxu0 0
    %1713 = vmatpush1.bf16.msra.mxu0 0
    %1714 = vmatprep.subr.bf16.mxu0 0
    %1715 = vmatpush1.bf16.msra.mxu0 0
    %1716 = vmatprep.subr.bf16.mxu0 0
    %1717 = vmatpush1.bf16.msra.mxu0 0
    %1718 = vmatprep.mubr.bf16.mxu0 0
    %1719 = vmatmul.mubr.bf16.gmra.mrb[0].mxu0 %v161
    %v1720 = vpop.f32.mrb[0].mxu0
    %v1721 = vadd.f32 %v1672, %v1720
    %v1722 = vpop.f32.mrb[0].mxu0
    %v1723 = vpop.f32.mrb[0].mxu0
    %v1724 = vadd.f32 %v1672, %v1723
    %v1725 = vpop.f32.mrb[0].mxu0
    %1726 = vdwg.mxu0
    %v1727 = vpack.c.bf16 %v1589, %v1589
    %v1728 = vpack.c.bf16 %v1592, %v1592
    %v1729 = vpack.c.bf16 %v1655, %v1655
    %v1730 = vpack.c.bf16 %v1658, %v1658
    %v1732 = vsel %vm336, %v1727, 0
    %v1735 = vsel %vm336, %v1729, 0
    %1737 = vmatprep.subr.bf16.mxu0 0
    %1738 = vmatpush1.bf16.xpose.msra.mxu0 %v1735
    %1739 = vmatprep.subr.bf16.mxu0 0
    %1740 = vmatpush1.bf16.xpose.msra.mxu0 0
    %1741 = vmatprep.subr.bf16.mxu0 0
    %1742 = vmatpush1.bf16.xpose.msra.mxu0 0
    %1743 = vmatprep.subr.bf16.mxu0 0
    %1744 = vmatpush1.bf16.xpose.msra.mxu0 0
    %1745 = vmatprep.subr.bf16.mxu0 0
    %1746 = vmatpush1.bf16.xpose.msra.mxu0 0
    %1747 = vmatprep.subr.bf16.mxu0 0
    %1748 = vmatpush1.bf16.xpose.msra.mxu0 0
    %1749 = vmatprep.subr.bf16.mxu0 0
    %1750 = vmatpush1.bf16.xpose.msra.mxu0 0
    %1751 = vmatprep.subr.bf16.mxu0 0
    %1752 = vmatpush1.bf16.xpose.msra.mxu0 0
    %1753 = vmatprep.subr.bf16.mxu0 0
    %1754 = vmatpush1.bf16.xpose.msra.mxu0 0
    %1755 = vmatprep.subr.bf16.mxu0 0
    %1756 = vmatpush1.bf16.xpose.msra.mxu0 0
    %1757 = vmatprep.subr.bf16.mxu0 0
    %1758 = vmatpush1.bf16.xpose.msra.mxu0 0
    %1759 = vmatprep.subr.bf16.mxu0 0
    %1760 = vmatpush1.bf16.xpose.msra.mxu0 0
    %1761 = vmatprep.subr.bf16.mxu0 0
    %1762 = vmatpush1.bf16.xpose.msra.mxu0 0
    %1763 = vmatprep.subr.bf16.mxu0 0
    %1764 = vmatpush1.bf16.xpose.msra.mxu0 0
    %1765 = vmatprep.subr.bf16.mxu0 0
    %1766 = vmatpush1.bf16.xpose.msra.mxu0 0
    %1767 = vmatprep.subr.bf16.mxu0 0
    %1768 = vmatpush1.bf16.xpose.msra.mxu0 0
    %1769 = vmatprep.mubr.bf16.mxu0 0
    %1770 = vmatmul.mubr.bf16.gmra.mrb[0].mxu0 %v1732
    %v1771 = vpop.f32.mrb[0].mxu0
    %v1772 = vadd.f32 0.0, %v1771
    %v1773 = vpop.f32.mrb[0].mxu0
    %v1774 = vpop.f32.mrb[0].mxu0
    %v1775 = vpop.f32.mrb[0].mxu0
    %1776 = vdwg.mxu0
    %v1778 = vsel %vm336, %v1728, 0
    %v1781 = vsel %vm336, %v1730, 0
    %1783 = vmatprep.subr.bf16.mxu0 0
    %1784 = vmatpush1.bf16.xpose.msra.mxu0 %v1781
    %1785 = vmatprep.subr.bf16.mxu0 0
    %1786 = vmatpush1.bf16.xpose.msra.mxu0 0
    %1787 = vmatprep.subr.bf16.mxu0 0
    %1788 = vmatpush1.bf16.xpose.msra.mxu0 0
    %1789 = vmatprep.subr.bf16.mxu0 0
    %1790 = vmatpush1.bf16.xpose.msra.mxu0 0
    %1791 = vmatprep.subr.bf16.mxu0 0
    %1792 = vmatpush1.bf16.xpose.msra.mxu0 0
    %1793 = vmatprep.subr.bf16.mxu0 0
    %1794 = vmatpush1.bf16.xpose.msra.mxu0 0
    %1795 = vmatprep.subr.bf16.mxu0 0
    %1796 = vmatpush1.bf16.xpose.msra.mxu0 0
    %1797 = vmatprep.subr.bf16.mxu0 0
    %1798 = vmatpush1.bf16.xpose.msra.mxu0 0
    %1799 = vmatprep.subr.bf16.mxu0 0
    %1800 = vmatpush1.bf16.xpose.msra.mxu0 0
    %1801 = vmatprep.subr.bf16.mxu0 0
    %1802 = vmatpush1.bf16.xpose.msra.mxu0 0
    %1803 = vmatprep.subr.bf16.mxu0 0
    %1804 = vmatpush1.bf16.xpose.msra.mxu0 0
    %1805 = vmatprep.subr.bf16.mxu0 0
    %1806 = vmatpush1.bf16.xpose.msra.mxu0 0
    %1807 = vmatprep.subr.bf16.mxu0 0
    %1808 = vmatpush1.bf16.xpose.msra.mxu0 0
    %1809 = vmatprep.subr.bf16.mxu0 0
    %1810 = vmatpush1.bf16.xpose.msra.mxu0 0
    %1811 = vmatprep.subr.bf16.mxu0 0
    %1812 = vmatpush1.bf16.xpose.msra.mxu0 0
    %1813 = vmatprep.subr.bf16.mxu0 0
    %1814 = vmatpush1.bf16.xpose.msra.mxu0 0
    %1815 = vmatprep.mubr.bf16.mxu0 0
    %1816 = vmatmul.mubr.bf16.gmra.mrb[0].mxu0 %v1778
    %v1817 = vpop.f32.mrb[0].mxu0
    %v1818 = vadd.f32 0.0, %v1817
    %v1819 = vpop.f32.mrb[0].mxu0
    %v1820 = vpop.f32.mrb[0].mxu0
    %v1821 = vpop.f32.mrb[0].mxu0
    %1822 = vdwg.mxu0
    %v1823 = vmul.f32 %v1772, 0.35355338
    %v1824 = vmul.f32 %v1818, 0.35355338
    %v1825 = vsel %vm336, %v1823, -inf
    %1826 = vmax.xlane.f32.xlu0 %v1825
    %v1827 = vpop.xlane.xlu0 %1826
    %v1828 = vsel %vm336, %v1824, -inf
    %1829 = vmax.xlane.f32.xlu0 %v1828
    %v1830 = vpop.xlane.xlu0 %1829
    %v1831 = vsub.f32 %v1823, %v1827
    %v1832 = vsub.f32 %v1824, %v1830
    %v1833 = vmul.f32 %v1831, 1.442695
    %v1834 = vpow.pop %v1833
    %v1835 = vmul.f32 %v1832, 1.442695
    %v1836 = vpow.pop %v1835
    %v1837 = vsel %vm336, %v1834, 0.0
    %1838 = vadd.xlane.f32.xlu0 %v1837
    %v1839 = vpop.xlane.xlu0 %1838
    %v1840 = vsel %vm336, %v1836, 0.0
    %1841 = vadd.xlane.f32.xlu0 %v1840
    %v1842 = vpop.xlane.xlu0 %1841
    %v1843 = vrcp.pop %v1839
    %v1844 = vrcp.pop %v1842
    %v1845 = vmul.f32 %v1834, %v1843
    %v1846 = vmul.f32 %v1836, %v1844
    %v1847 = vpack.c.bf16 %v1845, %v1845
    %v1848 = vpack.c.bf16 %v1846, %v1846
    %v1849 = vpack.c.bf16 %v1721, %v1721
    %v1850 = vpack.c.bf16 %v1724, %v1724
    %v1852 = vsel %vm336, %v1847, 0
    %v1855 = vsel %vm460, %v1849, 0
    %1857 = vmatprep.subr.bf16.mxu0 0
    %1858 = vmatpush1.bf16.msra.mxu0 %v1855
    %1859 = vmatprep.subr.bf16.mxu0 0
    %1860 = vmatpush1.bf16.msra.mxu0 0
    %1861 = vmatprep.subr.bf16.mxu0 0
    %1862 = vmatpush1.bf16.msra.mxu0 0
    %1863 = vmatprep.subr.bf16.mxu0 0
    %1864 = vmatpush1.bf16.msra.mxu0 0
    %1865 = vmatprep.subr.bf16.mxu0 0
    %1866 = vmatpush1.bf16.msra.mxu0 0
    %1867 = vmatprep.subr.bf16.mxu0 0
    %1868 = vmatpush1.bf16.msra.mxu0 0
    %1869 = vmatprep.subr.bf16.mxu0 0
    %1870 = vmatpush1.bf16.msra.mxu0 0
    %1871 = vmatprep.subr.bf16.mxu0 0
    %1872 = vmatpush1.bf16.msra.mxu0 0
    %1873 = vmatprep.subr.bf16.mxu0 0
    %1874 = vmatpush1.bf16.msra.mxu0 0
    %1875 = vmatprep.subr.bf16.mxu0 0
    %1876 = vmatpush1.bf16.msra.mxu0 0
    %1877 = vmatprep.subr.bf16.mxu0 0
    %1878 = vmatpush1.bf16.msra.mxu0 0
    %1879 = vmatprep.subr.bf16.mxu0 0
    %1880 = vmatpush1.bf16.msra.mxu0 0
    %1881 = vmatprep.subr.bf16.mxu0 0
    %1882 = vmatpush1.bf16.msra.mxu0 0
    %1883 = vmatprep.subr.bf16.mxu0 0
    %1884 = vmatpush1.bf16.msra.mxu0 0
    %1885 = vmatprep.subr.bf16.mxu0 0
    %1886 = vmatpush1.bf16.msra.mxu0 0
    %1887 = vmatprep.subr.bf16.mxu0 0
    %1888 = vmatpush1.bf16.msra.mxu0 0
    %1889 = vmatprep.mubr.bf16.mxu0 0
    %1890 = vmatmul.mubr.bf16.gmra.mrb[0].mxu0 %v1852
    %v1891 = vpop.f32.mrb[0].mxu0
    %v1892 = vadd.f32 0.0, %v1891
    %v1893 = vpop.f32.mrb[0].mxu0
    %v1894 = vpop.f32.mrb[0].mxu0
    %v1895 = vpop.f32.mrb[0].mxu0
    %1896 = vdwg.mxu0
    %v1898 = vsel %vm336, %v1848, 0
    %v1901 = vsel %vm460, %v1850, 0
    %1903 = vmatprep.subr.bf16.mxu0 0
    %1904 = vmatpush1.bf16.msra.mxu0 %v1901
    %1905 = vmatprep.subr.bf16.mxu0 0
    %1906 = vmatpush1.bf16.msra.mxu0 0
    %1907 = vmatprep.subr.bf16.mxu0 0
    %1908 = vmatpush1.bf16.msra.mxu0 0
    %1909 = vmatprep.subr.bf16.mxu0 0
    %1910 = vmatpush1.bf16.msra.mxu0 0
    %1911 = vmatprep.subr.bf16.mxu0 0
    %1912 = vmatpush1.bf16.msra.mxu0 0
    %1913 = vmatprep.subr.bf16.mxu0 0
    %1914 = vmatpush1.bf16.msra.mxu0 0
    %1915 = vmatprep.subr.bf16.mxu0 0
    %1916 = vmatpush1.bf16.msra.mxu0 0
    %1917 = vmatprep.subr.bf16.mxu0 0
    %1918 = vmatpush1.bf16.msra.mxu0 0
    %1919 = vmatprep.subr.bf16.mxu0 0
    %1920 = vmatpush1.bf16.msra.mxu0 0
    %1921 = vmatprep.subr.bf16.mxu0 0
    %1922 = vmatpush1.bf16.msra.mxu0 0
    %1923 = vmatprep.subr.bf16.mxu0 0
    %1924 = vmatpush1.bf16.msra.mxu0 0
    %1925 = vmatprep.subr.bf16.mxu0 0
    %1926 = vmatpush1.bf16.msra.mxu0 0
    %1927 = vmatprep.subr.bf16.mxu0 0
    %1928 = vmatpush1.bf16.msra.mxu0 0
    %1929 = vmatprep.subr.bf16.mxu0 0
    %1930 = vmatpush1.bf16.msra.mxu0 0
    %1931 = vmatprep.subr.bf16.mxu0 0
    %1932 = vmatpush1.bf16.msra.mxu0 0
    %1933 = vmatprep.subr.bf16.mxu0 0
    %1934 = vmatpush1.bf16.msra.mxu0 0
    %1935 = vmatprep.mubr.bf16.mxu0 0
    %1936 = vmatmul.mubr.bf16.gmra.mrb[0].mxu0 %v1898
    %v1937 = vpop.f32.mrb[0].mxu0
    %v1938 = vadd.f32 0.0, %v1937
    %v1939 = vpop.f32.mrb[0].mxu0
    %v1940 = vpop.f32.mrb[0].mxu0
    %v1941 = vpop.f32.mrb[0].mxu0
    %1942 = vdwg.mxu0
    %v1943 = vpack.c.bf16 %v1938, %v1892
    %s1944 = scalar_lea.vmem %s10, 12
    %v1945 = vld [vmem:[%s1944] sm:$0xf]
    %v1947 = vsel %vm336, %v1943, 0
    %v1950 = vsel %vm460, %v1945, 0
    %1952 = vmatprep.subr.bf16.mxu0 0
    %1953 = vmatpush1.bf16.msra.mxu0 %v1950
    %1954 = vmatprep.subr.bf16.mxu0 0
    %1955 = vmatpush1.bf16.msra.mxu0 0
    %1956 = vmatprep.subr.bf16.mxu0 0
    %1957 = vmatpush1.bf16.msra.mxu0 0
    %1958 = vmatprep.subr.bf16.mxu0 0
    %1959 = vmatpush1.bf16.msra.mxu0 0
    %1960 = vmatprep.subr.bf16.mxu0 0
    %1961 = vmatpush1.bf16.msra.mxu0 0
    %1962 = vmatprep.subr.bf16.mxu0 0
    %1963 = vmatpush1.bf16.msra.mxu0 0
    %1964 = vmatprep.subr.bf16.mxu0 0
    %1965 = vmatpush1.bf16.msra.mxu0 0
    %1966 = vmatprep.subr.bf16.mxu0 0
    %1967 = vmatpush1.bf16.msra.mxu0 0
    %1968 = vmatprep.subr.bf16.mxu0 0
    %1969 = vmatpush1.bf16.msra.mxu0 0
    %1970 = vmatprep.subr.bf16.mxu0 0
    %1971 = vmatpush1.bf16.msra.mxu0 0
    %1972 = vmatprep.subr.bf16.mxu0 0
    %1973 = vmatpush1.bf16.msra.mxu0 0
    %1974 = vmatprep.subr.bf16.mxu0 0
    %1975 = vmatpush1.bf16.msra.mxu0 0
    %1976 = vmatprep.subr.bf16.mxu0 0
    %1977 = vmatpush1.bf16.msra.mxu0 0
    %1978 = vmatprep.subr.bf16.mxu0 0
    %1979 = vmatpush1.bf16.msra.mxu0 0
    %1980 = vmatprep.subr.bf16.mxu0 0
    %1981 = vmatpush1.bf16.msra.mxu0 0
    %1982 = vmatprep.subr.bf16.mxu0 0
    %1983 = vmatpush1.bf16.msra.mxu0 0
    %1984 = vmatprep.mubr.bf16.mxu0 0
    %1985 = vmatmul.mubr.bf16.gmra.mrb[0].mxu0 %v1947
    %v1986 = vpop.f32.mrb[0].mxu0
    %v1987 = vadd.f32 0.0, %v1986
    %v1988 = vpop.f32.mrb[0].mxu0
    %v1989 = vpop.f32.mrb[0].mxu0
    %v1990 = vadd.f32 0.0, %v1989
    %v1991 = vpop.f32.mrb[0].mxu0
    %1992 = vdwg.mxu0
    %v1993 = vadd.f32 %v1527, %v1987
    %v1994 = vadd.f32 %v1528, %v1990
    %v1995 = vld [vmem:[%s11] sm:$0x1]
    %v1997 = vlaneseq
    %v1998 = vshrl.u32 %v1997, 7
    %v1999 = vsub.s32 0, %v1998
    %v2000 = vrot.slane %v1995, %v1999
    %v2002 = vadd.f32 %v1993, %v2000
    %v2003 = vadd.f32 %v1994, %v2000
    %v2004 = vadd.f32 %v2002, %v134
    %v2005 = vadd.f32 %v2003, %v135
    %v2006 = vld [vmem:[%s12] sm:$0x1]
    %v2007 = vld [vmem:[%s13] sm:$0x1]
    %v2008 = vsel %vm92, %v2004, 0.0
    %2009 = vadd.xlane.f32.xlu0 %v2008
    %v2010 = vpop.xlane.xlu0 %2009
    %v2011 = vsel %vm92, %v2005, 0.0
    %2012 = vadd.xlane.f32.xlu0 %v2011
    %v2013 = vpop.xlane.xlu0 %2012
    %v2014 = vmul.f32 %v2010, %v99
    %v2015 = vmul.f32 %v2013, %v99
    %v2016 = vsub.f32 %v2004, %v2014
    %v2017 = vsub.f32 %v2005, %v2015
    %v2018 = vmul.f32 %v2016, %v2016
    %v2019 = vmul.f32 %v2017, %v2017
    %v2020 = vsel %vm92, %v2018, 0.0
    %2021 = vadd.xlane.f32.xlu0 %v2020
    %v2022 = vpop.xlane.xlu0 %2021
    %v2023 = vsel %vm92, %v2019, 0.0
    %2024 = vadd.xlane.f32.xlu0 %v2023
    %v2025 = vpop.xlane.xlu0 %2024
    %v2026 = vmul.f32 %v2022, %v99
    %v2027 = vmul.f32 %v2025, %v99
    %v2028 = vadd.f32 %v2026, 1e-12
    %v2029 = vadd.f32 %v2027, 1e-12
    %v2030 = vrsqrt.pop %v2028
    %v2031 = vrsqrt.pop %v2029
    %v2032 = vmul.f32 %v2016, %v2030
    %v2033 = vmul.f32 %v2017, %v2031
    %v2035 = vlaneseq
    %v2036 = vshrl.u32 %v2035, 7
    %v2037 = vsub.s32 0, %v2036
    %v2038 = vrot.slane %v2006, %v2037
    %v2040 = vmul.f32 %v2032, %v2038
    %v2041 = vmul.f32 %v2033, %v2038
    %v2043 = vlaneseq
    %v2044 = vshrl.u32 %v2043, 7
    %v2045 = vsub.s32 0, %v2044
    %v2046 = vrot.slane %v2007, %v2045
    %v2048 = vadd.f32 %v2040, %v2046
    %v2049 = vadd.f32 %v2041, %v2046
    %v2050 = vpack.c.bf16 %v2049, %v2048
    %v2051 = vld [vmem:[%s14] sm:$0xf]
    %v2052 = vld [vmem:[%s14 + $0x4] sm:$0xf]
    %v2053 = vld [vmem:[%s14 + $0x8] sm:$0xf]
    %v2054 = vld [vmem:[%s14 + $0xc] sm:$0xf]
    %v2055 = vld [vmem:[%s15] sm:$0x1]
    %v2057 = vlaneseq
    %v2058 = vshrl.u32 %v2057, 7
    %v2059 = vsub.s32 0, %v2058
    %v2060 = vrot.slane %v2055, %v2059
    %v2066 = vunpack.c.l.b16 %v2051
    %v2067 = vunpack.c.l.b16 %v2052
    %v2068 = vunpack.c.l.b16 %v2053
    %v2069 = vunpack.c.l.b16 %v2054
    %v2070 = vpack.c.b16 %v2067, %v2066
    %v2071 = vpack.c.b16 %v2069, %v2068
    %v2075 = vsel %vm92, %v2050, 0
    %2077 = vmatprep.subr.bf16.mxu0 0
    %2078 = vmatpush1.bf16.msra.mxu0 %v2070
    %2079 = vmatprep.subr.bf16.mxu0 0
    %2080 = vmatpush1.bf16.msra.mxu0 %v2071
    %2081 = vmatprep.subr.bf16.mxu0 0
    %2082 = vmatpush1.bf16.msra.mxu0 0
    %2083 = vmatprep.subr.bf16.mxu0 0
    %2084 = vmatpush1.bf16.msra.mxu0 0
    %2085 = vmatprep.subr.bf16.mxu0 0
    %2086 = vmatpush1.bf16.msra.mxu0 0
    %2087 = vmatprep.subr.bf16.mxu0 0
    %2088 = vmatpush1.bf16.msra.mxu0 0
    %2089 = vmatprep.subr.bf16.mxu0 0
    %2090 = vmatpush1.bf16.msra.mxu0 0
    %2091 = vmatprep.subr.bf16.mxu0 0
    %2092 = vmatpush1.bf16.msra.mxu0 0
    %2093 = vmatprep.subr.bf16.mxu0 0
    %2094 = vmatpush1.bf16.msra.mxu0 0
    %2095 = vmatprep.subr.bf16.mxu0 0
    %2096 = vmatpush1.bf16.msra.mxu0 0
    %2097 = vmatprep.subr.bf16.mxu0 0
    %2098 = vmatpush1.bf16.msra.mxu0 0
    %2099 = vmatprep.subr.bf16.mxu0 0
    %2100 = vmatpush1.bf16.msra.mxu0 0
    %2101 = vmatprep.subr.bf16.mxu0 0
    %2102 = vmatpush1.bf16.msra.mxu0 0
    %2103 = vmatprep.subr.bf16.mxu0 0
    %2104 = vmatpush1.bf16.msra.mxu0 0
    %2105 = vmatprep.subr.bf16.mxu0 0
    %2106 = vmatpush1.bf16.msra.mxu0 0
    %2107 = vmatprep.subr.bf16.mxu0 0
    %2108 = vmatpush1.bf16.msra.mxu0 0
    %2109 = vmatprep.mubr.bf16.mxu0 0
    %2110 = vmatmul.mubr.bf16.gmra.mrb[0].mxu0 %v2075
    %v2111 = vpop.f32.mrb[0].mxu0
    %v2112 = vadd.f32 %v2060, %v2111
    %v2113 = vpop.f32.mrb[0].mxu0
    %v2114 = vpop.f32.mrb[0].mxu0
    %v2115 = vadd.f32 %v2060, %v2114
    %v2116 = vpop.f32.mrb[0].mxu0
    %2117 = vdwg.mxu0
    %v2118 = vmul.f32 %v2112, 0.5
    %v2119 = vmul.f32 %v2115, 0.5
    %v2120 = vmul.f32 %v2112, 0.044715
    %v2121 = vmul.f32 %v2115, 0.044715
    %v2122 = vmul.f32 %v2120, %v2112
    %v2123 = vmul.f32 %v2121, %v2115
    %v2124 = vmul.f32 %v2122, %v2112
    %v2125 = vmul.f32 %v2123, %v2115
    %v2126 = vadd.f32 %v2112, %v2124
    %v2127 = vadd.f32 %v2115, %v2125
    %v2128 = vmul.f32 %v2126, 0.7978846
    %v2129 = vmul.f32 %v2127, 0.7978846
    %v2130 = vtanh.pop %v2128
    %v2131 = vtanh.pop %v2129
    %v2132 = vadd.f32 %v2130, 1.0
    %v2133 = vadd.f32 %v2131, 1.0
    %v2134 = vmul.f32 %v2118, %v2132
    %v2135 = vmul.f32 %v2119, %v2133
    %v2136 = vpack.c.bf16 %v2135, %v2134
    %v2137 = vld [vmem:[%s16] sm:$0xf]
    %v2138 = vld [vmem:[%s16 + $0x4] sm:$0xf]
    %v2139 = vld [vmem:[%s16 + $0x8] sm:$0xf]
    %v2140 = vld [vmem:[%s16 + $0xc] sm:$0xf]
    %v2141 = vld [vmem:[%s16 + $0x10] sm:$0xf]
    %v2142 = vld [vmem:[%s16 + $0x14] sm:$0xf]
    %v2143 = vld [vmem:[%s16 + $0x18] sm:$0xf]
    %v2144 = vld [vmem:[%s16 + $0x1c] sm:$0xf]
    %v2145 = vld [vmem:[%s17] sm:$0x1]
    %v2147 = vlaneseq
    %v2148 = vshrl.u32 %v2147, 7
    %v2149 = vsub.s32 0, %v2148
    %v2150 = vrot.slane %v2145, %v2149
    %v2160 = vunpack.c.l.b16 %v2137
    %v2161 = vunpack.c.l.b16 %v2138
    %v2162 = vunpack.c.l.b16 %v2139
    %v2163 = vunpack.c.l.b16 %v2140
    %v2164 = vunpack.c.l.b16 %v2141
    %v2165 = vunpack.c.l.b16 %v2142
    %v2166 = vunpack.c.l.b16 %v2143
    %v2167 = vunpack.c.l.b16 %v2144
    %v2168 = vpack.c.b16 %v2161, %v2160
    %v2169 = vpack.c.b16 %v2163, %v2162
    %v2170 = vpack.c.b16 %v2165, %v2164
    %v2171 = vpack.c.b16 %v2167, %v2166
    %vm2176 = vcmask 523264
    %v2178 = vsel %vm2176, %v2136, 0
    %2180 = vmatprep.subr.bf16.mxu0 0
    %2181 = vmatpush1.bf16.msra.mxu0 %v2168
    %2182 = vmatprep.subr.bf16.mxu0 0
    %2183 = vmatpush1.bf16.msra.mxu0 %v2169
    %2184 = vmatprep.subr.bf16.mxu0 0
    %2185 = vmatpush1.bf16.msra.mxu0 %v2170
    %2186 = vmatprep.subr.bf16.mxu0 0
    %2187 = vmatpush1.bf16.msra.mxu0 %v2171
    %2188 = vmatprep.subr.bf16.mxu0 0
    %2189 = vmatpush1.bf16.msra.mxu0 0
    %2190 = vmatprep.subr.bf16.mxu0 0
    %2191 = vmatpush1.bf16.msra.mxu0 0
    %2192 = vmatprep.subr.bf16.mxu0 0
    %2193 = vmatpush1.bf16.msra.mxu0 0
    %2194 = vmatprep.subr.bf16.mxu0 0
    %2195 = vmatpush1.bf16.msra.mxu0 0
    %2196 = vmatprep.subr.bf16.mxu0 0
    %2197 = vmatpush1.bf16.msra.mxu0 0
    %2198 = vmatprep.subr.bf16.mxu0 0
    %2199 = vmatpush1.bf16.msra.mxu0 0
    %2200 = vmatprep.subr.bf16.mxu0 0
    %2201 = vmatpush1.bf16.msra.mxu0 0
    %2202 = vmatprep.subr.bf16.mxu0 0
    %2203 = vmatpush1.bf16.msra.mxu0 0
    %2204 = vmatprep.subr.bf16.mxu0 0
    %2205 = vmatpush1.bf16.msra.mxu0 0
    %2206 = vmatprep.subr.bf16.mxu0 0
    %2207 = vmatpush1.bf16.msra.mxu0 0
    %2208 = vmatprep.subr.bf16.mxu0 0
    %2209 = vmatpush1.bf16.msra.mxu0 0
    %2210 = vmatprep.subr.bf16.mxu0 0
    %2211 = vmatpush1.bf16.msra.mxu0 0
    %2212 = vmatprep.mubr.bf16.mxu0 0
    %2213 = vmatmul.mubr.bf16.gmra.mrb[0].mxu0 %v2178
    %v2214 = vpop.f32.mrb[0].mxu0
    %v2215 = vadd.f32 %v2150, %v2214
    %v2216 = vpop.f32.mrb[0].mxu0
    %v2217 = vpop.f32.mrb[0].mxu0
    %v2218 = vadd.f32 %v2150, %v2217
    %v2219 = vpop.f32.mrb[0].mxu0
    %2220 = vdwg.mxu0
    %v2221 = vadd.f32 %v2215, %v2048
    %v2222 = vadd.f32 %v2218, %v2049
    %v2223 = vld [vmem:[%s18] sm:$0x1]
    %v2224 = vld [vmem:[%s19] sm:$0x1]
    %v2225 = vsel %vm92, %v2221, 0.0
    %2226 = vadd.xlane.f32.xlu0 %v2225
    %v2227 = vpop.xlane.xlu0 %2226
    %v2228 = vsel %vm92, %v2222, 0.0
    %2229 = vadd.xlane.f32.xlu0 %v2228
    %v2230 = vpop.xlane.xlu0 %2229
    %v2231 = vmul.f32 %v2227, %v99
    %v2232 = vmul.f32 %v2230, %v99
    %v2233 = vsub.f32 %v2221, %v2231
    %v2234 = vsub.f32 %v2222, %v2232
    %v2235 = vmul.f32 %v2233, %v2233
    %v2236 = vmul.f32 %v2234, %v2234
    %v2237 = vsel %vm92, %v2235, 0.0
    %2238 = vadd.xlane.f32.xlu0 %v2237
    %v2239 = vpop.xlane.xlu0 %2238
    %v2240 = vsel %vm92, %v2236, 0.0
    %2241 = vadd.xlane.f32.xlu0 %v2240
    %v2242 = vpop.xlane.xlu0 %2241
    %v2243 = vmul.f32 %v2239, %v99
    %v2244 = vmul.f32 %v2242, %v99
    %v2245 = vadd.f32 %v2243, 1e-12
    %v2246 = vadd.f32 %v2244, 1e-12
    %v2247 = vrsqrt.pop %v2245
    %v2248 = vrsqrt.pop %v2246
    %v2249 = vmul.f32 %v2233, %v2247
    %v2250 = vmul.f32 %v2234, %v2248
    %v2252 = vlaneseq
    %v2253 = vshrl.u32 %v2252, 7
    %v2254 = vsub.s32 0, %v2253
    %v2255 = vrot.slane %v2223, %v2254
    %v2257 = vmul.f32 %v2249, %v2255
    %v2258 = vmul.f32 %v2250, %v2255
    %v2260 = vlaneseq
    %v2261 = vshrl.u32 %v2260, 7
    %v2262 = vsub.s32 0, %v2261
    %v2263 = vrot.slane %v2224, %v2262
    %v2265 = vadd.f32 %v2257, %v2263
    %v2266 = vadd.f32 %v2258, %v2263
    %v2267 = vpack.c.bf16 %v2266, %v2265
    %s2268 = scalar_lea.vmem %s4, 64
    %v2269 = vld [vmem:[%s2268] sm:$0xf]
    %v2270 = vld [vmem:[%s2268 + $0x4] sm:$0xf]
    %v2271 = vld [vmem:[%s2268 + $0x8] sm:$0xf]
    %v2272 = vld [vmem:[%s2268 + $0xc] sm:$0xf]
    %s2273 = scalar_lea.vmem %s5, 4
    %v2274 = vld [vmem:[%s2273] sm:$0x1]
    %v2276 = vlaneseq
    %v2277 = vshrl.u32 %v2276, 7
    %v2278 = vsub.s32 0, %v2277
    %v2279 = vrot.slane %v2274, %v2278
    %v2285 = vunpack.c.l.b16 %v2269
    %v2286 = vunpack.c.l.b16 %v2270
    %v2287 = vunpack.c.l.b16 %v2271
    %v2288 = vunpack.c.l.b16 %v2272
    %v2289 = vpack.c.b16 %v2286, %v2285
    %v2290 = vpack.c.b16 %v2288, %v2287
    %v2294 = vsel %vm92, %v2267, 0
    %2296 = vmatprep.subr.bf16.mxu0 0
    %2297 = vmatpush1.bf16.msra.mxu0 %v2289
    %2298 = vmatprep.subr.bf16.mxu0 0
    %2299 = vmatpush1.bf16.msra.mxu0 %v2290
    %2300 = vmatprep.subr.bf16.mxu0 0
    %2301 = vmatpush1.bf16.msra.mxu0 0
    %2302 = vmatprep.subr.bf16.mxu0 0
    %2303 = vmatpush1.bf16.msra.mxu0 0
    %2304 = vmatprep.subr.bf16.mxu0 0
    %2305 = vmatpush1.bf16.msra.mxu0 0
    %2306 = vmatprep.subr.bf16.mxu0 0
    %2307 = vmatpush1.bf16.msra.mxu0 0
    %2308 = vmatprep.subr.bf16.mxu0 0
    %2309 = vmatpush1.bf16.msra.mxu0 0
    %2310 = vmatprep.subr.bf16.mxu0 0
    %2311 = vmatpush1.bf16.msra.mxu0 0
    %2312 = vmatprep.subr.bf16.mxu0 0
    %2313 = vmatpush1.bf16.msra.mxu0 0
    %2314 = vmatprep.subr.bf16.mxu0 0
    %2315 = vmatpush1.bf16.msra.mxu0 0
    %2316 = vmatprep.subr.bf16.mxu0 0
    %2317 = vmatpush1.bf16.msra.mxu0 0
    %2318 = vmatprep.subr.bf16.mxu0 0
    %2319 = vmatpush1.bf16.msra.mxu0 0
    %2320 = vmatprep.subr.bf16.mxu0 0
    %2321 = vmatpush1.bf16.msra.mxu0 0
    %2322 = vmatprep.subr.bf16.mxu0 0
    %2323 = vmatpush1.bf16.msra.mxu0 0
    %2324 = vmatprep.subr.bf16.mxu0 0
    %2325 = vmatpush1.bf16.msra.mxu0 0
    %2326 = vmatprep.subr.bf16.mxu0 0
    %2327 = vmatpush1.bf16.msra.mxu0 0
    %2328 = vmatprep.mubr.bf16.mxu0 0
    %2329 = vmatmul.mubr.bf16.gmra.mrb[0].mxu0 %v2294
    %v2330 = vpop.f32.mrb[0].mxu0
    %v2331 = vadd.f32 %v2279, %v2330
    %v2332 = vpop.f32.mrb[0].mxu0
    %v2333 = vpop.f32.mrb[0].mxu0
    %v2334 = vadd.f32 %v2279, %v2333
    %v2335 = vpop.f32.mrb[0].mxu0
    %2336 = vdwg.mxu0
    %s2337 = scalar_lea.vmem %s6, 64
    %v2338 = vld [vmem:[%s2337] sm:$0xf]
    %v2339 = vld [vmem:[%s2337 + $0x4] sm:$0xf]
    %v2340 = vld [vmem:[%s2337 + $0x8] sm:$0xf]
    %v2341 = vld [vmem:[%s2337 + $0xc] sm:$0xf]
    %s2342 = scalar_lea.vmem %s7, 4
    %v2343 = vld [vmem:[%s2342] sm:$0x1]
    %v2345 = vlaneseq
    %v2346 = vshrl.u32 %v2345, 7
    %v2347 = vsub.s32 0, %v2346
    %v2348 = vrot.slane %v2343, %v2347
    %v2354 = vunpack.c.l.b16 %v2338
    %v2355 = vunpack.c.l.b16 %v2339
    %v2356 = vunpack.c.l.b16 %v2340
    %v2357 = vunpack.c.l.b16 %v2341
    %v2358 = vpack.c.b16 %v2355, %v2354
    %v2359 = vpack.c.b16 %v2357, %v2356
    %2362 = vmatprep.subr.bf16.mxu0 0
    %2363 = vmatpush1.bf16.msra.mxu0 %v2358
    %2364 = vmatprep.subr.bf16.mxu0 0
    %2365 = vmatpush1.bf16.msra.mxu0 %v2359
    %2366 = vmatprep.subr.bf16.mxu0 0
    %2367 = vmatpush1.bf16.msra.mxu0 0
    %2368 = vmatprep.subr.bf16.mxu0 0
    %2369 = vmatpush1.bf16.msra.mxu0 0
    %2370 = vmatprep.subr.bf16.mxu0 0
    %2371 = vmatpush1.bf16.msra.mxu0 0
    %2372 = vmatprep.subr.bf16.mxu0 0
    %2373 = vmatpush1.bf16.msra.mxu0 0
    %2374 = vmatprep.subr.bf16.mxu0 0
    %2375 = vmatpush1.bf16.msra.mxu0 0
    %2376 = vmatprep.subr.bf16.mxu0 0
    %2377 = vmatpush1.bf16.msra.mxu0 0
    %2378 = vmatprep.subr.bf16.mxu0 0
    %2379 = vmatpush1.bf16.msra.mxu0 0
    %2380 = vmatprep.subr.bf16.mxu0 0
    %2381 = vmatpush1.bf16.msra.mxu0 0
    %2382 = vmatprep.subr.bf16.mxu0 0
    %2383 = vmatpush1.bf16.msra.mxu0 0
    %2384 = vmatprep.subr.bf16.mxu0 0
    %2385 = vmatpush1.bf16.msra.mxu0 0
    %2386 = vmatprep.subr.bf16.mxu0 0
    %2387 = vmatpush1.bf16.msra.mxu0 0
    %2388 = vmatprep.subr.bf16.mxu0 0
    %2389 = vmatpush1.bf16.msra.mxu0 0
    %2390 = vmatprep.subr.bf16.mxu0 0
    %2391 = vmatpush1.bf16.msra.mxu0 0
    %2392 = vmatprep.subr.bf16.mxu0 0
    %2393 = vmatpush1.bf16.msra.mxu0 0
    %2394 = vmatprep.mubr.bf16.mxu0 0
    %2395 = vmatmul.mubr.bf16.gmra.mrb[0].mxu0 %v2294
    %v2396 = vpop.f32.mrb[0].mxu0
    %v2397 = vadd.f32 %v2348, %v2396
    %v2398 = vpop.f32.mrb[0].mxu0
    %v2399 = vpop.f32.mrb[0].mxu0
    %v2400 = vadd.f32 %v2348, %v2399
    %v2401 = vpop.f32.mrb[0].mxu0
    %2402 = vdwg.mxu0
    %s2403 = scalar_lea.vmem %s8, 64
    %v2404 = vld [vmem:[%s2403] sm:$0xf]
    %v2405 = vld [vmem:[%s2403 + $0x4] sm:$0xf]
    %v2406 = vld [vmem:[%s2403 + $0x8] sm:$0xf]
    %v2407 = vld [vmem:[%s2403 + $0xc] sm:$0xf]
    %s2408 = scalar_lea.vmem %s9, 4
    %v2409 = vld [vmem:[%s2408] sm:$0x1]
    %v2411 = vlaneseq
    %v2412 = vshrl.u32 %v2411, 7
    %v2413 = vsub.s32 0, %v2412
    %v2414 = vrot.slane %v2409, %v2413
    %v2420 = vunpack.c.l.b16 %v2404
    %v2421 = vunpack.c.l.b16 %v2405
    %v2422 = vunpack.c.l.b16 %v2406
    %v2423 = vunpack.c.l.b16 %v2407
    %v2424 = vpack.c.b16 %v2421, %v2420
    %v2425 = vpack.c.b16 %v2423, %v2422
    %2428 = vmatprep.subr.bf16.mxu0 0
    %2429 = vmatpush1.bf16.msra.mxu0 %v2424
    %2430 = vmatprep.subr.bf16.mxu0 0
    %2431 = vmatpush1.bf16.msra.mxu0 %v2425
    %2432 = vmatprep.subr.bf16.mxu0 0
    %2433 = vmatpush1.bf16.msra.mxu0 0
    %2434 = vmatprep.subr.bf16.mxu0 0
    %2435 = vmatpush1.bf16.msra.mxu0 0
    %2436 = vmatprep.subr.bf16.mxu0 0
    %2437 = vmatpush1.bf16.msra.mxu0 0
    %2438 = vmatprep.subr.bf16.mxu0 0
    %2439 = vmatpush1.bf16.msra.mxu0 0
    %2440 = vmatprep.subr.bf16.mxu0 0
    %2441 = vmatpush1.bf16.msra.mxu0 0
    %2442 = vmatprep.subr.bf16.mxu0 0
    %2443 = vmatpush1.bf16.msra.mxu0 0
    %2444 = vmatprep.subr.bf16.mxu0 0
    %2445 = vmatpush1.bf16.msra.mxu0 0
    %2446 = vmatprep.subr.bf16.mxu0 0
    %2447 = vmatpush1.bf16.msra.mxu0 0
    %2448 = vmatprep.subr.bf16.mxu0 0
    %2449 = vmatpush1.bf16.msra.mxu0 0
    %2450 = vmatprep.subr.bf16.mxu0 0
    %2451 = vmatpush1.bf16.msra.mxu0 0
    %2452 = vmatprep.subr.bf16.mxu0 0
    %2453 = vmatpush1.bf16.msra.mxu0 0
    %2454 = vmatprep.subr.bf16.mxu0 0
    %2455 = vmatpush1.bf16.msra.mxu0 0
    %2456 = vmatprep.subr.bf16.mxu0 0
    %2457 = vmatpush1.bf16.msra.mxu0 0
    %2458 = vmatprep.subr.bf16.mxu0 0
    %2459 = vmatpush1.bf16.msra.mxu0 0
    %2460 = vmatprep.mubr.bf16.mxu0 0
    %2461 = vmatmul.mubr.bf16.gmra.mrb[0].mxu0 %v2294
    %v2462 = vpop.f32.mrb[0].mxu0
    %v2463 = vadd.f32 %v2414, %v2462
    %v2464 = vpop.f32.mrb[0].mxu0
    %v2465 = vpop.f32.mrb[0].mxu0
    %v2466 = vadd.f32 %v2414, %v2465
    %v2467 = vpop.f32.mrb[0].mxu0
    %2468 = vdwg.mxu0
    %v2469 = vpack.c.bf16 %v2331, %v2331
    %v2470 = vpack.c.bf16 %v2334, %v2334
    %v2471 = vpack.c.bf16 %v2397, %v2397
    %v2472 = vpack.c.bf16 %v2400, %v2400
    %v2474 = vsel %vm336, %v2469, 0
    %v2477 = vsel %vm336, %v2471, 0
    %2479 = vmatprep.subr.bf16.mxu0 0
    %2480 = vmatpush1.bf16.xpose.msra.mxu0 %v2477
    %2481 = vmatprep.subr.bf16.mxu0 0
    %2482 = vmatpush1.bf16.xpose.msra.mxu0 0
    %2483 = vmatprep.subr.bf16.mxu0 0
    %2484 = vmatpush1.bf16.xpose.msra.mxu0 0
    %2485 = vmatprep.subr.bf16.mxu0 0
    %2486 = vmatpush1.bf16.xpose.msra.mxu0 0
    %2487 = vmatprep.subr.bf16.mxu0 0
    %2488 = vmatpush1.bf16.xpose.msra.mxu0 0
    %2489 = vmatprep.subr.bf16.mxu0 0
    %2490 = vmatpush1.bf16.xpose.msra.mxu0 0
    %2491 = vmatprep.subr.bf16.mxu0 0
    %2492 = vmatpush1.bf16.xpose.msra.mxu0 0
    %2493 = vmatprep.subr.bf16.mxu0 0
    %2494 = vmatpush1.bf16.xpose.msra.mxu0 0
    %2495 = vmatprep.subr.bf16.mxu0 0
    %2496 = vmatpush1.bf16.xpose.msra.mxu0 0
    %2497 = vmatprep.subr.bf16.mxu0 0
    %2498 = vmatpush1.bf16.xpose.msra.mxu0 0
    %2499 = vmatprep.subr.bf16.mxu0 0
    %2500 = vmatpush1.bf16.xpose.msra.mxu0 0
    %2501 = vmatprep.subr.bf16.mxu0 0
    %2502 = vmatpush1.bf16.xpose.msra.mxu0 0
    %2503 = vmatprep.subr.bf16.mxu0 0
    %2504 = vmatpush1.bf16.xpose.msra.mxu0 0
    %2505 = vmatprep.subr.bf16.mxu0 0
    %2506 = vmatpush1.bf16.xpose.msra.mxu0 0
    %2507 = vmatprep.subr.bf16.mxu0 0
    %2508 = vmatpush1.bf16.xpose.msra.mxu0 0
    %2509 = vmatprep.subr.bf16.mxu0 0
    %2510 = vmatpush1.bf16.xpose.msra.mxu0 0
    %2511 = vmatprep.mubr.bf16.mxu0 0
    %2512 = vmatmul.mubr.bf16.gmra.mrb[0].mxu0 %v2474
    %v2513 = vpop.f32.mrb[0].mxu0
    %v2514 = vadd.f32 0.0, %v2513
    %v2515 = vpop.f32.mrb[0].mxu0
    %v2516 = vpop.f32.mrb[0].mxu0
    %v2517 = vpop.f32.mrb[0].mxu0
    %2518 = vdwg.mxu0
    %v2520 = vsel %vm336, %v2470, 0
    %v2523 = vsel %vm336, %v2472, 0
    %2525 = vmatprep.subr.bf16.mxu0 0
    %2526 = vmatpush1.bf16.xpose.msra.mxu0 %v2523
    %2527 = vmatprep.subr.bf16.mxu0 0
    %2528 = vmatpush1.bf16.xpose.msra.mxu0 0
    %2529 = vmatprep.subr.bf16.mxu0 0
    %2530 = vmatpush1.bf16.xpose.msra.mxu0 0
    %2531 = vmatprep.subr.bf16.mxu0 0
    %2532 = vmatpush1.bf16.xpose.msra.mxu0 0
    %2533 = vmatprep.subr.bf16.mxu0 0
    %2534 = vmatpush1.bf16.xpose.msra.mxu0 0
    %2535 = vmatprep.subr.bf16.mxu0 0
    %2536 = vmatpush1.bf16.xpose.msra.mxu0 0
    %2537 = vmatprep.subr.bf16.mxu0 0
    %2538 = vmatpush1.bf16.xpose.msra.mxu0 0
    %2539 = vmatprep.subr.bf16.mxu0 0
    %2540 = vmatpush1.bf16.xpose.msra.mxu0 0
    %2541 = vmatprep.subr.bf16.mxu0 0
    %2542 = vmatpush1.bf16.xpose.msra.mxu0 0
    %2543 = vmatprep.subr.bf16.mxu0 0
    %2544 = vmatpush1.bf16.xpose.msra.mxu0 0
    %2545 = vmatprep.subr.bf16.mxu0 0
    %2546 = vmatpush1.bf16.xpose.msra.mxu0 0
    %2547 = vmatprep.subr.bf16.mxu0 0
    %2548 = vmatpush1.bf16.xpose.msra.mxu0 0
    %2549 = vmatprep.subr.bf16.mxu0 0
    %2550 = vmatpush1.bf16.xpose.msra.mxu0 0
    %2551 = vmatprep.subr.bf16.mxu0 0
    %2552 = vmatpush1.bf16.xpose.msra.mxu0 0
    %2553 = vmatprep.subr.bf16.mxu0 0
    %2554 = vmatpush1.bf16.xpose.msra.mxu0 0
    %2555 = vmatprep.subr.bf16.mxu0 0
    %2556 = vmatpush1.bf16.xpose.msra.mxu0 0
    %2557 = vmatprep.mubr.bf16.mxu0 0
    %2558 = vmatmul.mubr.bf16.gmra.mrb[0].mxu0 %v2520
    %v2559 = vpop.f32.mrb[0].mxu0
    %v2560 = vadd.f32 0.0, %v2559
    %v2561 = vpop.f32.mrb[0].mxu0
    %v2562 = vpop.f32.mrb[0].mxu0
    %v2563 = vpop.f32.mrb[0].mxu0
    %2564 = vdwg.mxu0
    %v2565 = vmul.f32 %v2514, 0.35355338
    %v2566 = vmul.f32 %v2560, 0.35355338
    %v2567 = vsel %vm336, %v2565, -inf
    %2568 = vmax.xlane.f32.xlu0 %v2567
    %v2569 = vpop.xlane.xlu0 %2568
    %v2570 = vsel %vm336, %v2566, -inf
    %2571 = vmax.xlane.f32.xlu0 %v2570
    %v2572 = vpop.xlane.xlu0 %2571
    %v2573 = vsub.f32 %v2565, %v2569
    %v2574 = vsub.f32 %v2566, %v2572
    %v2575 = vmul.f32 %v2573, 1.442695
    %v2576 = vpow.pop %v2575
    %v2577 = vmul.f32 %v2574, 1.442695
    %v2578 = vpow.pop %v2577
    %v2579 = vsel %vm336, %v2576, 0.0
    %2580 = vadd.xlane.f32.xlu0 %v2579
    %v2581 = vpop.xlane.xlu0 %2580
    %v2582 = vsel %vm336, %v2578, 0.0
    %2583 = vadd.xlane.f32.xlu0 %v2582
    %v2584 = vpop.xlane.xlu0 %2583
    %v2585 = vrcp.pop %v2581
    %v2586 = vrcp.pop %v2584
    %v2587 = vmul.f32 %v2576, %v2585
    %v2588 = vmul.f32 %v2578, %v2586
    %v2589 = vpack.c.bf16 %v2587, %v2587
    %v2590 = vpack.c.bf16 %v2588, %v2588
    %v2591 = vpack.c.bf16 %v2463, %v2463
    %v2592 = vpack.c.bf16 %v2466, %v2466
    %v2594 = vsel %vm336, %v2589, 0
    %v2597 = vsel %vm460, %v2591, 0
    %2599 = vmatprep.subr.bf16.mxu0 0
    %2600 = vmatpush1.bf16.msra.mxu0 %v2597
    %2601 = vmatprep.subr.bf16.mxu0 0
    %2602 = vmatpush1.bf16.msra.mxu0 0
    %2603 = vmatprep.subr.bf16.mxu0 0
    %2604 = vmatpush1.bf16.msra.mxu0 0
    %2605 = vmatprep.subr.bf16.mxu0 0
    %2606 = vmatpush1.bf16.msra.mxu0 0
    %2607 = vmatprep.subr.bf16.mxu0 0
    %2608 = vmatpush1.bf16.msra.mxu0 0
    %2609 = vmatprep.subr.bf16.mxu0 0
    %2610 = vmatpush1.bf16.msra.mxu0 0
    %2611 = vmatprep.subr.bf16.mxu0 0
    %2612 = vmatpush1.bf16.msra.mxu0 0
    %2613 = vmatprep.subr.bf16.mxu0 0
    %2614 = vmatpush1.bf16.msra.mxu0 0
    %2615 = vmatprep.subr.bf16.mxu0 0
    %2616 = vmatpush1.bf16.msra.mxu0 0
    %2617 = vmatprep.subr.bf16.mxu0 0
    %2618 = vmatpush1.bf16.msra.mxu0 0
    %2619 = vmatprep.subr.bf16.mxu0 0
    %2620 = vmatpush1.bf16.msra.mxu0 0
    %2621 = vmatprep.subr.bf16.mxu0 0
    %2622 = vmatpush1.bf16.msra.mxu0 0
    %2623 = vmatprep.subr.bf16.mxu0 0
    %2624 = vmatpush1.bf16.msra.mxu0 0
    %2625 = vmatprep.subr.bf16.mxu0 0
    %2626 = vmatpush1.bf16.msra.mxu0 0
    %2627 = vmatprep.subr.bf16.mxu0 0
    %2628 = vmatpush1.bf16.msra.mxu0 0
    %2629 = vmatprep.subr.bf16.mxu0 0
    %2630 = vmatpush1.bf16.msra.mxu0 0
    %2631 = vmatprep.mubr.bf16.mxu0 0
    %2632 = vmatmul.mubr.bf16.gmra.mrb[0].mxu0 %v2594
    %v2633 = vpop.f32.mrb[0].mxu0
    %v2634 = vadd.f32 0.0, %v2633
    %v2635 = vpop.f32.mrb[0].mxu0
    %v2636 = vpop.f32.mrb[0].mxu0
    %v2637 = vpop.f32.mrb[0].mxu0
    %2638 = vdwg.mxu0
    %v2640 = vsel %vm336, %v2590, 0
    %v2643 = vsel %vm460, %v2592, 0
    %2645 = vmatprep.subr.bf16.mxu0 0
    %2646 = vmatpush1.bf16.msra.mxu0 %v2643
    %2647 = vmatprep.subr.bf16.mxu0 0
    %2648 = vmatpush1.bf16.msra.mxu0 0
    %2649 = vmatprep.subr.bf16.mxu0 0
    %2650 = vmatpush1.bf16.msra.mxu0 0
    %2651 = vmatprep.subr.bf16.mxu0 0
    %2652 = vmatpush1.bf16.msra.mxu0 0
    %2653 = vmatprep.subr.bf16.mxu0 0
    %2654 = vmatpush1.bf16.msra.mxu0 0
    %2655 = vmatprep.subr.bf16.mxu0 0
    %2656 = vmatpush1.bf16.msra.mxu0 0
    %2657 = vmatprep.subr.bf16.mxu0 0
    %2658 = vmatpush1.bf16.msra.mxu0 0
    %2659 = vmatprep.subr.bf16.mxu0 0
    %2660 = vmatpush1.bf16.msra.mxu0 0
    %2661 = vmatprep.subr.bf16.mxu0 0
    %2662 = vmatpush1.bf16.msra.mxu0 0
    %2663 = vmatprep.subr.bf16.mxu0 0
    %2664 = vmatpush1.bf16.msra.mxu0 0
    %2665 = vmatprep.subr.bf16.mxu0 0
    %2666 = vmatpush1.bf16.msra.mxu0 0
    %2667 = vmatprep.subr.bf16.mxu0 0
    %2668 = vmatpush1.bf16.msra.mxu0 0
    %2669 = vmatprep.subr.bf16.mxu0 0
    %2670 = vmatpush1.bf16.msra.mxu0 0
    %2671 = vmatprep.subr.bf16.mxu0 0
    %2672 = vmatpush1.bf16.msra.mxu0 0
    %2673 = vmatprep.subr.bf16.mxu0 0
    %2674 = vmatpush1.bf16.msra.mxu0 0
    %2675 = vmatprep.subr.bf16.mxu0 0
    %2676 = vmatpush1.bf16.msra.mxu0 0
    %2677 = vmatprep.mubr.bf16.mxu0 0
    %2678 = vmatmul.mubr.bf16.gmra.mrb[0].mxu0 %v2640
    %v2679 = vpop.f32.mrb[0].mxu0
    %v2680 = vadd.f32 0.0, %v2679
    %v2681 = vpop.f32.mrb[0].mxu0
    %v2682 = vpop.f32.mrb[0].mxu0
    %v2683 = vpop.f32.mrb[0].mxu0
    %2684 = vdwg.mxu0
    %v2685 = vpack.c.bf16 %v2680, %v2634
    %s2686 = scalar_lea.vmem %s10, 16
    %v2687 = vld [vmem:[%s2686] sm:$0xf]
    %s2688 = scalar_lea.vmem %s4, 80
    %v2689 = vld [vmem:[%s2688] sm:$0xf]
    %v2690 = vld [vmem:[%s2688 + $0x4] sm:$0xf]
    %v2691 = vld [vmem:[%s2688 + $0x8] sm:$0xf]
    %v2692 = vld [vmem:[%s2688 + $0xc] sm:$0xf]
    %s2693 = scalar_lea.vmem %s5, 5
    %v2694 = vld [vmem:[%s2693] sm:$0x1]
    %v2696 = vlaneseq
    %v2697 = vshrl.u32 %v2696, 7
    %v2698 = vsub.s32 0, %v2697
    %v2699 = vrot.slane %v2694, %v2698
    %v2705 = vunpack.c.l.b16 %v2689
    %v2706 = vunpack.c.l.b16 %v2690
    %v2707 = vunpack.c.l.b16 %v2691
    %v2708 = vunpack.c.l.b16 %v2692
    %v2709 = vpack.c.b16 %v2706, %v2705
    %v2710 = vpack.c.b16 %v2708, %v2707
    %2713 = vmatprep.subr.bf16.mxu0 0
    %2714 = vmatpush1.bf16.msra.mxu0 %v2709
    %2715 = vmatprep.subr.bf16.mxu0 0
    %2716 = vmatpush1.bf16.msra.mxu0 %v2710
    %2717 = vmatprep.subr.bf16.mxu0 0
    %2718 = vmatpush1.bf16.msra.mxu0 0
    %2719 = vmatprep.subr.bf16.mxu0 0
    %2720 = vmatpush1.bf16.msra.mxu0 0
    %2721 = vmatprep.subr.bf16.mxu0 0
    %2722 = vmatpush1.bf16.msra.mxu0 0
    %2723 = vmatprep.subr.bf16.mxu0 0
    %2724 = vmatpush1.bf16.msra.mxu0 0
    %2725 = vmatprep.subr.bf16.mxu0 0
    %2726 = vmatpush1.bf16.msra.mxu0 0
    %2727 = vmatprep.subr.bf16.mxu0 0
    %2728 = vmatpush1.bf16.msra.mxu0 0
    %2729 = vmatprep.subr.bf16.mxu0 0
    %2730 = vmatpush1.bf16.msra.mxu0 0
    %2731 = vmatprep.subr.bf16.mxu0 0
    %2732 = vmatpush1.bf16.msra.mxu0 0
    %2733 = vmatprep.subr.bf16.mxu0 0
    %2734 = vmatpush1.bf16.msra.mxu0 0
    %2735 = vmatprep.subr.bf16.mxu0 0
    %2736 = vmatpush1.bf16.msra.mxu0 0
    %2737 = vmatprep.subr.bf16.mxu0 0
    %2738 = vmatpush1.bf16.msra.mxu0 0
    %2739 = vmatprep.subr.bf16.mxu0 0
    %2740 = vmatpush1.bf16.msra.mxu0 0
    %2741 = vmatprep.subr.bf16.mxu0 0
    %2742 = vmatpush1.bf16.msra.mxu0 0
    %2743 = vmatprep.subr.bf16.mxu0 0
    %2744 = vmatpush1.bf16.msra.mxu0 0
    %2745 = vmatprep.mubr.bf16.mxu0 0
    %2746 = vmatmul.mubr.bf16.gmra.mrb[0].mxu0 %v2294
    %v2747 = vpop.f32.mrb[0].mxu0
    %v2748 = vadd.f32 %v2699, %v2747
    %v2749 = vpop.f32.mrb[0].mxu0
    %v2750 = vpop.f32.mrb[0].mxu0
    %v2751 = vadd.f32 %v2699, %v2750
    %v2752 = vpop.f32.mrb[0].mxu0
    %2753 = vdwg.mxu0
    %s2754 = scalar_lea.vmem %s6, 80
    %v2755 = vld [vmem:[%s2754] sm:$0xf]
    %v2756 = vld [vmem:[%s2754 + $0x4] sm:$0xf]
    %v2757 = vld [vmem:[%s2754 + $0x8] sm:$0xf]
    %v2758 = vld [vmem:[%s2754 + $0xc] sm:$0xf]
    %s2759 = scalar_lea.vmem %s7, 5
    %v2760 = vld [vmem:[%s2759] sm:$0x1]
    %v2762 = vlaneseq
    %v2763 = vshrl.u32 %v2762, 7
    %v2764 = vsub.s32 0, %v2763
    %v2765 = vrot.slane %v2760, %v2764
    %v2771 = vunpack.c.l.b16 %v2755
    %v2772 = vunpack.c.l.b16 %v2756
    %v2773 = vunpack.c.l.b16 %v2757
    %v2774 = vunpack.c.l.b16 %v2758
    %v2775 = vpack.c.b16 %v2772, %v2771
    %v2776 = vpack.c.b16 %v2774, %v2773
    %2779 = vmatprep.subr.bf16.mxu0 0
    %2780 = vmatpush1.bf16.msra.mxu0 %v2775
    %2781 = vmatprep.subr.bf16.mxu0 0
    %2782 = vmatpush1.bf16.msra.mxu0 %v2776
    %2783 = vmatprep.subr.bf16.mxu0 0
    %2784 = vmatpush1.bf16.msra.mxu0 0
    %2785 = vmatprep.subr.bf16.mxu0 0
    %2786 = vmatpush1.bf16.msra.mxu0 0
    %2787 = vmatprep.subr.bf16.mxu0 0
    %2788 = vmatpush1.bf16.msra.mxu0 0
    %2789 = vmatprep.subr.bf16.mxu0 0
    %2790 = vmatpush1.bf16.msra.mxu0 0
    %2791 = vmatprep.subr.bf16.mxu0 0
    %2792 = vmatpush1.bf16.msra.mxu0 0
    %2793 = vmatprep.subr.bf16.mxu0 0
    %2794 = vmatpush1.bf16.msra.mxu0 0
    %2795 = vmatprep.subr.bf16.mxu0 0
    %2796 = vmatpush1.bf16.msra.mxu0 0
    %2797 = vmatprep.subr.bf16.mxu0 0
    %2798 = vmatpush1.bf16.msra.mxu0 0
    %2799 = vmatprep.subr.bf16.mxu0 0
    %2800 = vmatpush1.bf16.msra.mxu0 0
    %2801 = vmatprep.subr.bf16.mxu0 0
    %2802 = vmatpush1.bf16.msra.mxu0 0
    %2803 = vmatprep.subr.bf16.mxu0 0
    %2804 = vmatpush1.bf16.msra.mxu0 0
    %2805 = vmatprep.subr.bf16.mxu0 0
    %2806 = vmatpush1.bf16.msra.mxu0 0
    %2807 = vmatprep.subr.bf16.mxu0 0
    %2808 = vmatpush1.bf16.msra.mxu0 0
    %2809 = vmatprep.subr.bf16.mxu0 0
    %2810 = vmatpush1.bf16.msra.mxu0 0
    %2811 = vmatprep.mubr.bf16.mxu0 0
    %2812 = vmatmul.mubr.bf16.gmra.mrb[0].mxu0 %v2294
    %v2813 = vpop.f32.mrb[0].mxu0
    %v2814 = vadd.f32 %v2765, %v2813
    %v2815 = vpop.f32.mrb[0].mxu0
    %v2816 = vpop.f32.mrb[0].mxu0
    %v2817 = vadd.f32 %v2765, %v2816
    %v2818 = vpop.f32.mrb[0].mxu0
    %2819 = vdwg.mxu0
    %s2820 = scalar_lea.vmem %s8, 80
    %v2821 = vld [vmem:[%s2820] sm:$0xf]
    %v2822 = vld [vmem:[%s2820 + $0x4] sm:$0xf]
    %v2823 = vld [vmem:[%s2820 + $0x8] sm:$0xf]
    %v2824 = vld [vmem:[%s2820 + $0xc] sm:$0xf]
    %s2825 = scalar_lea.vmem %s9, 5
    %v2826 = vld [vmem:[%s2825] sm:$0x1]
    %v2828 = vlaneseq
    %v2829 = vshrl.u32 %v2828, 7
    %v2830 = vsub.s32 0, %v2829
    %v2831 = vrot.slane %v2826, %v2830
    %v2837 = vunpack.c.l.b16 %v2821
    %v2838 = vunpack.c.l.b16 %v2822
    %v2839 = vunpack.c.l.b16 %v2823
    %v2840 = vunpack.c.l.b16 %v2824
    %v2841 = vpack.c.b16 %v2838, %v2837
    %v2842 = vpack.c.b16 %v2840, %v2839
    %2845 = vmatprep.subr.bf16.mxu0 0
    %2846 = vmatpush1.bf16.msra.mxu0 %v2841
    %2847 = vmatprep.subr.bf16.mxu0 0
    %2848 = vmatpush1.bf16.msra.mxu0 %v2842
    %2849 = vmatprep.subr.bf16.mxu0 0
    %2850 = vmatpush1.bf16.msra.mxu0 0
    %2851 = vmatprep.subr.bf16.mxu0 0
    %2852 = vmatpush1.bf16.msra.mxu0 0
    %2853 = vmatprep.subr.bf16.mxu0 0
    %2854 = vmatpush1.bf16.msra.mxu0 0
    %2855 = vmatprep.subr.bf16.mxu0 0
    %2856 = vmatpush1.bf16.msra.mxu0 0
    %2857 = vmatprep.subr.bf16.mxu0 0
    %2858 = vmatpush1.bf16.msra.mxu0 0
    %2859 = vmatprep.subr.bf16.mxu0 0
    %2860 = vmatpush1.bf16.msra.mxu0 0
    %2861 = vmatprep.subr.bf16.mxu0 0
    %2862 = vmatpush1.bf16.msra.mxu0 0
    %2863 = vmatprep.subr.bf16.mxu0 0
    %2864 = vmatpush1.bf16.msra.mxu0 0
    %2865 = vmatprep.subr.bf16.mxu0 0
    %2866 = vmatpush1.bf16.msra.mxu0 0
    %2867 = vmatprep.subr.bf16.mxu0 0
    %2868 = vmatpush1.bf16.msra.mxu0 0
    %2869 = vmatprep.subr.bf16.mxu0 0
    %2870 = vmatpush1.bf16.msra.mxu0 0
    %2871 = vmatprep.subr.bf16.mxu0 0
    %2872 = vmatpush1.bf16.msra.mxu0 0
    %2873 = vmatprep.subr.bf16.mxu0 0
    %2874 = vmatpush1.bf16.msra.mxu0 0
    %2875 = vmatprep.subr.bf16.mxu0 0
    %2876 = vmatpush1.bf16.msra.mxu0 0
    %2877 = vmatprep.mubr.bf16.mxu0 0
    %2878 = vmatmul.mubr.bf16.gmra.mrb[0].mxu0 %v2294
    %v2879 = vpop.f32.mrb[0].mxu0
    %v2880 = vadd.f32 %v2831, %v2879
    %v2881 = vpop.f32.mrb[0].mxu0
    %v2882 = vpop.f32.mrb[0].mxu0
    %v2883 = vadd.f32 %v2831, %v2882
    %v2884 = vpop.f32.mrb[0].mxu0
    %2885 = vdwg.mxu0
    %v2886 = vpack.c.bf16 %v2748, %v2748
    %v2887 = vpack.c.bf16 %v2751, %v2751
    %v2888 = vpack.c.bf16 %v2814, %v2814
    %v2889 = vpack.c.bf16 %v2817, %v2817
    %v2891 = vsel %vm336, %v2886, 0
    %v2894 = vsel %vm336, %v2888, 0
    %2896 = vmatprep.subr.bf16.mxu0 0
    %2897 = vmatpush1.bf16.xpose.msra.mxu0 %v2894
    %2898 = vmatprep.subr.bf16.mxu0 0
    %2899 = vmatpush1.bf16.xpose.msra.mxu0 0
    %2900 = vmatprep.subr.bf16.mxu0 0
    %2901 = vmatpush1.bf16.xpose.msra.mxu0 0
    %2902 = vmatprep.subr.bf16.mxu0 0
    %2903 = vmatpush1.bf16.xpose.msra.mxu0 0
    %2904 = vmatprep.subr.bf16.mxu0 0
    %2905 = vmatpush1.bf16.xpose.msra.mxu0 0
    %2906 = vmatprep.subr.bf16.mxu0 0
    %2907 = vmatpush1.bf16.xpose.msra.mxu0 0
    %2908 = vmatprep.subr.bf16.mxu0 0
    %2909 = vmatpush1.bf16.xpose.msra.mxu0 0
    %2910 = vmatprep.subr.bf16.mxu0 0
    %2911 = vmatpush1.bf16.xpose.msra.mxu0 0
    %2912 = vmatprep.subr.bf16.mxu0 0
    %2913 = vmatpush1.bf16.xpose.msra.mxu0 0
    %2914 = vmatprep.subr.bf16.mxu0 0
    %2915 = vmatpush1.bf16.xpose.msra.mxu0 0
    %2916 = vmatprep.subr.bf16.mxu0 0
    %2917 = vmatpush1.bf16.xpose.msra.mxu0 0
    %2918 = vmatprep.subr.bf16.mxu0 0
    %2919 = vmatpush1.bf16.xpose.msra.mxu0 0
    %2920 = vmatprep.subr.bf16.mxu0 0
    %2921 = vmatpush1.bf16.xpose.msra.mxu0 0
    %2922 = vmatprep.subr.bf16.mxu0 0
    %2923 = vmatpush1.bf16.xpose.msra.mxu0 0
    %2924 = vmatprep.subr.bf16.mxu0 0
    %2925 = vmatpush1.bf16.xpose.msra.mxu0 0
    %2926 = vmatprep.subr.bf16.mxu0 0
    %2927 = vmatpush1.bf16.xpose.msra.mxu0 0
    %2928 = vmatprep.mubr.bf16.mxu0 0
    %2929 = vmatmul.mubr.bf16.gmra.mrb[0].mxu0 %v2891
    %v2930 = vpop.f32.mrb[0].mxu0
    %v2931 = vadd.f32 0.0, %v2930
    %v2932 = vpop.f32.mrb[0].mxu0
    %v2933 = vpop.f32.mrb[0].mxu0
    %v2934 = vpop.f32.mrb[0].mxu0
    %2935 = vdwg.mxu0
    %v2937 = vsel %vm336, %v2887, 0
    %v2940 = vsel %vm336, %v2889, 0
    %2942 = vmatprep.subr.bf16.mxu0 0
    %2943 = vmatpush1.bf16.xpose.msra.mxu0 %v2940
    %2944 = vmatprep.subr.bf16.mxu0 0
    %2945 = vmatpush1.bf16.xpose.msra.mxu0 0
    %2946 = vmatprep.subr.bf16.mxu0 0
    %2947 = vmatpush1.bf16.xpose.msra.mxu0 0
    %2948 = vmatprep.subr.bf16.mxu0 0
    %2949 = vmatpush1.bf16.xpose.msra.mxu0 0
    %2950 = vmatprep.subr.bf16.mxu0 0
    %2951 = vmatpush1.bf16.xpose.msra.mxu0 0
    %2952 = vmatprep.subr.bf16.mxu0 0
    %2953 = vmatpush1.bf16.xpose.msra.mxu0 0
    %2954 = vmatprep.subr.bf16.mxu0 0
    %2955 = vmatpush1.bf16.xpose.msra.mxu0 0
    %2956 = vmatprep.subr.bf16.mxu0 0
    %2957 = vmatpush1.bf16.xpose.msra.mxu0 0
    %2958 = vmatprep.subr.bf16.mxu0 0
    %2959 = vmatpush1.bf16.xpose.msra.mxu0 0
    %2960 = vmatprep.subr.bf16.mxu0 0
    %2961 = vmatpush1.bf16.xpose.msra.mxu0 0
    %2962 = vmatprep.subr.bf16.mxu0 0
    %2963 = vmatpush1.bf16.xpose.msra.mxu0 0
    %2964 = vmatprep.subr.bf16.mxu0 0
    %2965 = vmatpush1.bf16.xpose.msra.mxu0 0
    %2966 = vmatprep.subr.bf16.mxu0 0
    %2967 = vmatpush1.bf16.xpose.msra.mxu0 0
    %2968 = vmatprep.subr.bf16.mxu0 0
    %2969 = vmatpush1.bf16.xpose.msra.mxu0 0
    %2970 = vmatprep.subr.bf16.mxu0 0
    %2971 = vmatpush1.bf16.xpose.msra.mxu0 0
    %2972 = vmatprep.subr.bf16.mxu0 0
    %2973 = vmatpush1.bf16.xpose.msra.mxu0 0
    %2974 = vmatprep.mubr.bf16.mxu0 0
    %2975 = vmatmul.mubr.bf16.gmra.mrb[0].mxu0 %v2937
    %v2976 = vpop.f32.mrb[0].mxu0
    %v2977 = vadd.f32 0.0, %v2976
    %v2978 = vpop.f32.mrb[0].mxu0
    %v2979 = vpop.f32.mrb[0].mxu0
    %v2980 = vpop.f32.mrb[0].mxu0
    %2981 = vdwg.mxu0
    %v2982 = vmul.f32 %v2931, 0.35355338
    %v2983 = vmul.f32 %v2977, 0.35355338
    %v2984 = vsel %vm336, %v2982, -inf
    %2985 = vmax.xlane.f32.xlu0 %v2984
    %v2986 = vpop.xlane.xlu0 %2985
    %v2987 = vsel %vm336, %v2983, -inf
    %2988 = vmax.xlane.f32.xlu0 %v2987
    %v2989 = vpop.xlane.xlu0 %2988
    %v2990 = vsub.f32 %v2982, %v2986
    %v2991 = vsub.f32 %v2983, %v2989
    %v2992 = vmul.f32 %v2990, 1.442695
    %v2993 = vpow.pop %v2992
    %v2994 = vmul.f32 %v2991, 1.442695
    %v2995 = vpow.pop %v2994
    %v2996 = vsel %vm336, %v2993, 0.0
    %2997 = vadd.xlane.f32.xlu0 %v2996
    %v2998 = vpop.xlane.xlu0 %2997
    %v2999 = vsel %vm336, %v2995, 0.0
    %3000 = vadd.xlane.f32.xlu0 %v2999
    %v3001 = vpop.xlane.xlu0 %3000
    %v3002 = vrcp.pop %v2998
    %v3003 = vrcp.pop %v3001
    %v3004 = vmul.f32 %v2993, %v3002
    %v3005 = vmul.f32 %v2995, %v3003
    %v3006 = vpack.c.bf16 %v3004, %v3004
    %v3007 = vpack.c.bf16 %v3005, %v3005
    %v3008 = vpack.c.bf16 %v2880, %v2880
    %v3009 = vpack.c.bf16 %v2883, %v2883
    %v3011 = vsel %vm336, %v3006, 0
    %v3014 = vsel %vm460, %v3008, 0
    %3016 = vmatprep.subr.bf16.mxu0 0
    %3017 = vmatpush1.bf16.msra.mxu0 %v3014
    %3018 = vmatprep.subr.bf16.mxu0 0
    %3019 = vmatpush1.bf16.msra.mxu0 0
    %3020 = vmatprep.subr.bf16.mxu0 0
    %3021 = vmatpush1.bf16.msra.mxu0 0
    %3022 = vmatprep.subr.bf16.mxu0 0
    %3023 = vmatpush1.bf16.msra.mxu0 0
    %3024 = vmatprep.subr.bf16.mxu0 0
    %3025 = vmatpush1.bf16.msra.mxu0 0
    %3026 = vmatprep.subr.bf16.mxu0 0
    %3027 = vmatpush1.bf16.msra.mxu0 0
    %3028 = vmatprep.subr.bf16.mxu0 0
    %3029 = vmatpush1.bf16.msra.mxu0 0
    %3030 = vmatprep.subr.bf16.mxu0 0
    %3031 = vmatpush1.bf16.msra.mxu0 0
    %3032 = vmatprep.subr.bf16.mxu0 0
    %3033 = vmatpush1.bf16.msra.mxu0 0
    %3034 = vmatprep.subr.bf16.mxu0 0
    %3035 = vmatpush1.bf16.msra.mxu0 0
    %3036 = vmatprep.subr.bf16.mxu0 0
    %3037 = vmatpush1.bf16.msra.mxu0 0
    %3038 = vmatprep.subr.bf16.mxu0 0
    %3039 = vmatpush1.bf16.msra.mxu0 0
    %3040 = vmatprep.subr.bf16.mxu0 0
    %3041 = vmatpush1.bf16.msra.mxu0 0
    %3042 = vmatprep.subr.bf16.mxu0 0
    %3043 = vmatpush1.bf16.msra.mxu0 0
    %3044 = vmatprep.subr.bf16.mxu0 0
    %3045 = vmatpush1.bf16.msra.mxu0 0
    %3046 = vmatprep.subr.bf16.mxu0 0
    %3047 = vmatpush1.bf16.msra.mxu0 0
    %3048 = vmatprep.mubr.bf16.mxu0 0
    %3049 = vmatmul.mubr.bf16.gmra.mrb[0].mxu0 %v3011
    %v3050 = vpop.f32.mrb[0].mxu0
    %v3051 = vadd.f32 0.0, %v3050
    %v3052 = vpop.f32.mrb[0].mxu0
    %v3053 = vpop.f32.mrb[0].mxu0
    %v3054 = vpop.f32.mrb[0].mxu0
    %3055 = vdwg.mxu0
    %v3057 = vsel %vm336, %v3007, 0
    %v3060 = vsel %vm460, %v3009, 0
    %3062 = vmatprep.subr.bf16.mxu0 0
    %3063 = vmatpush1.bf16.msra.mxu0 %v3060
    %3064 = vmatprep.subr.bf16.mxu0 0
    %3065 = vmatpush1.bf16.msra.mxu0 0
    %3066 = vmatprep.subr.bf16.mxu0 0
    %3067 = vmatpush1.bf16.msra.mxu0 0
    %3068 = vmatprep.subr.bf16.mxu0 0
    %3069 = vmatpush1.bf16.msra.mxu0 0
    %3070 = vmatprep.subr.bf16.mxu0 0
    %3071 = vmatpush1.bf16.msra.mxu0 0
    %3072 = vmatprep.subr.bf16.mxu0 0
    %3073 = vmatpush1.bf16.msra.mxu0 0
    %3074 = vmatprep.subr.bf16.mxu0 0
    %3075 = vmatpush1.bf16.msra.mxu0 0
    %3076 = vmatprep.subr.bf16.mxu0 0
    %3077 = vmatpush1.bf16.msra.mxu0 0
    %3078 = vmatprep.subr.bf16.mxu0 0
    %3079 = vmatpush1.bf16.msra.mxu0 0
    %3080 = vmatprep.subr.bf16.mxu0 0
    %3081 = vmatpush1.bf16.msra.mxu0 0
    %3082 = vmatprep.subr.bf16.mxu0 0
    %3083 = vmatpush1.bf16.msra.mxu0 0
    %3084 = vmatprep.subr.bf16.mxu0 0
    %3085 = vmatpush1.bf16.msra.mxu0 0
    %3086 = vmatprep.subr.bf16.mxu0 0
    %3087 = vmatpush1.bf16.msra.mxu0 0
    %3088 = vmatprep.subr.bf16.mxu0 0
    %3089 = vmatpush1.bf16.msra.mxu0 0
    %3090 = vmatprep.subr.bf16.mxu0 0
    %3091 = vmatpush1.bf16.msra.mxu0 0
    %3092 = vmatprep.subr.bf16.mxu0 0
    %3093 = vmatpush1.bf16.msra.mxu0 0
    %3094 = vmatprep.mubr.bf16.mxu0 0
    %3095 = vmatmul.mubr.bf16.gmra.mrb[0].mxu0 %v3057
    %v3096 = vpop.f32.mrb[0].mxu0
    %v3097 = vadd.f32 0.0, %v3096
    %v3098 = vpop.f32.mrb[0].mxu0
    %v3099 = vpop.f32.mrb[0].mxu0
    %v3100 = vpop.f32.mrb[0].mxu0
    %3101 = vdwg.mxu0
    %v3102 = vpack.c.bf16 %v3097, %v3051
    %s3103 = scalar_lea.vmem %s10, 20
    %v3104 = vld [vmem:[%s3103] sm:$0xf]
    %v3106 = vsel %vm336, %v3102, 0
    %v3109 = vsel %vm460, %v3104, 0
    %3111 = vmatprep.subr.bf16.mxu0 0
    %3112 = vmatpush1.bf16.msra.mxu0 %v3109
    %3113 = vmatprep.subr.bf16.mxu0 0
    %3114 = vmatpush1.bf16.msra.mxu0 0
    %3115 = vmatprep.subr.bf16.mxu0 0
    %3116 = vmatpush1.bf16.msra.mxu0 0
    %3117 = vmatprep.subr.bf16.mxu0 0
    %3118 = vmatpush1.bf16.msra.mxu0 0
    %3119 = vmatprep.subr.bf16.mxu0 0
    %3120 = vmatpush1.bf16.msra.mxu0 0
    %3121 = vmatprep.subr.bf16.mxu0 0
    %3122 = vmatpush1.bf16.msra.mxu0 0
    %3123 = vmatprep.subr.bf16.mxu0 0
    %3124 = vmatpush1.bf16.msra.mxu0 0
    %3125 = vmatprep.subr.bf16.mxu0 0
    %3126 = vmatpush1.bf16.msra.mxu0 0
    %3127 = vmatprep.subr.bf16.mxu0 0
    %3128 = vmatpush1.bf16.msra.mxu0 0
    %3129 = vmatprep.subr.bf16.mxu0 0
    %3130 = vmatpush1.bf16.msra.mxu0 0
    %3131 = vmatprep.subr.bf16.mxu0 0
    %3132 = vmatpush1.bf16.msra.mxu0 0
    %3133 = vmatprep.subr.bf16.mxu0 0
    %3134 = vmatpush1.bf16.msra.mxu0 0
    %3135 = vmatprep.subr.bf16.mxu0 0
    %3136 = vmatpush1.bf16.msra.mxu0 0
    %3137 = vmatprep.subr.bf16.mxu0 0
    %3138 = vmatpush1.bf16.msra.mxu0 0
    %3139 = vmatprep.subr.bf16.mxu0 0
    %3140 = vmatpush1.bf16.msra.mxu0 0
    %3141 = vmatprep.subr.bf16.mxu0 0
    %3142 = vmatpush1.bf16.msra.mxu0 0
    %3143 = vmatprep.mubr.bf16.mxu0 0
    %3144 = vmatmul.mubr.bf16.gmra.mrb[0].mxu0 %v3106
    %v3145 = vpop.f32.mrb[0].mxu0
    %v3146 = vadd.f32 0.0, %v3145
    %v3147 = vpop.f32.mrb[0].mxu0
    %v3148 = vpop.f32.mrb[0].mxu0
    %v3149 = vadd.f32 0.0, %v3148
    %v3150 = vpop.f32.mrb[0].mxu0
    %3151 = vdwg.mxu0
    %v3153 = vsel %vm336, %v2685, 0
    %v3156 = vsel %vm460, %v2687, 0
    %3158 = vmatprep.subr.bf16.mxu0 0
    %3159 = vmatpush1.bf16.msra.mxu0 %v3156
    %3160 = vmatprep.subr.bf16.mxu0 0
    %3161 = vmatpush1.bf16.msra.mxu0 0
    %3162 = vmatprep.subr.bf16.mxu0 0
    %3163 = vmatpush1.bf16.msra.mxu0 0
    %3164 = vmatprep.subr.bf16.mxu0 0
    %3165 = vmatpush1.bf16.msra.mxu0 0
    %3166 = vmatprep.subr.bf16.mxu0 0
    %3167 = vmatpush1.bf16.msra.mxu0 0
    %3168 = vmatprep.subr.bf16.mxu0 0
    %3169 = vmatpush1.bf16.msra.mxu0 0
    %3170 = vmatprep.subr.bf16.mxu0 0
    %3171 = vmatpush1.bf16.msra.mxu0 0
    %3172 = vmatprep.subr.bf16.mxu0 0
    %3173 = vmatpush1.bf16.msra.mxu0 0
    %3174 = vmatprep.subr.bf16.mxu0 0
    %3175 = vmatpush1.bf16.msra.mxu0 0
    %3176 = vmatprep.subr.bf16.mxu0 0
    %3177 = vmatpush1.bf16.msra.mxu0 0
    %3178 = vmatprep.subr.bf16.mxu0 0
    %3179 = vmatpush1.bf16.msra.mxu0 0
    %3180 = vmatprep.subr.bf16.mxu0 0
    %3181 = vmatpush1.bf16.msra.mxu0 0
    %3182 = vmatprep.subr.bf16.mxu0 0
    %3183 = vmatpush1.bf16.msra.mxu0 0
    %3184 = vmatprep.subr.bf16.mxu0 0
    %3185 = vmatpush1.bf16.msra.mxu0 0
    %3186 = vmatprep.subr.bf16.mxu0 0
    %3187 = vmatpush1.bf16.msra.mxu0 0
    %3188 = vmatprep.subr.bf16.mxu0 0
    %3189 = vmatpush1.bf16.msra.mxu0 0
    %3190 = vmatprep.mubr.bf16.mxu0 0
    %3191 = vmatmul.mubr.bf16.gmra.mrb[0].mxu0 %v3153
    %v3192 = vpop.f32.mrb[0].mxu0
    %v3193 = vadd.f32 %v3146, %v3192
    %v3194 = vpop.f32.mrb[0].mxu0
    %v3195 = vpop.f32.mrb[0].mxu0
    %v3196 = vadd.f32 %v3149, %v3195
    %v3197 = vpop.f32.mrb[0].mxu0
    %3198 = vdwg.mxu0
    %s3199 = scalar_lea.vmem %s4, 96
    %v3200 = vld [vmem:[%s3199] sm:$0xf]
    %v3201 = vld [vmem:[%s3199 + $0x4] sm:$0xf]
    %v3202 = vld [vmem:[%s3199 + $0x8] sm:$0xf]
    %v3203 = vld [vmem:[%s3199 + $0xc] sm:$0xf]
    %s3204 = scalar_lea.vmem %s5, 6
    %v3205 = vld [vmem:[%s3204] sm:$0x1]
    %v3207 = vlaneseq
    %v3208 = vshrl.u32 %v3207, 7
    %v3209 = vsub.s32 0, %v3208
    %v3210 = vrot.slane %v3205, %v3209
    %v3216 = vunpack.c.l.b16 %v3200
    %v3217 = vunpack.c.l.b16 %v3201
    %v3218 = vunpack.c.l.b16 %v3202
    %v3219 = vunpack.c.l.b16 %v3203
    %v3220 = vpack.c.b16 %v3217, %v3216
    %v3221 = vpack.c.b16 %v3219, %v3218
    %3224 = vmatprep.subr.bf16.mxu0 0
    %3225 = vmatpush1.bf16.msra.mxu0 %v3220
    %3226 = vmatprep.subr.bf16.mxu0 0
    %3227 = vmatpush1.bf16.msra.mxu0 %v3221
    %3228 = vmatprep.subr.bf16.mxu0 0
    %3229 = vmatpush1.bf16.msra.mxu0 0
    %3230 = vmatprep.subr.bf16.mxu0 0
    %3231 = vmatpush1.bf16.msra.mxu0 0
    %3232 = vmatprep.subr.bf16.mxu0 0
    %3233 = vmatpush1.bf16.msra.mxu0 0
    %3234 = vmatprep.subr.bf16.mxu0 0
    %3235 = vmatpush1.bf16.msra.mxu0 0
    %3236 = vmatprep.subr.bf16.mxu0 0
    %3237 = vmatpush1.bf16.msra.mxu0 0
    %3238 = vmatprep.subr.bf16.mxu0 0
    %3239 = vmatpush1.bf16.msra.mxu0 0
    %3240 = vmatprep.subr.bf16.mxu0 0
    %3241 = vmatpush1.bf16.msra.mxu0 0
    %3242 = vmatprep.subr.bf16.mxu0 0
    %3243 = vmatpush1.bf16.msra.mxu0 0
    %3244 = vmatprep.subr.bf16.mxu0 0
    %3245 = vmatpush1.bf16.msra.mxu0 0
    %3246 = vmatprep.subr.bf16.mxu0 0
    %3247 = vmatpush1.bf16.msra.mxu0 0
    %3248 = vmatprep.subr.bf16.mxu0 0
    %3249 = vmatpush1.bf16.msra.mxu0 0
    %3250 = vmatprep.subr.bf16.mxu0 0
    %3251 = vmatpush1.bf16.msra.mxu0 0
    %3252 = vmatprep.subr.bf16.mxu0 0
    %3253 = vmatpush1.bf16.msra.mxu0 0
    %3254 = vmatprep.subr.bf16.mxu0 0
    %3255 = vmatpush1.bf16.msra.mxu0 0
    %3256 = vmatprep.mubr.bf16.mxu0 0
    %3257 = vmatmul.mubr.bf16.gmra.mrb[0].mxu0 %v2294
    %v3258 = vpop.f32.mrb[0].mxu0
    %v3259 = vadd.f32 %v3210, %v3258
    %v3260 = vpop.f32.mrb[0].mxu0
    %v3261 = vpop.f32.mrb[0].mxu0
    %v3262 = vadd.f32 %v3210, %v3261
    %v3263 = vpop.f32.mrb[0].mxu0
    %3264 = vdwg.mxu0
    %s3265 = scalar_lea.vmem %s6, 96
    %v3266 = vld [vmem:[%s3265] sm:$0xf]
    %v3267 = vld [vmem:[%s3265 + $0x4] sm:$0xf]
    %v3268 = vld [vmem:[%s3265 + $0x8] sm:$0xf]
    %v3269 = vld [vmem:[%s3265 + $0xc] sm:$0xf]
    %s3270 = scalar_lea.vmem %s7, 6
    %v3271 = vld [vmem:[%s3270] sm:$0x1]
    %v3273 = vlaneseq
    %v3274 = vshrl.u32 %v3273, 7
    %v3275 = vsub.s32 0, %v3274
    %v3276 = vrot.slane %v3271, %v3275
    %v3282 = vunpack.c.l.b16 %v3266
    %v3283 = vunpack.c.l.b16 %v3267
    %v3284 = vunpack.c.l.b16 %v3268
    %v3285 = vunpack.c.l.b16 %v3269
    %v3286 = vpack.c.b16 %v3283, %v3282
    %v3287 = vpack.c.b16 %v3285, %v3284
    %3290 = vmatprep.subr.bf16.mxu0 0
    %3291 = vmatpush1.bf16.msra.mxu0 %v3286
    %3292 = vmatprep.subr.bf16.mxu0 0
    %3293 = vmatpush1.bf16.msra.mxu0 %v3287
    %3294 = vmatprep.subr.bf16.mxu0 0
    %3295 = vmatpush1.bf16.msra.mxu0 0
    %3296 = vmatprep.subr.bf16.mxu0 0
    %3297 = vmatpush1.bf16.msra.mxu0 0
    %3298 = vmatprep.subr.bf16.mxu0 0
    %3299 = vmatpush1.bf16.msra.mxu0 0
    %3300 = vmatprep.subr.bf16.mxu0 0
    %3301 = vmatpush1.bf16.msra.mxu0 0
    %3302 = vmatprep.subr.bf16.mxu0 0
    %3303 = vmatpush1.bf16.msra.mxu0 0
    %3304 = vmatprep.subr.bf16.mxu0 0
    %3305 = vmatpush1.bf16.msra.mxu0 0
    %3306 = vmatprep.subr.bf16.mxu0 0
    %3307 = vmatpush1.bf16.msra.mxu0 0
    %3308 = vmatprep.subr.bf16.mxu0 0
    %3309 = vmatpush1.bf16.msra.mxu0 0
    %3310 = vmatprep.subr.bf16.mxu0 0
    %3311 = vmatpush1.bf16.msra.mxu0 0
    %3312 = vmatprep.subr.bf16.mxu0 0
    %3313 = vmatpush1.bf16.msra.mxu0 0
    %3314 = vmatprep.subr.bf16.mxu0 0
    %3315 = vmatpush1.bf16.msra.mxu0 0
    %3316 = vmatprep.subr.bf16.mxu0 0
    %3317 = vmatpush1.bf16.msra.mxu0 0
    %3318 = vmatprep.subr.bf16.mxu0 0
    %3319 = vmatpush1.bf16.msra.mxu0 0
    %3320 = vmatprep.subr.bf16.mxu0 0
    %3321 = vmatpush1.bf16.msra.mxu0 0
    %3322 = vmatprep.mubr.bf16.mxu0 0
    %3323 = vmatmul.mubr.bf16.gmra.mrb[0].mxu0 %v2294
    %v3324 = vpop.f32.mrb[0].mxu0
    %v3325 = vadd.f32 %v3276, %v3324
    %v3326 = vpop.f32.mrb[0].mxu0
    %v3327 = vpop.f32.mrb[0].mxu0
    %v3328 = vadd.f32 %v3276, %v3327
    %v3329 = vpop.f32.mrb[0].mxu0
    %3330 = vdwg.mxu0
    %s3331 = scalar_lea.vmem %s8, 96
    %v3332 = vld [vmem:[%s3331] sm:$0xf]
    %v3333 = vld [vmem:[%s3331 + $0x4] sm:$0xf]
    %v3334 = vld [vmem:[%s3331 + $0x8] sm:$0xf]
    %v3335 = vld [vmem:[%s3331 + $0xc] sm:$0xf]
    %s3336 = scalar_lea.vmem %s9, 6
    %v3337 = vld [vmem:[%s3336] sm:$0x1]
    %v3339 = vlaneseq
    %v3340 = vshrl.u32 %v3339, 7
    %v3341 = vsub.s32 0, %v3340
    %v3342 = vrot.slane %v3337, %v3341
    %v3348 = vunpack.c.l.b16 %v3332
    %v3349 = vunpack.c.l.b16 %v3333
    %v3350 = vunpack.c.l.b16 %v3334
    %v3351 = vunpack.c.l.b16 %v3335
    %v3352 = vpack.c.b16 %v3349, %v3348
    %v3353 = vpack.c.b16 %v3351, %v3350
    %3356 = vmatprep.subr.bf16.mxu0 0
    %3357 = vmatpush1.bf16.msra.mxu0 %v3352
    %3358 = vmatprep.subr.bf16.mxu0 0
    %3359 = vmatpush1.bf16.msra.mxu0 %v3353
    %3360 = vmatprep.subr.bf16.mxu0 0
    %3361 = vmatpush1.bf16.msra.mxu0 0
    %3362 = vmatprep.subr.bf16.mxu0 0
    %3363 = vmatpush1.bf16.msra.mxu0 0
    %3364 = vmatprep.subr.bf16.mxu0 0
    %3365 = vmatpush1.bf16.msra.mxu0 0
    %3366 = vmatprep.subr.bf16.mxu0 0
    %3367 = vmatpush1.bf16.msra.mxu0 0
    %3368 = vmatprep.subr.bf16.mxu0 0
    %3369 = vmatpush1.bf16.msra.mxu0 0
    %3370 = vmatprep.subr.bf16.mxu0 0
    %3371 = vmatpush1.bf16.msra.mxu0 0
    %3372 = vmatprep.subr.bf16.mxu0 0
    %3373 = vmatpush1.bf16.msra.mxu0 0
    %3374 = vmatprep.subr.bf16.mxu0 0
    %3375 = vmatpush1.bf16.msra.mxu0 0
    %3376 = vmatprep.subr.bf16.mxu0 0
    %3377 = vmatpush1.bf16.msra.mxu0 0
    %3378 = vmatprep.subr.bf16.mxu0 0
    %3379 = vmatpush1.bf16.msra.mxu0 0
    %3380 = vmatprep.subr.bf16.mxu0 0
    %3381 = vmatpush1.bf16.msra.mxu0 0
    %3382 = vmatprep.subr.bf16.mxu0 0
    %3383 = vmatpush1.bf16.msra.mxu0 0
    %3384 = vmatprep.subr.bf16.mxu0 0
    %3385 = vmatpush1.bf16.msra.mxu0 0
    %3386 = vmatprep.subr.bf16.mxu0 0
    %3387 = vmatpush1.bf16.msra.mxu0 0
    %3388 = vmatprep.mubr.bf16.mxu0 0
    %3389 = vmatmul.mubr.bf16.gmra.mrb[0].mxu0 %v2294
    %v3390 = vpop.f32.mrb[0].mxu0
    %v3391 = vadd.f32 %v3342, %v3390
    %v3392 = vpop.f32.mrb[0].mxu0
    %v3393 = vpop.f32.mrb[0].mxu0
    %v3394 = vadd.f32 %v3342, %v3393
    %v3395 = vpop.f32.mrb[0].mxu0
    %3396 = vdwg.mxu0
    %v3397 = vpack.c.bf16 %v3259, %v3259
    %v3398 = vpack.c.bf16 %v3262, %v3262
    %v3399 = vpack.c.bf16 %v3325, %v3325
    %v3400 = vpack.c.bf16 %v3328, %v3328
    %v3402 = vsel %vm336, %v3397, 0
    %v3405 = vsel %vm336, %v3399, 0
    %3407 = vmatprep.subr.bf16.mxu0 0
    %3408 = vmatpush1.bf16.xpose.msra.mxu0 %v3405
    %3409 = vmatprep.subr.bf16.mxu0 0
    %3410 = vmatpush1.bf16.xpose.msra.mxu0 0
    %3411 = vmatprep.subr.bf16.mxu0 0
    %3412 = vmatpush1.bf16.xpose.msra.mxu0 0
    %3413 = vmatprep.subr.bf16.mxu0 0
    %3414 = vmatpush1.bf16.xpose.msra.mxu0 0
    %3415 = vmatprep.subr.bf16.mxu0 0
    %3416 = vmatpush1.bf16.xpose.msra.mxu0 0
    %3417 = vmatprep.subr.bf16.mxu0 0
    %3418 = vmatpush1.bf16.xpose.msra.mxu0 0
    %3419 = vmatprep.subr.bf16.mxu0 0
    %3420 = vmatpush1.bf16.xpose.msra.mxu0 0
    %3421 = vmatprep.subr.bf16.mxu0 0
    %3422 = vmatpush1.bf16.xpose.msra.mxu0 0
    %3423 = vmatprep.subr.bf16.mxu0 0
    %3424 = vmatpush1.bf16.xpose.msra.mxu0 0
    %3425 = vmatprep.subr.bf16.mxu0 0
    %3426 = vmatpush1.bf16.xpose.msra.mxu0 0
    %3427 = vmatprep.subr.bf16.mxu0 0
    %3428 = vmatpush1.bf16.xpose.msra.mxu0 0
    %3429 = vmatprep.subr.bf16.mxu0 0
    %3430 = vmatpush1.bf16.xpose.msra.mxu0 0
    %3431 = vmatprep.subr.bf16.mxu0 0
    %3432 = vmatpush1.bf16.xpose.msra.mxu0 0
    %3433 = vmatprep.subr.bf16.mxu0 0
    %3434 = vmatpush1.bf16.xpose.msra.mxu0 0
    %3435 = vmatprep.subr.bf16.mxu0 0
    %3436 = vmatpush1.bf16.xpose.msra.mxu0 0
    %3437 = vmatprep.subr.bf16.mxu0 0
    %3438 = vmatpush1.bf16.xpose.msra.mxu0 0
    %3439 = vmatprep.mubr.bf16.mxu0 0
    %3440 = vmatmul.mubr.bf16.gmra.mrb[0].mxu0 %v3402
    %v3441 = vpop.f32.mrb[0].mxu0
    %v3442 = vadd.f32 0.0, %v3441
    %v3443 = vpop.f32.mrb[0].mxu0
    %v3444 = vpop.f32.mrb[0].mxu0
    %v3445 = vpop.f32.mrb[0].mxu0
    %3446 = vdwg.mxu0
    %v3448 = vsel %vm336, %v3398, 0
    %v3451 = vsel %vm336, %v3400, 0
    %3453 = vmatprep.subr.bf16.mxu0 0
    %3454 = vmatpush1.bf16.xpose.msra.mxu0 %v3451
    %3455 = vmatprep.subr.bf16.mxu0 0
    %3456 = vmatpush1.bf16.xpose.msra.mxu0 0
    %3457 = vmatprep.subr.bf16.mxu0 0
    %3458 = vmatpush1.bf16.xpose.msra.mxu0 0
    %3459 = vmatprep.subr.bf16.mxu0 0
    %3460 = vmatpush1.bf16.xpose.msra.mxu0 0
    %3461 = vmatprep.subr.bf16.mxu0 0
    %3462 = vmatpush1.bf16.xpose.msra.mxu0 0
    %3463 = vmatprep.subr.bf16.mxu0 0
    %3464 = vmatpush1.bf16.xpose.msra.mxu0 0
    %3465 = vmatprep.subr.bf16.mxu0 0
    %3466 = vmatpush1.bf16.xpose.msra.mxu0 0
    %3467 = vmatprep.subr.bf16.mxu0 0
    %3468 = vmatpush1.bf16.xpose.msra.mxu0 0
    %3469 = vmatprep.subr.bf16.mxu0 0
    %3470 = vmatpush1.bf16.xpose.msra.mxu0 0
    %3471 = vmatprep.subr.bf16.mxu0 0
    %3472 = vmatpush1.bf16.xpose.msra.mxu0 0
    %3473 = vmatprep.subr.bf16.mxu0 0
    %3474 = vmatpush1.bf16.xpose.msra.mxu0 0
    %3475 = vmatprep.subr.bf16.mxu0 0
    %3476 = vmatpush1.bf16.xpose.msra.mxu0 0
    %3477 = vmatprep.subr.bf16.mxu0 0
    %3478 = vmatpush1.bf16.xpose.msra.mxu0 0
    %3479 = vmatprep.subr.bf16.mxu0 0
    %3480 = vmatpush1.bf16.xpose.msra.mxu0 0
    %3481 = vmatprep.subr.bf16.mxu0 0
    %3482 = vmatpush1.bf16.xpose.msra.mxu0 0
    %3483 = vmatprep.subr.bf16.mxu0 0
    %3484 = vmatpush1.bf16.xpose.msra.mxu0 0
    %3485 = vmatprep.mubr.bf16.mxu0 0
    %3486 = vmatmul.mubr.bf16.gmra.mrb[0].mxu0 %v3448
    %v3487 = vpop.f32.mrb[0].mxu0
    %v3488 = vadd.f32 0.0, %v3487
    %v3489 = vpop.f32.mrb[0].mxu0
    %v3490 = vpop.f32.mrb[0].mxu0
    %v3491 = vpop.f32.mrb[0].mxu0
    %3492 = vdwg.mxu0
    %v3493 = vmul.f32 %v3442, 0.35355338
    %v3494 = vmul.f32 %v3488, 0.35355338
    %v3495 = vsel %vm336, %v3493, -inf
    %3496 = vmax.xlane.f32.xlu0 %v3495
    %v3497 = vpop.xlane.xlu0 %3496
    %v3498 = vsel %vm336, %v3494, -inf
    %3499 = vmax.xlane.f32.xlu0 %v3498
    %v3500 = vpop.xlane.xlu0 %3499
    %v3501 = vsub.f32 %v3493, %v3497
    %v3502 = vsub.f32 %v3494, %v3500
    %v3503 = vmul.f32 %v3501, 1.442695
    %v3504 = vpow.pop %v3503
    %v3505 = vmul.f32 %v3502, 1.442695
    %v3506 = vpow.pop %v3505
    %v3507 = vsel %vm336, %v3504, 0.0
    %3508 = vadd.xlane.f32.xlu0 %v3507
    %v3509 = vpop.xlane.xlu0 %3508
    %v3510 = vsel %vm336, %v3506, 0.0
    %3511 = vadd.xlane.f32.xlu0 %v3510
    %v3512 = vpop.xlane.xlu0 %3511
    %v3513 = vrcp.pop %v3509
    %v3514 = vrcp.pop %v3512
    %v3515 = vmul.f32 %v3504, %v3513
    %v3516 = vmul.f32 %v3506, %v3514
    %v3517 = vpack.c.bf16 %v3515, %v3515
    %v3518 = vpack.c.bf16 %v3516, %v3516
    %v3519 = vpack.c.bf16 %v3391, %v3391
    %v3520 = vpack.c.bf16 %v3394, %v3394
    %v3522 = vsel %vm336, %v3517, 0
    %v3525 = vsel %vm460, %v3519, 0
    %3527 = vmatprep.subr.bf16.mxu0 0
    %3528 = vmatpush1.bf16.msra.mxu0 %v3525
    %3529 = vmatprep.subr.bf16.mxu0 0
    %3530 = vmatpush1.bf16.msra.mxu0 0
    %3531 = vmatprep.subr.bf16.mxu0 0
    %3532 = vmatpush1.bf16.msra.mxu0 0
    %3533 = vmatprep.subr.bf16.mxu0 0
    %3534 = vmatpush1.bf16.msra.mxu0 0
    %3535 = vmatprep.subr.bf16.mxu0 0
    %3536 = vmatpush1.bf16.msra.mxu0 0
    %3537 = vmatprep.subr.bf16.mxu0 0
    %3538 = vmatpush1.bf16.msra.mxu0 0
    %3539 = vmatprep.subr.bf16.mxu0 0
    %3540 = vmatpush1.bf16.msra.mxu0 0
    %3541 = vmatprep.subr.bf16.mxu0 0
    %3542 = vmatpush1.bf16.msra.mxu0 0
    %3543 = vmatprep.subr.bf16.mxu0 0
    %3544 = vmatpush1.bf16.msra.mxu0 0
    %3545 = vmatprep.subr.bf16.mxu0 0
    %3546 = vmatpush1.bf16.msra.mxu0 0
    %3547 = vmatprep.subr.bf16.mxu0 0
    %3548 = vmatpush1.bf16.msra.mxu0 0
    %3549 = vmatprep.subr.bf16.mxu0 0
    %3550 = vmatpush1.bf16.msra.mxu0 0
    %3551 = vmatprep.subr.bf16.mxu0 0
    %3552 = vmatpush1.bf16.msra.mxu0 0
    %3553 = vmatprep.subr.bf16.mxu0 0
    %3554 = vmatpush1.bf16.msra.mxu0 0
    %3555 = vmatprep.subr.bf16.mxu0 0
    %3556 = vmatpush1.bf16.msra.mxu0 0
    %3557 = vmatprep.subr.bf16.mxu0 0
    %3558 = vmatpush1.bf16.msra.mxu0 0
    %3559 = vmatprep.mubr.bf16.mxu0 0
    %3560 = vmatmul.mubr.bf16.gmra.mrb[0].mxu0 %v3522
    %v3561 = vpop.f32.mrb[0].mxu0
    %v3562 = vadd.f32 0.0, %v3561
    %v3563 = vpop.f32.mrb[0].mxu0
    %v3564 = vpop.f32.mrb[0].mxu0
    %v3565 = vpop.f32.mrb[0].mxu0
    %3566 = vdwg.mxu0
    %v3568 = vsel %vm336, %v3518, 0
    %v3571 = vsel %vm460, %v3520, 0
    %3573 = vmatprep.subr.bf16.mxu0 0
    %3574 = vmatpush1.bf16.msra.mxu0 %v3571
    %3575 = vmatprep.subr.bf16.mxu0 0
    %3576 = vmatpush1.bf16.msra.mxu0 0
    %3577 = vmatprep.subr.bf16.mxu0 0
    %3578 = vmatpush1.bf16.msra.mxu0 0
    %3579 = vmatprep.subr.bf16.mxu0 0
    %3580 = vmatpush1.bf16.msra.mxu0 0
    %3581 = vmatprep.subr.bf16.mxu0 0
    %3582 = vmatpush1.bf16.msra.mxu0 0
    %3583 = vmatprep.subr.bf16.mxu0 0
    %3584 = vmatpush1.bf16.msra.mxu0 0
    %3585 = vmatprep.subr.bf16.mxu0 0
    %3586 = vmatpush1.bf16.msra.mxu0 0
    %3587 = vmatprep.subr.bf16.mxu0 0
    %3588 = vmatpush1.bf16.msra.mxu0 0
    %3589 = vmatprep.subr.bf16.mxu0 0
    %3590 = vmatpush1.bf16.msra.mxu0 0
    %3591 = vmatprep.subr.bf16.mxu0 0
    %3592 = vmatpush1.bf16.msra.mxu0 0
    %3593 = vmatprep.subr.bf16.mxu0 0
    %3594 = vmatpush1.bf16.msra.mxu0 0
    %3595 = vmatprep.subr.bf16.mxu0 0
    %3596 = vmatpush1.bf16.msra.mxu0 0
    %3597 = vmatprep.subr.bf16.mxu0 0
    %3598 = vmatpush1.bf16.msra.mxu0 0
    %3599 = vmatprep.subr.bf16.mxu0 0
    %3600 = vmatpush1.bf16.msra.mxu0 0
    %3601 = vmatprep.subr.bf16.mxu0 0
    %3602 = vmatpush1.bf16.msra.mxu0 0
    %3603 = vmatprep.subr.bf16.mxu0 0
    %3604 = vmatpush1.bf16.msra.mxu0 0
    %3605 = vmatprep.mubr.bf16.mxu0 0
    %3606 = vmatmul.mubr.bf16.gmra.mrb[0].mxu0 %v3568
    %v3607 = vpop.f32.mrb[0].mxu0
    %v3608 = vadd.f32 0.0, %v3607
    %v3609 = vpop.f32.mrb[0].mxu0
    %v3610 = vpop.f32.mrb[0].mxu0
    %v3611 = vpop.f32.mrb[0].mxu0
    %3612 = vdwg.mxu0
    %v3613 = vpack.c.bf16 %v3608, %v3562
    %s3614 = scalar_lea.vmem %s10, 24
    %v3615 = vld [vmem:[%s3614] sm:$0xf]
    %v3617 = vsel %vm336, %v3613, 0
    %v3620 = vsel %vm460, %v3615, 0
    %3622 = vmatprep.subr.bf16.mxu0 0
    %3623 = vmatpush1.bf16.msra.mxu0 %v3620
    %3624 = vmatprep.subr.bf16.mxu0 0
    %3625 = vmatpush1.bf16.msra.mxu0 0
    %3626 = vmatprep.subr.bf16.mxu0 0
    %3627 = vmatpush1.bf16.msra.mxu0 0
    %3628 = vmatprep.subr.bf16.mxu0 0
    %3629 = vmatpush1.bf16.msra.mxu0 0
    %3630 = vmatprep.subr.bf16.mxu0 0
    %3631 = vmatpush1.bf16.msra.mxu0 0
    %3632 = vmatprep.subr.bf16.mxu0 0
    %3633 = vmatpush1.bf16.msra.mxu0 0
    %3634 = vmatprep.subr.bf16.mxu0 0
    %3635 = vmatpush1.bf16.msra.mxu0 0
    %3636 = vmatprep.subr.bf16.mxu0 0
    %3637 = vmatpush1.bf16.msra.mxu0 0
    %3638 = vmatprep.subr.bf16.mxu0 0
    %3639 = vmatpush1.bf16.msra.mxu0 0
    %3640 = vmatprep.subr.bf16.mxu0 0
    %3641 = vmatpush1.bf16.msra.mxu0 0
    %3642 = vmatprep.subr.bf16.mxu0 0
    %3643 = vmatpush1.bf16.msra.mxu0 0
    %3644 = vmatprep.subr.bf16.mxu0 0
    %3645 = vmatpush1.bf16.msra.mxu0 0
    %3646 = vmatprep.subr.bf16.mxu0 0
    %3647 = vmatpush1.bf16.msra.mxu0 0
    %3648 = vmatprep.subr.bf16.mxu0 0
    %3649 = vmatpush1.bf16.msra.mxu0 0
    %3650 = vmatprep.subr.bf16.mxu0 0
    %3651 = vmatpush1.bf16.msra.mxu0 0
    %3652 = vmatprep.subr.bf16.mxu0 0
    %3653 = vmatpush1.bf16.msra.mxu0 0
    %3654 = vmatprep.mubr.bf16.mxu0 0
    %3655 = vmatmul.mubr.bf16.gmra.mrb[0].mxu0 %v3617
    %v3656 = vpop.f32.mrb[0].mxu0
    %v3657 = vadd.f32 0.0, %v3656
    %v3658 = vpop.f32.mrb[0].mxu0
    %v3659 = vpop.f32.mrb[0].mxu0
    %v3660 = vadd.f32 0.0, %v3659
    %v3661 = vpop.f32.mrb[0].mxu0
    %3662 = vdwg.mxu0
    %v3663 = vadd.f32 %v3193, %v3657
    %v3664 = vadd.f32 %v3196, %v3660
    %s3665 = scalar_lea.vmem %s4, 112
    %v3666 = vld [vmem:[%s3665] sm:$0xf]
    %v3667 = vld [vmem:[%s3665 + $0x4] sm:$0xf]
    %v3668 = vld [vmem:[%s3665 + $0x8] sm:$0xf]
    %v3669 = vld [vmem:[%s3665 + $0xc] sm:$0xf]
    %s3670 = scalar_lea.vmem %s5, 7
    %v3671 = vld [vmem:[%s3670] sm:$0x1]
    %v3673 = vlaneseq
    %v3674 = vshrl.u32 %v3673, 7
    %v3675 = vsub.s32 0, %v3674
    %v3676 = vrot.slane %v3671, %v3675
    %v3682 = vunpack.c.l.b16 %v3666
    %v3683 = vunpack.c.l.b16 %v3667
    %v3684 = vunpack.c.l.b16 %v3668
    %v3685 = vunpack.c.l.b16 %v3669
    %v3686 = vpack.c.b16 %v3683, %v3682
    %v3687 = vpack.c.b16 %v3685, %v3684
    %3690 = vmatprep.subr.bf16.mxu0 0
    %3691 = vmatpush1.bf16.msra.mxu0 %v3686
    %3692 = vmatprep.subr.bf16.mxu0 0
    %3693 = vmatpush1.bf16.msra.mxu0 %v3687
    %3694 = vmatprep.subr.bf16.mxu0 0
    %3695 = vmatpush1.bf16.msra.mxu0 0
    %3696 = vmatprep.subr.bf16.mxu0 0
    %3697 = vmatpush1.bf16.msra.mxu0 0
    %3698 = vmatprep.subr.bf16.mxu0 0
    %3699 = vmatpush1.bf16.msra.mxu0 0
    %3700 = vmatprep.subr.bf16.mxu0 0
    %3701 = vmatpush1.bf16.msra.mxu0 0
    %3702 = vmatprep.subr.bf16.mxu0 0
    %3703 = vmatpush1.bf16.msra.mxu0 0
    %3704 = vmatprep.subr.bf16.mxu0 0
    %3705 = vmatpush1.bf16.msra.mxu0 0
    %3706 = vmatprep.subr.bf16.mxu0 0
    %3707 = vmatpush1.bf16.msra.mxu0 0
    %3708 = vmatprep.subr.bf16.mxu0 0
    %3709 = vmatpush1.bf16.msra.mxu0 0
    %3710 = vmatprep.subr.bf16.mxu0 0
    %3711 = vmatpush1.bf16.msra.mxu0 0
    %3712 = vmatprep.subr.bf16.mxu0 0
    %3713 = vmatpush1.bf16.msra.mxu0 0
    %3714 = vmatprep.subr.bf16.mxu0 0
    %3715 = vmatpush1.bf16.msra.mxu0 0
    %3716 = vmatprep.subr.bf16.mxu0 0
    %3717 = vmatpush1.bf16.msra.mxu0 0
    %3718 = vmatprep.subr.bf16.mxu0 0
    %3719 = vmatpush1.bf16.msra.mxu0 0
    %3720 = vmatprep.subr.bf16.mxu0 0
    %3721 = vmatpush1.bf16.msra.mxu0 0
    %3722 = vmatprep.mubr.bf16.mxu0 0
    %3723 = vmatmul.mubr.bf16.gmra.mrb[0].mxu0 %v2294
    %v3724 = vpop.f32.mrb[0].mxu0
    %v3725 = vadd.f32 %v3676, %v3724
    %v3726 = vpop.f32.mrb[0].mxu0
    %v3727 = vpop.f32.mrb[0].mxu0
    %v3728 = vadd.f32 %v3676, %v3727
    %v3729 = vpop.f32.mrb[0].mxu0
    %3730 = vdwg.mxu0
    %s3731 = scalar_lea.vmem %s6, 112
    %v3732 = vld [vmem:[%s3731] sm:$0xf]
    %v3733 = vld [vmem:[%s3731 + $0x4] sm:$0xf]
    %v3734 = vld [vmem:[%s3731 + $0x8] sm:$0xf]
    %v3735 = vld [vmem:[%s3731 + $0xc] sm:$0xf]
    %s3736 = scalar_lea.vmem %s7, 7
    %v3737 = vld [vmem:[%s3736] sm:$0x1]
    %v3739 = vlaneseq
    %v3740 = vshrl.u32 %v3739, 7
    %v3741 = vsub.s32 0, %v3740
    %v3742 = vrot.slane %v3737, %v3741
    %v3748 = vunpack.c.l.b16 %v3732
    %v3749 = vunpack.c.l.b16 %v3733
    %v3750 = vunpack.c.l.b16 %v3734
    %v3751 = vunpack.c.l.b16 %v3735
    %v3752 = vpack.c.b16 %v3749, %v3748
    %v3753 = vpack.c.b16 %v3751, %v3750
    %3756 = vmatprep.subr.bf16.mxu0 0
    %3757 = vmatpush1.bf16.msra.mxu0 %v3752
    %3758 = vmatprep.subr.bf16.mxu0 0
    %3759 = vmatpush1.bf16.msra.mxu0 %v3753
    %3760 = vmatprep.subr.bf16.mxu0 0
    %3761 = vmatpush1.bf16.msra.mxu0 0
    %3762 = vmatprep.subr.bf16.mxu0 0
    %3763 = vmatpush1.bf16.msra.mxu0 0
    %3764 = vmatprep.subr.bf16.mxu0 0
    %3765 = vmatpush1.bf16.msra.mxu0 0
    %3766 = vmatprep.subr.bf16.mxu0 0
    %3767 = vmatpush1.bf16.msra.mxu0 0
    %3768 = vmatprep.subr.bf16.mxu0 0
    %3769 = vmatpush1.bf16.msra.mxu0 0
    %3770 = vmatprep.subr.bf16.mxu0 0
    %3771 = vmatpush1.bf16.msra.mxu0 0
    %3772 = vmatprep.subr.bf16.mxu0 0
    %3773 = vmatpush1.bf16.msra.mxu0 0
    %3774 = vmatprep.subr.bf16.mxu0 0
    %3775 = vmatpush1.bf16.msra.mxu0 0
    %3776 = vmatprep.subr.bf16.mxu0 0
    %3777 = vmatpush1.bf16.msra.mxu0 0
    %3778 = vmatprep.subr.bf16.mxu0 0
    %3779 = vmatpush1.bf16.msra.mxu0 0
    %3780 = vmatprep.subr.bf16.mxu0 0
    %3781 = vmatpush1.bf16.msra.mxu0 0
    %3782 = vmatprep.subr.bf16.mxu0 0
    %3783 = vmatpush1.bf16.msra.mxu0 0
    %3784 = vmatprep.subr.bf16.mxu0 0
    %3785 = vmatpush1.bf16.msra.mxu0 0
    %3786 = vmatprep.subr.bf16.mxu0 0
    %3787 = vmatpush1.bf16.msra.mxu0 0
    %3788 = vmatprep.mubr.bf16.mxu0 0
    %3789 = vmatmul.mubr.bf16.gmra.mrb[0].mxu0 %v2294
    %v3790 = vpop.f32.mrb[0].mxu0
    %v3791 = vadd.f32 %v3742, %v3790
    %v3792 = vpop.f32.mrb[0].mxu0
    %v3793 = vpop.f32.mrb[0].mxu0
    %v3794 = vadd.f32 %v3742, %v3793
    %v3795 = vpop.f32.mrb[0].mxu0
    %3796 = vdwg.mxu0
    %s3797 = scalar_lea.vmem %s8, 112
    %v3798 = vld [vmem:[%s3797] sm:$0xf]
    %v3799 = vld [vmem:[%s3797 + $0x4] sm:$0xf]
    %v3800 = vld [vmem:[%s3797 + $0x8] sm:$0xf]
    %v3801 = vld [vmem:[%s3797 + $0xc] sm:$0xf]
    %s3802 = scalar_lea.vmem %s9, 7
    %v3803 = vld [vmem:[%s3802] sm:$0x1]
    %v3805 = vlaneseq
    %v3806 = vshrl.u32 %v3805, 7
    %v3807 = vsub.s32 0, %v3806
    %v3808 = vrot.slane %v3803, %v3807
    %v3814 = vunpack.c.l.b16 %v3798
    %v3815 = vunpack.c.l.b16 %v3799
    %v3816 = vunpack.c.l.b16 %v3800
    %v3817 = vunpack.c.l.b16 %v3801
    %v3818 = vpack.c.b16 %v3815, %v3814
    %v3819 = vpack.c.b16 %v3817, %v3816
    %3822 = vmatprep.subr.bf16.mxu0 0
    %3823 = vmatpush1.bf16.msra.mxu0 %v3818
    %3824 = vmatprep.subr.bf16.mxu0 0
    %3825 = vmatpush1.bf16.msra.mxu0 %v3819
    %3826 = vmatprep.subr.bf16.mxu0 0
    %3827 = vmatpush1.bf16.msra.mxu0 0
    %3828 = vmatprep.subr.bf16.mxu0 0
    %3829 = vmatpush1.bf16.msra.mxu0 0
    %3830 = vmatprep.subr.bf16.mxu0 0
    %3831 = vmatpush1.bf16.msra.mxu0 0
    %3832 = vmatprep.subr.bf16.mxu0 0
    %3833 = vmatpush1.bf16.msra.mxu0 0
    %3834 = vmatprep.subr.bf16.mxu0 0
    %3835 = vmatpush1.bf16.msra.mxu0 0
    %3836 = vmatprep.subr.bf16.mxu0 0
    %3837 = vmatpush1.bf16.msra.mxu0 0
    %3838 = vmatprep.subr.bf16.mxu0 0
    %3839 = vmatpush1.bf16.msra.mxu0 0
    %3840 = vmatprep.subr.bf16.mxu0 0
    %3841 = vmatpush1.bf16.msra.mxu0 0
    %3842 = vmatprep.subr.bf16.mxu0 0
    %3843 = vmatpush1.bf16.msra.mxu0 0
    %3844 = vmatprep.subr.bf16.mxu0 0
    %3845 = vmatpush1.bf16.msra.mxu0 0
    %3846 = vmatprep.subr.bf16.mxu0 0
    %3847 = vmatpush1.bf16.msra.mxu0 0
    %3848 = vmatprep.subr.bf16.mxu0 0
    %3849 = vmatpush1.bf16.msra.mxu0 0
    %3850 = vmatprep.subr.bf16.mxu0 0
    %3851 = vmatpush1.bf16.msra.mxu0 0
    %3852 = vmatprep.subr.bf16.mxu0 0
    %3853 = vmatpush1.bf16.msra.mxu0 0
    %3854 = vmatprep.mubr.bf16.mxu0 0
    %3855 = vmatmul.mubr.bf16.gmra.mrb[0].mxu0 %v2294
    %v3856 = vpop.f32.mrb[0].mxu0
    %v3857 = vadd.f32 %v3808, %v3856
    %v3858 = vpop.f32.mrb[0].mxu0
    %v3859 = vpop.f32.mrb[0].mxu0
    %v3860 = vadd.f32 %v3808, %v3859
    %v3861 = vpop.f32.mrb[0].mxu0
    %3862 = vdwg.mxu0
    %v3863 = vpack.c.bf16 %v3725, %v3725
    %v3864 = vpack.c.bf16 %v3728, %v3728
    %v3865 = vpack.c.bf16 %v3791, %v3791
    %v3866 = vpack.c.bf16 %v3794, %v3794
    %v3868 = vsel %vm336, %v3863, 0
    %v3871 = vsel %vm336, %v3865, 0
    %3873 = vmatprep.subr.bf16.mxu0 0
    %3874 = vmatpush1.bf16.xpose.msra.mxu0 %v3871
    %3875 = vmatprep.subr.bf16.mxu0 0
    %3876 = vmatpush1.bf16.xpose.msra.mxu0 0
    %3877 = vmatprep.subr.bf16.mxu0 0
    %3878 = vmatpush1.bf16.xpose.msra.mxu0 0
    %3879 = vmatprep.subr.bf16.mxu0 0
    %3880 = vmatpush1.bf16.xpose.msra.mxu0 0
    %3881 = vmatprep.subr.bf16.mxu0 0
    %3882 = vmatpush1.bf16.xpose.msra.mxu0 0
    %3883 = vmatprep.subr.bf16.mxu0 0
    %3884 = vmatpush1.bf16.xpose.msra.mxu0 0
    %3885 = vmatprep.subr.bf16.mxu0 0
    %3886 = vmatpush1.bf16.xpose.msra.mxu0 0
    %3887 = vmatprep.subr.bf16.mxu0 0
    %3888 = vmatpush1.bf16.xpose.msra.mxu0 0
    %3889 = vmatprep.subr.bf16.mxu0 0
    %3890 = vmatpush1.bf16.xpose.msra.mxu0 0
    %3891 = vmatprep.subr.bf16.mxu0 0
    %3892 = vmatpush1.bf16.xpose.msra.mxu0 0
    %3893 = vmatprep.subr.bf16.mxu0 0
    %3894 = vmatpush1.bf16.xpose.msra.mxu0 0
    %3895 = vmatprep.subr.bf16.mxu0 0
    %3896 = vmatpush1.bf16.xpose.msra.mxu0 0
    %3897 = vmatprep.subr.bf16.mxu0 0
    %3898 = vmatpush1.bf16.xpose.msra.mxu0 0
    %3899 = vmatprep.subr.bf16.mxu0 0
    %3900 = vmatpush1.bf16.xpose.msra.mxu0 0
    %3901 = vmatprep.subr.bf16.mxu0 0
    %3902 = vmatpush1.bf16.xpose.msra.mxu0 0
    %3903 = vmatprep.subr.bf16.mxu0 0
    %3904 = vmatpush1.bf16.xpose.msra.mxu0 0
    %3905 = vmatprep.mubr.bf16.mxu0 0
    %3906 = vmatmul.mubr.bf16.gmra.mrb[0].mxu0 %v3868
    %v3907 = vpop.f32.mrb[0].mxu0
    %v3908 = vadd.f32 0.0, %v3907
    %v3909 = vpop.f32.mrb[0].mxu0
    %v3910 = vpop.f32.mrb[0].mxu0
    %v3911 = vpop.f32.mrb[0].mxu0
    %3912 = vdwg.mxu0
    %v3914 = vsel %vm336, %v3864, 0
    %v3917 = vsel %vm336, %v3866, 0
    %3919 = vmatprep.subr.bf16.mxu0 0
    %3920 = vmatpush1.bf16.xpose.msra.mxu0 %v3917
    %3921 = vmatprep.subr.bf16.mxu0 0
    %3922 = vmatpush1.bf16.xpose.msra.mxu0 0
    %3923 = vmatprep.subr.bf16.mxu0 0
    %3924 = vmatpush1.bf16.xpose.msra.mxu0 0
    %3925 = vmatprep.subr.bf16.mxu0 0
    %3926 = vmatpush1.bf16.xpose.msra.mxu0 0
    %3927 = vmatprep.subr.bf16.mxu0 0
    %3928 = vmatpush1.bf16.xpose.msra.mxu0 0
    %3929 = vmatprep.subr.bf16.mxu0 0
    %3930 = vmatpush1.bf16.xpose.msra.mxu0 0
    %3931 = vmatprep.subr.bf16.mxu0 0
    %3932 = vmatpush1.bf16.xpose.msra.mxu0 0
    %3933 = vmatprep.subr.bf16.mxu0 0
    %3934 = vmatpush1.bf16.xpose.msra.mxu0 0
    %3935 = vmatprep.subr.bf16.mxu0 0
    %3936 = vmatpush1.bf16.xpose.msra.mxu0 0
    %3937 = vmatprep.subr.bf16.mxu0 0
    %3938 = vmatpush1.bf16.xpose.msra.mxu0 0
    %3939 = vmatprep.subr.bf16.mxu0 0
    %3940 = vmatpush1.bf16.xpose.msra.mxu0 0
    %3941 = vmatprep.subr.bf16.mxu0 0
    %3942 = vmatpush1.bf16.xpose.msra.mxu0 0
    %3943 = vmatprep.subr.bf16.mxu0 0
    %3944 = vmatpush1.bf16.xpose.msra.mxu0 0
    %3945 = vmatprep.subr.bf16.mxu0 0
    %3946 = vmatpush1.bf16.xpose.msra.mxu0 0
    %3947 = vmatprep.subr.bf16.mxu0 0
    %3948 = vmatpush1.bf16.xpose.msra.mxu0 0
    %3949 = vmatprep.subr.bf16.mxu0 0
    %3950 = vmatpush1.bf16.xpose.msra.mxu0 0
    %3951 = vmatprep.mubr.bf16.mxu0 0
    %3952 = vmatmul.mubr.bf16.gmra.mrb[0].mxu0 %v3914
    %v3953 = vpop.f32.mrb[0].mxu0
    %v3954 = vadd.f32 0.0, %v3953
    %v3955 = vpop.f32.mrb[0].mxu0
    %v3956 = vpop.f32.mrb[0].mxu0
    %v3957 = vpop.f32.mrb[0].mxu0
    %3958 = vdwg.mxu0
    %v3959 = vmul.f32 %v3908, 0.35355338
    %v3960 = vmul.f32 %v3954, 0.35355338
    %v3961 = vsel %vm336, %v3959, -inf
    %3962 = vmax.xlane.f32.xlu0 %v3961
    %v3963 = vpop.xlane.xlu0 %3962
    %v3964 = vsel %vm336, %v3960, -inf
    %3965 = vmax.xlane.f32.xlu0 %v3964
    %v3966 = vpop.xlane.xlu0 %3965
    %v3967 = vsub.f32 %v3959, %v3963
    %v3968 = vsub.f32 %v3960, %v3966
    %v3969 = vmul.f32 %v3967, 1.442695
    %v3970 = vpow.pop %v3969
    %v3971 = vmul.f32 %v3968, 1.442695
    %v3972 = vpow.pop %v3971
    %v3973 = vsel %vm336, %v3970, 0.0
    %3974 = vadd.xlane.f32.xlu0 %v3973
    %v3975 = vpop.xlane.xlu0 %3974
    %v3976 = vsel %vm336, %v3972, 0.0
    %3977 = vadd.xlane.f32.xlu0 %v3976
    %v3978 = vpop.xlane.xlu0 %3977
    %v3979 = vrcp.pop %v3975
    %v3980 = vrcp.pop %v3978
    %v3981 = vmul.f32 %v3970, %v3979
    %v3982 = vmul.f32 %v3972, %v3980
    %v3983 = vpack.c.bf16 %v3981, %v3981
    %v3984 = vpack.c.bf16 %v3982, %v3982
    %v3985 = vpack.c.bf16 %v3857, %v3857
    %v3986 = vpack.c.bf16 %v3860, %v3860
    %v3988 = vsel %vm336, %v3983, 0
    %v3991 = vsel %vm460, %v3985, 0
    %3993 = vmatprep.subr.bf16.mxu0 0
    %3994 = vmatpush1.bf16.msra.mxu0 %v3991
    %3995 = vmatprep.subr.bf16.mxu0 0
    %3996 = vmatpush1.bf16.msra.mxu0 0
    %3997 = vmatprep.subr.bf16.mxu0 0
    %3998 = vmatpush1.bf16.msra.mxu0 0
    %3999 = vmatprep.subr.bf16.mxu0 0
    %4000 = vmatpush1.bf16.msra.mxu0 0
    %4001 = vmatprep.subr.bf16.mxu0 0
    %4002 = vmatpush1.bf16.msra.mxu0 0
    %4003 = vmatprep.subr.bf16.mxu0 0
    %4004 = vmatpush1.bf16.msra.mxu0 0
    %4005 = vmatprep.subr.bf16.mxu0 0
    %4006 = vmatpush1.bf16.msra.mxu0 0
    %4007 = vmatprep.subr.bf16.mxu0 0
    %4008 = vmatpush1.bf16.msra.mxu0 0
    %4009 = vmatprep.subr.bf16.mxu0 0
    %4010 = vmatpush1.bf16.msra.mxu0 0
    %4011 = vmatprep.subr.bf16.mxu0 0
    %4012 = vmatpush1.bf16.msra.mxu0 0
    %4013 = vmatprep.subr.bf16.mxu0 0
    %4014 = vmatpush1.bf16.msra.mxu0 0
    %4015 = vmatprep.subr.bf16.mxu0 0
    %4016 = vmatpush1.bf16.msra.mxu0 0
    %4017 = vmatprep.subr.bf16.mxu0 0
    %4018 = vmatpush1.bf16.msra.mxu0 0
    %4019 = vmatprep.subr.bf16.mxu0 0
    %4020 = vmatpush1.bf16.msra.mxu0 0
    %4021 = vmatprep.subr.bf16.mxu0 0
    %4022 = vmatpush1.bf16.msra.mxu0 0
    %4023 = vmatprep.subr.bf16.mxu0 0
    %4024 = vmatpush1.bf16.msra.mxu0 0
    %4025 = vmatprep.mubr.bf16.mxu0 0
    %4026 = vmatmul.mubr.bf16.gmra.mrb[0].mxu0 %v3988
    %v4027 = vpop.f32.mrb[0].mxu0
    %v4028 = vadd.f32 0.0, %v4027
    %v4029 = vpop.f32.mrb[0].mxu0
    %v4030 = vpop.f32.mrb[0].mxu0
    %v4031 = vpop.f32.mrb[0].mxu0
    %4032 = vdwg.mxu0
    %v4034 = vsel %vm336, %v3984, 0
    %v4037 = vsel %vm460, %v3986, 0
    %4039 = vmatprep.subr.bf16.mxu0 0
    %4040 = vmatpush1.bf16.msra.mxu0 %v4037
    %4041 = vmatprep.subr.bf16.mxu0 0
    %4042 = vmatpush1.bf16.msra.mxu0 0
    %4043 = vmatprep.subr.bf16.mxu0 0
    %4044 = vmatpush1.bf16.msra.mxu0 0
    %4045 = vmatprep.subr.bf16.mxu0 0
    %4046 = vmatpush1.bf16.msra.mxu0 0
    %4047 = vmatprep.subr.bf16.mxu0 0
    %4048 = vmatpush1.bf16.msra.mxu0 0
    %4049 = vmatprep.subr.bf16.mxu0 0
    %4050 = vmatpush1.bf16.msra.mxu0 0
    %4051 = vmatprep.subr.bf16.mxu0 0
    %4052 = vmatpush1.bf16.msra.mxu0 0
    %4053 = vmatprep.subr.bf16.mxu0 0
    %4054 = vmatpush1.bf16.msra.mxu0 0
    %4055 = vmatprep.subr.bf16.mxu0 0
    %4056 = vmatpush1.bf16.msra.mxu0 0
    %4057 = vmatprep.subr.bf16.mxu0 0
    %4058 = vmatpush1.bf16.msra.mxu0 0
    %4059 = vmatprep.subr.bf16.mxu0 0
    %4060 = vmatpush1.bf16.msra.mxu0 0
    %4061 = vmatprep.subr.bf16.mxu0 0
    %4062 = vmatpush1.bf16.msra.mxu0 0
    %4063 = vmatprep.subr.bf16.mxu0 0
    %4064 = vmatpush1.bf16.msra.mxu0 0
    %4065 = vmatprep.subr.bf16.mxu0 0
    %4066 = vmatpush1.bf16.msra.mxu0 0
    %4067 = vmatprep.subr.bf16.mxu0 0
    %4068 = vmatpush1.bf16.msra.mxu0 0
    %4069 = vmatprep.subr.bf16.mxu0 0
    %4070 = vmatpush1.bf16.msra.mxu0 0
    %4071 = vmatprep.mubr.bf16.mxu0 0
    %4072 = vmatmul.mubr.bf16.gmra.mrb[0].mxu0 %v4034
    %v4073 = vpop.f32.mrb[0].mxu0
    %v4074 = vadd.f32 0.0, %v4073
    %v4075 = vpop.f32.mrb[0].mxu0
    %v4076 = vpop.f32.mrb[0].mxu0
    %v4077 = vpop.f32.mrb[0].mxu0
    %4078 = vdwg.mxu0
    %v4079 = vpack.c.bf16 %v4074, %v4028
    %s4080 = scalar_lea.vmem %s10, 28
    %v4081 = vld [vmem:[%s4080] sm:$0xf]
    %v4083 = vsel %vm336, %v4079, 0
    %v4086 = vsel %vm460, %v4081, 0
    %4088 = vmatprep.subr.bf16.mxu0 0
    %4089 = vmatpush1.bf16.msra.mxu0 %v4086
    %4090 = vmatprep.subr.bf16.mxu0 0
    %4091 = vmatpush1.bf16.msra.mxu0 0
    %4092 = vmatprep.subr.bf16.mxu0 0
    %4093 = vmatpush1.bf16.msra.mxu0 0
    %4094 = vmatprep.subr.bf16.mxu0 0
    %4095 = vmatpush1.bf16.msra.mxu0 0
    %4096 = vmatprep.subr.bf16.mxu0 0
    %4097 = vmatpush1.bf16.msra.mxu0 0
    %4098 = vmatprep.subr.bf16.mxu0 0
    %4099 = vmatpush1.bf16.msra.mxu0 0
    %4100 = vmatprep.subr.bf16.mxu0 0
    %4101 = vmatpush1.bf16.msra.mxu0 0
    %4102 = vmatprep.subr.bf16.mxu0 0
    %4103 = vmatpush1.bf16.msra.mxu0 0
    %4104 = vmatprep.subr.bf16.mxu0 0
    %4105 = vmatpush1.bf16.msra.mxu0 0
    %4106 = vmatprep.subr.bf16.mxu0 0
    %4107 = vmatpush1.bf16.msra.mxu0 0
    %4108 = vmatprep.subr.bf16.mxu0 0
    %4109 = vmatpush1.bf16.msra.mxu0 0
    %4110 = vmatprep.subr.bf16.mxu0 0
    %4111 = vmatpush1.bf16.msra.mxu0 0
    %4112 = vmatprep.subr.bf16.mxu0 0
    %4113 = vmatpush1.bf16.msra.mxu0 0
    %4114 = vmatprep.subr.bf16.mxu0 0
    %4115 = vmatpush1.bf16.msra.mxu0 0
    %4116 = vmatprep.subr.bf16.mxu0 0
    %4117 = vmatpush1.bf16.msra.mxu0 0
    %4118 = vmatprep.subr.bf16.mxu0 0
    %4119 = vmatpush1.bf16.msra.mxu0 0
    %4120 = vmatprep.mubr.bf16.mxu0 0
    %4121 = vmatmul.mubr.bf16.gmra.mrb[0].mxu0 %v4083
    %v4122 = vpop.f32.mrb[0].mxu0
    %v4123 = vadd.f32 0.0, %v4122
    %v4124 = vpop.f32.mrb[0].mxu0
    %v4125 = vpop.f32.mrb[0].mxu0
    %v4126 = vadd.f32 0.0, %v4125
    %v4127 = vpop.f32.mrb[0].mxu0
    %4128 = vdwg.mxu0
    %v4129 = vadd.f32 %v3663, %v4123
    %v4130 = vadd.f32 %v3664, %v4126
    %s4131 = scalar_lea.vmem %s11, 1
    %v4132 = vld [vmem:[%s4131] sm:$0x1]
    %v4134 = vlaneseq
    %v4135 = vshrl.u32 %v4134, 7
    %v4136 = vsub.s32 0, %v4135
    %v4137 = vrot.slane %v4132, %v4136
    %v4139 = vadd.f32 %v4129, %v4137
    %v4140 = vadd.f32 %v4130, %v4137
    %v4141 = vadd.f32 %v4139, %v2265
    %v4142 = vadd.f32 %v4140, %v2266
    %s4143 = scalar_lea.vmem %s12, 1
    %v4144 = vld [vmem:[%s4143] sm:$0x1]
    %s4145 = scalar_lea.vmem %s13, 1
    %v4146 = vld [vmem:[%s4145] sm:$0x1]
    %v4147 = vsel %vm92, %v4141, 0.0
    %4148 = vadd.xlane.f32.xlu0 %v4147
    %v4149 = vpop.xlane.xlu0 %4148
    %v4150 = vsel %vm92, %v4142, 0.0
    %4151 = vadd.xlane.f32.xlu0 %v4150
    %v4152 = vpop.xlane.xlu0 %4151
    %v4153 = vmul.f32 %v4149, %v99
    %v4154 = vmul.f32 %v4152, %v99
    %v4155 = vsub.f32 %v4141, %v4153
    %v4156 = vsub.f32 %v4142, %v4154
    %v4157 = vmul.f32 %v4155, %v4155
    %v4158 = vmul.f32 %v4156, %v4156
    %v4159 = vsel %vm92, %v4157, 0.0
    %4160 = vadd.xlane.f32.xlu0 %v4159
    %v4161 = vpop.xlane.xlu0 %4160
    %v4162 = vsel %vm92, %v4158, 0.0
    %4163 = vadd.xlane.f32.xlu0 %v4162
    %v4164 = vpop.xlane.xlu0 %4163
    %v4165 = vmul.f32 %v4161, %v99
    %v4166 = vmul.f32 %v4164, %v99
    %v4167 = vadd.f32 %v4165, 1e-12
    %v4168 = vadd.f32 %v4166, 1e-12
    %v4169 = vrsqrt.pop %v4167
    %v4170 = vrsqrt.pop %v4168
    %v4171 = vmul.f32 %v4155, %v4169
    %v4172 = vmul.f32 %v4156, %v4170
    %v4174 = vlaneseq
    %v4175 = vshrl.u32 %v4174, 7
    %v4176 = vsub.s32 0, %v4175
    %v4177 = vrot.slane %v4144, %v4176
    %v4179 = vmul.f32 %v4171, %v4177
    %v4180 = vmul.f32 %v4172, %v4177
    %v4182 = vlaneseq
    %v4183 = vshrl.u32 %v4182, 7
    %v4184 = vsub.s32 0, %v4183
    %v4185 = vrot.slane %v4146, %v4184
    %v4187 = vadd.f32 %v4179, %v4185
    %v4188 = vadd.f32 %v4180, %v4185
    %v4189 = vpack.c.bf16 %v4188, %v4187
    %s4190 = scalar_lea.vmem %s14, 16
    %v4191 = vld [vmem:[%s4190] sm:$0xf]
    %v4192 = vld [vmem:[%s4190 + $0x4] sm:$0xf]
    %v4193 = vld [vmem:[%s4190 + $0x8] sm:$0xf]
    %v4194 = vld [vmem:[%s4190 + $0xc] sm:$0xf]
    %s4195 = scalar_lea.vmem %s15, 1
    %v4196 = vld [vmem:[%s4195] sm:$0x1]
    %v4198 = vlaneseq
    %v4199 = vshrl.u32 %v4198, 7
    %v4200 = vsub.s32 0, %v4199
    %v4201 = vrot.slane %v4196, %v4200
    %v4207 = vunpack.c.l.b16 %v4191
    %v4208 = vunpack.c.l.b16 %v4192
    %v4209 = vunpack.c.l.b16 %v4193
    %v4210 = vunpack.c.l.b16 %v4194
    %v4211 = vpack.c.b16 %v4208, %v4207
    %v4212 = vpack.c.b16 %v4210, %v4209
    %v4216 = vsel %vm92, %v4189, 0
    %4218 = vmatprep.subr.bf16.mxu0 0
    %4219 = vmatpush1.bf16.msra.mxu0 %v4211
    %4220 = vmatprep.subr.bf16.mxu0 0
    %4221 = vmatpush1.bf16.msra.mxu0 %v4212
    %4222 = vmatprep.subr.bf16.mxu0 0
    %4223 = vmatpush1.bf16.msra.mxu0 0
    %4224 = vmatprep.subr.bf16.mxu0 0
    %4225 = vmatpush1.bf16.msra.mxu0 0
    %4226 = vmatprep.subr.bf16.mxu0 0
    %4227 = vmatpush1.bf16.msra.mxu0 0
    %4228 = vmatprep.subr.bf16.mxu0 0
    %4229 = vmatpush1.bf16.msra.mxu0 0
    %4230 = vmatprep.subr.bf16.mxu0 0
    %4231 = vmatpush1.bf16.msra.mxu0 0
    %4232 = vmatprep.subr.bf16.mxu0 0
    %4233 = vmatpush1.bf16.msra.mxu0 0
    %4234 = vmatprep.subr.bf16.mxu0 0
    %4235 = vmatpush1.bf16.msra.mxu0 0
    %4236 = vmatprep.subr.bf16.mxu0 0
    %4237 = vmatpush1.bf16.msra.mxu0 0
    %4238 = vmatprep.subr.bf16.mxu0 0
    %4239 = vmatpush1.bf16.msra.mxu0 0
    %4240 = vmatprep.subr.bf16.mxu0 0
    %4241 = vmatpush1.bf16.msra.mxu0 0
    %4242 = vmatprep.subr.bf16.mxu0 0
    %4243 = vmatpush1.bf16.msra.mxu0 0
    %4244 = vmatprep.subr.bf16.mxu0 0
    %4245 = vmatpush1.bf16.msra.mxu0 0
    %4246 = vmatprep.subr.bf16.mxu0 0
    %4247 = vmatpush1.bf16.msra.mxu0 0
    %4248 = vmatprep.subr.bf16.mxu0 0
    %4249 = vmatpush1.bf16.msra.mxu0 0
    %4250 = vmatprep.mubr.bf16.mxu0 0
    %4251 = vmatmul.mubr.bf16.gmra.mrb[0].mxu0 %v4216
    %v4252 = vpop.f32.mrb[0].mxu0
    %v4253 = vadd.f32 %v4201, %v4252
    %v4254 = vpop.f32.mrb[0].mxu0
    %v4255 = vpop.f32.mrb[0].mxu0
    %v4256 = vadd.f32 %v4201, %v4255
    %v4257 = vpop.f32.mrb[0].mxu0
    %4258 = vdwg.mxu0
    %v4259 = vmul.f32 %v4253, 0.5
    %v4260 = vmul.f32 %v4256, 0.5
    %v4261 = vmul.f32 %v4253, 0.044715
    %v4262 = vmul.f32 %v4256, 0.044715
    %v4263 = vmul.f32 %v4261, %v4253
    %v4264 = vmul.f32 %v4262, %v4256
    %v4265 = vmul.f32 %v4263, %v4253
    %v4266 = vmul.f32 %v4264, %v4256
    %v4267 = vadd.f32 %v4253, %v4265
    %v4268 = vadd.f32 %v4256, %v4266
    %v4269 = vmul.f32 %v4267, 0.7978846
    %v4270 = vmul.f32 %v4268, 0.7978846
    %v4271 = vtanh.pop %v4269
    %v4272 = vtanh.pop %v4270
    %v4273 = vadd.f32 %v4271, 1.0
    %v4274 = vadd.f32 %v4272, 1.0
    %v4275 = vmul.f32 %v4259, %v4273
    %v4276 = vmul.f32 %v4260, %v4274
    %v4277 = vpack.c.bf16 %v4276, %v4275
    %s4278 = scalar_lea.vmem %s16, 32
    %v4279 = vld [vmem:[%s4278] sm:$0xf]
    %v4280 = vld [vmem:[%s4278 + $0x4] sm:$0xf]
    %v4281 = vld [vmem:[%s4278 + $0x8] sm:$0xf]
    %v4282 = vld [vmem:[%s4278 + $0xc] sm:$0xf]
    %v4283 = vld [vmem:[%s4278 + $0x10] sm:$0xf]
    %v4284 = vld [vmem:[%s4278 + $0x14] sm:$0xf]
    %v4285 = vld [vmem:[%s4278 + $0x18] sm:$0xf]
    %v4286 = vld [vmem:[%s4278 + $0x1c] sm:$0xf]
    %s4287 = scalar_lea.vmem %s17, 1
    %v4288 = vld [vmem:[%s4287] sm:$0x1]
    %v4290 = vlaneseq
    %v4291 = vshrl.u32 %v4290, 7
    %v4292 = vsub.s32 0, %v4291
    %v4293 = vrot.slane %v4288, %v4292
    %v4303 = vunpack.c.l.b16 %v4279
    %v4304 = vunpack.c.l.b16 %v4280
    %v4305 = vunpack.c.l.b16 %v4281
    %v4306 = vunpack.c.l.b16 %v4282
    %v4307 = vunpack.c.l.b16 %v4283
    %v4308 = vunpack.c.l.b16 %v4284
    %v4309 = vunpack.c.l.b16 %v4285
    %v4310 = vunpack.c.l.b16 %v4286
    %v4311 = vpack.c.b16 %v4304, %v4303
    %v4312 = vpack.c.b16 %v4306, %v4305
    %v4313 = vpack.c.b16 %v4308, %v4307
    %v4314 = vpack.c.b16 %v4310, %v4309
    %v4320 = vsel %vm2176, %v4277, 0
    %4322 = vmatprep.subr.bf16.mxu0 0
    %4323 = vmatpush1.bf16.msra.mxu0 %v4311
    %4324 = vmatprep.subr.bf16.mxu0 0
    %4325 = vmatpush1.bf16.msra.mxu0 %v4312
    %4326 = vmatprep.subr.bf16.mxu0 0
    %4327 = vmatpush1.bf16.msra.mxu0 %v4313
    %4328 = vmatprep.subr.bf16.mxu0 0
    %4329 = vmatpush1.bf16.msra.mxu0 %v4314
    %4330 = vmatprep.subr.bf16.mxu0 0
    %4331 = vmatpush1.bf16.msra.mxu0 0
    %4332 = vmatprep.subr.bf16.mxu0 0
    %4333 = vmatpush1.bf16.msra.mxu0 0
    %4334 = vmatprep.subr.bf16.mxu0 0
    %4335 = vmatpush1.bf16.msra.mxu0 0
    %4336 = vmatprep.subr.bf16.mxu0 0
    %4337 = vmatpush1.bf16.msra.mxu0 0
    %4338 = vmatprep.subr.bf16.mxu0 0
    %4339 = vmatpush1.bf16.msra.mxu0 0
    %4340 = vmatprep.subr.bf16.mxu0 0
    %4341 = vmatpush1.bf16.msra.mxu0 0
    %4342 = vmatprep.subr.bf16.mxu0 0
    %4343 = vmatpush1.bf16.msra.mxu0 0
    %4344 = vmatprep.subr.bf16.mxu0 0
    %4345 = vmatpush1.bf16.msra.mxu0 0
    %4346 = vmatprep.subr.bf16.mxu0 0
    %4347 = vmatpush1.bf16.msra.mxu0 0
    %4348 = vmatprep.subr.bf16.mxu0 0
    %4349 = vmatpush1.bf16.msra.mxu0 0
    %4350 = vmatprep.subr.bf16.mxu0 0
    %4351 = vmatpush1.bf16.msra.mxu0 0
    %4352 = vmatprep.subr.bf16.mxu0 0
    %4353 = vmatpush1.bf16.msra.mxu0 0
    %4354 = vmatprep.mubr.bf16.mxu0 0
    %4355 = vmatmul.mubr.bf16.gmra.mrb[0].mxu0 %v4320
    %v4356 = vpop.f32.mrb[0].mxu0
    %v4357 = vadd.f32 %v4293, %v4356
    %v4358 = vpop.f32.mrb[0].mxu0
    %v4359 = vpop.f32.mrb[0].mxu0
    %v4360 = vadd.f32 %v4293, %v4359
    %v4361 = vpop.f32.mrb[0].mxu0
    %4362 = vdwg.mxu0
    %v4363 = vadd.f32 %v4357, %v4187
    %v4364 = vadd.f32 %v4360, %v4188
    %s4365 = scalar_lea.vmem %s18, 1
    %v4366 = vld [vmem:[%s4365] sm:$0x1]
    %s4367 = scalar_lea.vmem %s19, 1
    %v4368 = vld [vmem:[%s4367] sm:$0x1]
    %v4369 = vsel %vm92, %v4363, 0.0
    %4370 = vadd.xlane.f32.xlu0 %v4369
    %v4371 = vpop.xlane.xlu0 %4370
    %v4372 = vsel %vm92, %v4364, 0.0
    %4373 = vadd.xlane.f32.xlu0 %v4372
    %v4374 = vpop.xlane.xlu0 %4373
    %v4375 = vmul.f32 %v4371, %v99
    %v4376 = vmul.f32 %v4374, %v99
    %v4377 = vsub.f32 %v4363, %v4375
    %v4378 = vsub.f32 %v4364, %v4376
    %v4379 = vmul.f32 %v4377, %v4377
    %v4380 = vmul.f32 %v4378, %v4378
    %v4381 = vsel %vm92, %v4379, 0.0
    %4382 = vadd.xlane.f32.xlu0 %v4381
    %v4383 = vpop.xlane.xlu0 %4382
    %v4384 = vsel %vm92, %v4380, 0.0
    %4385 = vadd.xlane.f32.xlu0 %v4384
    %v4386 = vpop.xlane.xlu0 %4385
    %v4387 = vmul.f32 %v4383, %v99
    %v4388 = vmul.f32 %v4386, %v99
    %v4389 = vadd.f32 %v4387, 1e-12
    %v4390 = vadd.f32 %v4388, 1e-12
    %v4391 = vrsqrt.pop %v4389
    %v4392 = vrsqrt.pop %v4390
    %v4393 = vmul.f32 %v4377, %v4391
    %v4394 = vmul.f32 %v4378, %v4392
    %v4396 = vlaneseq
    %v4397 = vshrl.u32 %v4396, 7
    %v4398 = vsub.s32 0, %v4397
    %v4399 = vrot.slane %v4366, %v4398
    %v4401 = vmul.f32 %v4393, %v4399
    %v4402 = vmul.f32 %v4394, %v4399
    %v4404 = vlaneseq
    %v4405 = vshrl.u32 %v4404, 7
    %v4406 = vsub.s32 0, %v4405
    %v4407 = vrot.slane %v4368, %v4406
    %v4409 = vadd.f32 %v4401, %v4407
    %v4410 = vadd.f32 %v4402, %v4407
    %v4411 = vld [vmem:[%s20] sm:$0xff]
    %v4412 = vld [vmem:[%s20 + $0x8] sm:$0xff]
    %v4413 = vld [vmem:[%s20 + $0x10] sm:$0xff]
    %v4414 = vld [vmem:[%s20 + $0x18] sm:$0xff]
    %v4415 = vld [vmem:[%s21] sm:$0x1]
    %v4417 = vlaneseq
    %v4418 = vshrl.u32 %v4417, 7
    %v4419 = vsub.s32 0, %v4418
    %v4420 = vrot.slane %v4415, %v4419
    %v4424 = vrot.slane %v4410, 7
    %vm4425 = vcmask 1041409
    %v4426 = vsel %vm4425, %v4424, %v4409
    %v4427 = vsel %vm92, %v4426, 0
    %4429 = vmatprep.subr.mxu0 0.0
    %4430 = vmatpush1.msra.mxu0 %v4411
    %4431 = vmatprep.subr.mxu0 0.0
    %4432 = vmatpush1.msra.mxu0 %v4412
    %4433 = vmatprep.subr.mxu0 0.0
    %4434 = vmatpush1.msra.mxu0 %v4413
    %4435 = vmatprep.subr.mxu0 0.0
    %4436 = vmatpush1.msra.mxu0 %v4414
    %4437 = vmatprep.subr.mxu0 0.0
    %4438 = vmatpush1.msra.mxu0 0.0
    %4439 = vmatprep.subr.mxu0 0.0
    %4440 = vmatpush1.msra.mxu0 0.0
    %4441 = vmatprep.subr.mxu0 0.0
    %4442 = vmatpush1.msra.mxu0 0.0
    %4443 = vmatprep.subr.mxu0 0.0
    %4444 = vmatpush1.msra.mxu0 0.0
    %4445 = vmatprep.subr.mxu0 0.0
    %4446 = vmatpush1.msra.mxu0 0.0
    %4447 = vmatprep.subr.mxu0 0.0
    %4448 = vmatpush1.msra.mxu0 0.0
    %4449 = vmatprep.subr.mxu0 0.0
    %4450 = vmatpush1.msra.mxu0 0.0
    %4451 = vmatprep.subr.mxu0 0.0
    %4452 = vmatpush1.msra.mxu0 0.0
    %4453 = vmatprep.subr.mxu0 0.0
    %4454 = vmatpush1.msra.mxu0 0.0
    %4455 = vmatprep.subr.mxu0 0.0
    %4456 = vmatpush1.msra.mxu0 0.0
    %4457 = vmatprep.subr.mxu0 0.0
    %4458 = vmatpush1.msra.mxu0 0.0
    %4459 = vmatprep.subr.mxu0 0.0
    %4460 = vmatpush1.msra.mxu0 0.0
    %4461 = vmatprep.subr.mxu0 0.0
    %4462 = vmatpush1.msra.mxu0 0.0
    %4463 = vmatprep.subr.mxu0 0.0
    %4464 = vmatpush1.msra.mxu0 0.0
    %4465 = vmatprep.subr.mxu0 0.0
    %4466 = vmatpush1.msra.mxu0 0.0
    %4467 = vmatprep.subr.mxu0 0.0
    %4468 = vmatpush1.msra.mxu0 0.0
    %4469 = vmatprep.subr.mxu0 0.0
    %4470 = vmatpush1.msra.mxu0 0.0
    %4471 = vmatprep.subr.mxu0 0.0
    %4472 = vmatpush1.msra.mxu0 0.0
    %4473 = vmatprep.subr.mxu0 0.0
    %4474 = vmatpush1.msra.mxu0 0.0
    %4475 = vmatprep.subr.mxu0 0.0
    %4476 = vmatpush1.msra.mxu0 0.0
    %4477 = vmatprep.subr.mxu0 0.0
    %4478 = vmatpush1.msra.mxu0 0.0
    %4479 = vmatprep.subr.mxu0 0.0
    %4480 = vmatpush1.msra.mxu0 0.0
    %4481 = vmatprep.subr.mxu0 0.0
    %4482 = vmatpush1.msra.mxu0 0.0
    %4483 = vmatprep.subr.mxu0 0.0
    %4484 = vmatpush1.msra.mxu0 0.0
    %4485 = vmatprep.subr.mxu0 0.0
    %4486 = vmatpush1.msra.mxu0 0.0
    %4487 = vmatprep.subr.mxu0 0.0
    %4488 = vmatpush1.msra.mxu0 0.0
    %4489 = vmatprep.subr.mxu0 0.0
    %4490 = vmatpush1.msra.mxu0 0.0
    %4491 = vmatprep.subr.mxu0 0.0
    %4492 = vmatpush1.msra.mxu0 0.0
    %4493 = vmatprep.mubr.f32.mxu0 0.0
    %4494 = vmatmul.mubr.f32.gmra.mrb[0].mxu0 %v4427
    %v4495 = vpop.f32.mrb[0].mxu0
    %v4496 = vadd.f32 %v4420, %v4495
    %v4497 = vpop.f32.mrb[0].mxu0
    %4498 = vdwg.mxu0
    %v4499 = vtanh.pop %v4496
    %v4500 = vld [vmem:[%s22] sm:$0xff]
    %v4501 = vld [vmem:[%s22 + $0x8] sm:$0xff]
    %v4502 = vld [vmem:[%s22 + $0x10] sm:$0xff]
    %v4503 = vld [vmem:[%s22 + $0x18] sm:$0xff]
    %v4504 = vld [vmem:[%s23] sm:$0x1]
    %v4506 = vlaneseq
    %v4507 = vshrl.u32 %v4506, 7
    %v4508 = vsub.s32 0, %v4507
    %v4509 = vrot.slane %v4504, %v4508
    %v4512 = vsel %vm92, %v4499, 0
    %4514 = vmatprep.subr.mxu0 0.0
    %4515 = vmatpush1.msra.mxu0 %v4500
    %4516 = vmatprep.subr.mxu0 0.0
    %4517 = vmatpush1.msra.mxu0 %v4501
    %4518 = vmatprep.subr.mxu0 0.0
    %4519 = vmatpush1.msra.mxu0 %v4502
    %4520 = vmatprep.subr.mxu0 0.0
    %4521 = vmatpush1.msra.mxu0 %v4503
    %4522 = vmatprep.subr.mxu0 0.0
    %4523 = vmatpush1.msra.mxu0 0.0
    %4524 = vmatprep.subr.mxu0 0.0
    %4525 = vmatpush1.msra.mxu0 0.0
    %4526 = vmatprep.subr.mxu0 0.0
    %4527 = vmatpush1.msra.mxu0 0.0
    %4528 = vmatprep.subr.mxu0 0.0
    %4529 = vmatpush1.msra.mxu0 0.0
    %4530 = vmatprep.subr.mxu0 0.0
    %4531 = vmatpush1.msra.mxu0 0.0
    %4532 = vmatprep.subr.mxu0 0.0
    %4533 = vmatpush1.msra.mxu0 0.0
    %4534 = vmatprep.subr.mxu0 0.0
    %4535 = vmatpush1.msra.mxu0 0.0
    %4536 = vmatprep.subr.mxu0 0.0
    %4537 = vmatpush1.msra.mxu0 0.0
    %4538 = vmatprep.subr.mxu0 0.0
    %4539 = vmatpush1.msra.mxu0 0.0
    %4540 = vmatprep.subr.mxu0 0.0
    %4541 = vmatpush1.msra.mxu0 0.0
    %4542 = vmatprep.subr.mxu0 0.0
    %4543 = vmatpush1.msra.mxu0 0.0
    %4544 = vmatprep.subr.mxu0 0.0
    %4545 = vmatpush1.msra.mxu0 0.0
    %4546 = vmatprep.subr.mxu0 0.0
    %4547 = vmatpush1.msra.mxu0 0.0
    %4548 = vmatprep.subr.mxu0 0.0
    %4549 = vmatpush1.msra.mxu0 0.0
    %4550 = vmatprep.subr.mxu0 0.0
    %4551 = vmatpush1.msra.mxu0 0.0
    %4552 = vmatprep.subr.mxu0 0.0
    %4553 = vmatpush1.msra.mxu0 0.0
    %4554 = vmatprep.subr.mxu0 0.0
    %4555 = vmatpush1.msra.mxu0 0.0
    %4556 = vmatprep.subr.mxu0 0.0
    %4557 = vmatpush1.msra.mxu0 0.0
    %4558 = vmatprep.subr.mxu0 0.0
    %4559 = vmatpush1.msra.mxu0 0.0
    %4560 = vmatprep.subr.mxu0 0.0
    %4561 = vmatpush1.msra.mxu0 0.0
    %4562 = vmatprep.subr.mxu0 0.0
    %4563 = vmatpush1.msra.mxu0 0.0
    %4564 = vmatprep.subr.mxu0 0.0
    %4565 = vmatpush1.msra.mxu0 0.0
    %4566 = vmatprep.subr.mxu0 0.0
    %4567 = vmatpush1.msra.mxu0 0.0
    %4568 = vmatprep.subr.mxu0 0.0
    %4569 = vmatpush1.msra.mxu0 0.0
    %4570 = vmatprep.subr.mxu0 0.0
    %4571 = vmatpush1.msra.mxu0 0.0
    %4572 = vmatprep.subr.mxu0 0.0
    %4573 = vmatpush1.msra.mxu0 0.0
    %4574 = vmatprep.subr.mxu0 0.0
    %4575 = vmatpush1.msra.mxu0 0.0
    %4576 = vmatprep.subr.mxu0 0.0
    %4577 = vmatpush1.msra.mxu0 0.0
    %4578 = vmatprep.mubr.f32.mxu0 0.0
    %4579 = vmatmul.mubr.f32.gmra.mrb[0].mxu0 %v4512
    %v4580 = vpop.f32.mrb[0].mxu0
    %v4581 = vadd.f32 %v4509, %v4580
    %v4582 = vpop.f32.mrb[0].mxu0
    %4583 = vdwg.mxu0
    %vm4584 = vcmask 9216
    %4585 = vst.msk [vmem:[#allocation4] sm:$0x3] %vm4584, %v4581
    %v4586 = vsel %vm4584, %v4581, -inf
    %4587 = vmax.xlane.f32.xlu0 %v4586
    %v4588 = vpop.xlane.xlu0 %4587
    %v4589 = vsub.f32 %v4581, %v4588
    %v4590 = vmul.f32 %v4589, 1.442695
    %v4591 = vpow.pop %v4590
    %v4592 = vsel %vm4584, %v4591, 0.0
    %4593 = vadd.xlane.f32.xlu0 %v4592
    %v4594 = vpop.xlane.xlu0 %4593
    %v4595 = vlog2.pop %v4594
    %v4596 = vmul.f32 %v4595, 0.6931472
    %v4597 = vadd.f32 %v4588, %v4596
    %v4598 = vld [vmem:[%s24] sm:$0x3]
    %v4599 = vmul.f32 %v4581, %v4598
    %v4600 = vsel %vm4584, %v4599, 0.0
    %4601 = vadd.xlane.f32.xlu0 %v4600
    %v4602 = vpop.xlane.xlu0 %4601
    %v4603 = vsub.f32 %v4597, %v4602
    %vm4604 = vcmask 1024
    %v4605 = vsel %vm4604, %v4603, 0.0
    %4606 = vadd.xlane.f32.xlu0 %v4605
    %v4607 = vpop.xlane.xlu0 %4606
    %v4608 = vrot.slane %v4607, 4
    %v4609 = vadd.f32 %v4607, %v4608
    %v4610 = vrot.slane %v4609, 2
    %v4611 = vadd.f32 %v4609, %v4610
    %v4612 = vrot.slane %v4611, 1
    %v4613 = vadd.f32 %v4611, %v4612
    %s4614 = vtos %v4613
    %v4615 = vrcp.pop 2.0
    %s4616 = vtos %v4615
    %s4617 = smul.f32 %s4614, %s4616
    %v4618 = vstv %s4617
    %vm4619 = vcmask 0
    %4620 = vst.msk [vmem:[#allocation2] sm:$0x1] %vm4619, %v4618
    // Predicated region
    $region102: #{bert_forward.1} parent=1 // pred_check
      _
    $region103: #{bert_forward.1} parent=1 // pred_check_branch
      %4622 = sbr.rel (0) target = $region105
    $region104: #{bert_forward.1} parent=1 // pred_region
      %s4624 = ssub.s32 16, 16
      %4625 = vsyncadd [#allocation3], %s4624
      %s4627 = sshll.u32 [#allocation2], 4
      %s4628 = int_to_ptr.vmem [resolvable:$true] %s4627
      %4630 = dma.vmem_to_hbm [thread:$0]  %s4628, 16, %s25, [#allocation3]
    $region105: #{bert_forward.1} parent=1 // pred_fallthru
      _
    // Predicated region
    $region106: #{bert_forward.1} parent=1 // pred_check
      _
    $region107: #{bert_forward.1} parent=1 // pred_check_branch
      %4632 = sbr.rel (0) target = $region109
    $region108: #{bert_forward.1} parent=1 // pred_region
      %s4634 = ssub.s32 32, 32
      %4635 = vsyncadd [#allocation5], %s4634
      %s4637 = sshll.u32 [#allocation4], 4
      %s4638 = int_to_ptr.vmem [resolvable:$true] %s4637
      %4640 = dma.vmem_to_hbm [thread:$0]  %s4638, 32, %s26, [#allocation5]
    $region109: #{bert_forward.1} parent=1 // pred_fallthru
      _
    // Predicated region
    $region110: #{bert_forward.1} parent=1 // pred_check
      _
    $region111: #{bert_forward.1} parent=1 // pred_check_branch
      %4642 = sbr.rel (0) target = $region113
    $region112: #{bert_forward.1} parent=1 // pred_region
      %4643 = dma.done [#allocation3], 16
    $region113: #{bert_forward.1} parent=1 // pred_fallthru
      _
    // Predicated region
    $region114: #{bert_forward.1} parent=1 // pred_check
      _
    $region115: #{bert_forward.1} parent=1 // pred_check_branch
      %4645 = sbr.rel (0) target = $region117
    $region116: #{bert_forward.1} parent=1 // pred_region
      %4646 = dma.done [#allocation5], 32
    $region117: #{bert_forward.1} parent=1 // pred_fallthru
      _
    %4647 = vsyncpa [#allocation3], 1
    %4648 = vsyncpa [#allocation5], 1

</llo_original>
